<compile_context>
chip_gen: v6e
topology: v6e:2x2x1
jax: 0.10.0
libtpu: 0.0.40
codegen_flags: <defaults>
</compile_context>

<pallas_src>
import math

import numpy as np

import jax
import jax.numpy as jnp
from jax.experimental import pallas as pl
from jax.experimental.pallas import tpu as pltpu  # noqa: F401  (TPU backend assumed)

# ---------------- configuration (small synthetic sizes) ----------------
FEAT_DIM = 32          # args.feat_dim
BERT_DIM = 32          # args.bert_dim
NUM_HEADS = 4
HEAD_DIM = BERT_DIM // NUM_HEADS
NUM_LAYERS = 2
INTER_DIM = 64
OUTPUT_DIM = 16        # args.output_dim
MAX_FRAMES = 8         # args.max_frames
SEQ_LEN = MAX_FRAMES + 2          # [CLS] + frames + [SEP]
VOCAB = 128
BATCH = 2

BS = BATCH * SEQ_LEN              # fused sequence rows (20)
BF = BATCH * MAX_FRAMES           # fused frame rows (16)

LN_EPS_BERT = 1e-12    # HF BERT LayerNorm eps
LN_EPS_PROJ = 1e-5     # nn.LayerNorm default eps (frame_proj)
NEG_BIAS = -10000.0    # HF additive attention-mask bias


# ---------------- packed-slab layouts (static, 8-row-aligned offsets) ----------------
def _r8(n):
    return ((n + 7) // 8) * 8


def _build_offsets(items):
    off, cur = {}, 0
    for name, rows in items:
        off[name] = cur
        cur += _r8(rows)
    return off, cur


_W32_ITEMS = (
    [("fp_w", FEAT_DIM), ("fp_b", 1), ("fp_ln_g", 1), ("fp_ln_b", 1),
     ("emb_ln_g", 1), ("emb_ln_b", 1)]
    + [it for l in range(NUM_LAYERS) for it in
       [(f"wo_{l}", BERT_DIM), (f"bo_{l}", 1), (f"ln1_g_{l}", 1), (f"ln1_b_{l}", 1),
        (f"wf_{l}", INTER_DIM), (f"bf_{l}", 1), (f"ln2_g_{l}", 1), (f"ln2_b_{l}", 1)]]
    + [("ow_cls", BERT_DIM), ("ow_avg", BERT_DIM), ("ob", 1)]
)
W32_OFF, W32_ROWS = _build_offsets(_W32_ITEMS)

_W96_ITEMS = [it for l in range(NUM_LAYERS) for it in
              [(f"wqkv_{l}", BERT_DIM), (f"bqkv_{l}", 1)]]
W96_OFF, W96_ROWS = _build_offsets(_W96_ITEMS)

_W64_ITEMS = [it for l in range(NUM_LAYERS) for it in
              [(f"wi_{l}", BERT_DIM), (f"bi_{l}", 1)]]
W64_OFF, W64_ROWS = _build_offsets(_W64_ITEMS)

_CONST_ITEMS = [("static_emb", BS), ("sel_frames", BS), ("mask_place", BF),
                ("mask_base", 1), ("block_bias", BS), ("sel_cls", BATCH),
                ("batch_sel", BATCH)]
CONST_OFF, CONST_ROWS = _build_offsets(_CONST_ITEMS)


# ---------------------------- fused kernel ----------------------------
def _layer_norm(x, g, b, eps):
    mu = jnp.mean(x, axis=-1, keepdims=True)
    xc = x - mu
    var = jnp.mean(xc * xc, axis=-1, keepdims=True)
    return xc * jax.lax.rsqrt(var + eps) * g + b


def _md_fused_kernel(feats_ref, const_ref, w32_ref, w96_ref, w64_ref, out_ref):
    f32 = jnp.float32
    D, Dh, H = BERT_DIM, HEAD_DIM, NUM_HEADS

    def c_(name, rows, cols):
        o = CONST_OFF[name]
        return const_ref[o:o + rows, :cols]

    def w32_(name, rows, cols=BERT_DIM):
        o = W32_OFF[name]
        return w32_ref[o:o + rows, :cols]

    feats = feats_ref[...].astype(f32)                                   # (BF, FD)

    # ---- pre-baked constants (one DMA) ----
    static_emb = c_("static_emb", BS, D)                                 # (BS, D)
    sel_frames = c_("sel_frames", BS, BF)                                # (BS, BF)
    mask_place = c_("mask_place", BF, BS)                                # (BF, BS)
    mask_base = c_("mask_base", 1, BS)                                   # (1, BS)
    block_bias = c_("block_bias", BS, BS)                                # (BS, BS)
    sel_cls = c_("sel_cls", BATCH, BS)                                   # (B, BS)
    batch_sel = c_("batch_sel", BATCH, BS)                               # (B, BS)

    # ---- frame validity mask: matches torch.cat([ones(2), |feats|.sum(-1)>0]) ----
    ones_fd = jnp.ones((1, FEAT_DIM), f32)
    row_sums = jax.lax.dot_general(ones_fd, jnp.abs(feats),              # (1, BF)
                                   (((1,), (1,)), ((), ())),
                                   preferred_element_type=f32)
    frame_valid = (row_sums > 0.0).astype(f32)
    mask_row = jnp.dot(frame_valid, mask_place,
                       preferred_element_type=f32) + mask_base           # (1, BS)
    # block-diag (-1e4 off-diagonal) + per-key validity bias, broadcast over rows
    attn_bias = block_bias + (1.0 - mask_row) * NEG_BIAS                 # (BS, BS)

    # ---- frame_proj: Linear + LayerNorm(eps=1e-5) ----
    v = jnp.dot(feats, w32_("fp_w", FEAT_DIM),
                preferred_element_type=f32) + w32_("fp_b", 1)
    v = _layer_norm(v, w32_("fp_ln_g", 1), w32_("fp_ln_b", 1), LN_EPS_PROJ)   # (BF, D)

    # ---- BERT embeddings: place frames into rows, add static CLS/SEP/pos/tt, LN ----
    x = jnp.dot(sel_frames, v, preferred_element_type=f32) + static_emb       # (BS, D)
    x = _layer_norm(x, w32_("emb_ln_g", 1), w32_("emb_ln_b", 1), LN_EPS_BERT)

    # ---- transformer encoder layers (static unroll) ----
    for l in range(NUM_LAYERS):
        qo = W96_OFF[f"wqkv_{l}"]
        qb = W96_OFF[f"bqkv_{l}"]
        qkv = (jnp.dot(x, w96_ref[qo:qo + D, :], preferred_element_type=f32)
               + w96_ref[qb:qb + 1, :])                                  # (BS, 3D)

        ctx_heads = []
        for h in range(H):                                               # static Dh lane slices
            q = qkv[:, h * Dh:(h + 1) * Dh]
            k = qkv[:, D + h * Dh:D + (h + 1) * Dh]
            vv = qkv[:, 2 * D + h * Dh:2 * D + (h + 1) * Dh]
            # 1/sqrt(Dh) already folded into the Q weights/bias in the wrapper
            s = jax.lax.dot_general(q, k, (((1,), (1,)), ((), ())),
                                    preferred_element_type=f32)          # (BS, BS)
            s = s + attn_bias
            s = s - jnp.max(s, axis=-1, keepdims=True)
            p = jnp.exp(s)
            p = p / jnp.sum(p, axis=-1, keepdims=True)
            ctx_heads.append(jnp.dot(p, vv, preferred_element_type=f32))  # (BS, Dh)
        ctx = jnp.concatenate(ctx_heads, axis=-1)                         # (BS, D)

        attn = (jnp.dot(ctx, w32_(f"wo_{l}", D), preferred_element_type=f32)
                + w32_(f"bo_{l}", 1))
        h1 = _layer_norm(attn + x, w32_(f"ln1_g_{l}", 1), w32_(f"ln1_b_{l}", 1),
                         LN_EPS_BERT)

        io = W64_OFF[f"wi_{l}"]
        ib = W64_OFF[f"bi_{l}"]
        inter = (jnp.dot(h1, w64_ref[io:io + D, :], preferred_element_type=f32)
                 + w64_ref[ib:ib + 1, :])                                # (BS, INTER)
        # TODO(synk): HF BERT uses exact erf-GELU; tanh-approx GELU used here.
        inter = jax.nn.gelu(inter, approximate=True)
        ffn = (jnp.dot(inter, w32_(f"wf_{l}", INTER_DIM), preferred_element_type=f32)
               + w32_(f"bf_{l}", 1))
        x = _layer_norm(ffn + h1, w32_(f"ln2_g_{l}", 1), w32_(f"ln2_b_{l}", 1),
                        LN_EPS_BERT)

    # ---- pooling + output projection (single (B, OUTPUT_DIM) store) ----
    cls_pool = jnp.dot(sel_cls, x, preferred_element_type=f32)           # (B, D)
    masked_sel = batch_sel * mask_row                                    # (B, BS)
    length = jnp.sum(masked_sel, axis=-1, keepdims=True)                 # (B, 1)
    avg_pool = jnp.dot(masked_sel, x, preferred_element_type=f32) / (length + 1e-5)
    out = (jnp.dot(cls_pool, w32_("ow_cls", D, OUTPUT_DIM), preferred_element_type=f32)
           + jnp.dot(avg_pool, w32_("ow_avg", D, OUTPUT_DIM), preferred_element_type=f32)
           + w32_("ob", 1, OUTPUT_DIM))                                  # (B, OUT)
    out_ref[...] = out.astype(out_ref.dtype)


# ---------------------------- wrapper ----------------------------
def md_forward(operands, feats):
    B, F, FD = feats.shape
    feats2d = feats.reshape(B * F, FD)
    const_slab, w32_slab, w96_slab, w64_slab = operands
    return pl.pallas_call(
        _md_fused_kernel,
        out_shape=jax.ShapeDtypeStruct((B, OUTPUT_DIM), jnp.float32),
    )(feats2d, const_slab, w32_slab, w96_slab, w64_slab)


# ---------------------------- parameters ----------------------------
def init_params(key):
    keys = iter(jax.random.split(key, 64))

    def dense(k, fan_in, fan_out):
        return jax.random.normal(k, (fan_in, fan_out), jnp.float32) * 0.02

    p = {
        "fp_w": dense(next(keys), FEAT_DIM, BERT_DIM),
        "fp_b": jnp.zeros((BERT_DIM,), jnp.float32),
        "fp_ln_g": jnp.ones((BERT_DIM,), jnp.float32),
        "fp_ln_b": jnp.zeros((BERT_DIM,), jnp.float32),
        "word_emb": jax.random.normal(next(keys), (VOCAB, BERT_DIM), jnp.float32) * 0.02,
        "pos_emb": jax.random.normal(next(keys), (SEQ_LEN, BERT_DIM), jnp.float32) * 0.02,
        "tok_type_emb": jax.random.normal(next(keys), (2, BERT_DIM), jnp.float32) * 0.02,
        "emb_ln_g": jnp.ones((BERT_DIM,), jnp.float32),
        "emb_ln_b": jnp.zeros((BERT_DIM,), jnp.float32),
        "out_w": dense(next(keys), 2 * BERT_DIM, OUTPUT_DIM),
        "out_b": jnp.zeros((OUTPUT_DIM,), jnp.float32),
    }
    layers = []
    for _ in range(NUM_LAYERS):
        layers.append({
            "wq": dense(next(keys), BERT_DIM, BERT_DIM), "bq": jnp.zeros((BERT_DIM,), jnp.float32),
            "wk": dense(next(keys), BERT_DIM, BERT_DIM), "bk": jnp.zeros((BERT_DIM,), jnp.float32),
            "wv": dense(next(keys), BERT_DIM, BERT_DIM), "bv": jnp.zeros((BERT_DIM,), jnp.float32),
            "wo": dense(next(keys), BERT_DIM, BERT_DIM), "bo": jnp.zeros((BERT_DIM,), jnp.float32),
            "ln1_g": jnp.ones((BERT_DIM,), jnp.float32), "ln1_b": jnp.zeros((BERT_DIM,), jnp.float32),
            "wi": dense(next(keys), BERT_DIM, INTER_DIM), "bi": jnp.zeros((INTER_DIM,), jnp.float32),
            "wf": dense(next(keys), INTER_DIM, BERT_DIM), "bf": jnp.zeros((BERT_DIM,), jnp.float32),
            "ln2_g": jnp.ones((BERT_DIM,), jnp.float32), "ln2_b": jnp.zeros((BERT_DIM,), jnp.float32),
        })
    p["layers"] = layers
    return p


def prepare_kernel_operands(p):
    """One-time weight preprocessing: pack every weight, bias, LN vector and every
    constant placement/bias matrix into 4 contiguous VMEM slabs with static,
    8-row-aligned offsets. Also folds 1/sqrt(head_dim) into Q, fuses QKV, and
    pre-bakes the static embedding slab. Forward semantics are unchanged."""
    D, Dh, F, S, B = BERT_DIM, HEAD_DIM, MAX_FRAMES, SEQ_LEN, BATCH
    scale = 1.0 / math.sqrt(Dh)

    # ---- constant slab pieces ----
    block = p["pos_emb"] + p["tok_type_emb"][0:1]            # position + token-type-0
    block = block.at[0].add(p["word_emb"][101])               # [CLS]
    block = block.at[F + 1].add(p["word_emb"][102])           # [SEP]
    static_emb = jnp.tile(block, (B, 1))                      # (BS, D)

    sel_frames = np.zeros((BS, BF), np.float32)
    mask_place = np.zeros((BF, BS), np.float32)
    mask_base = np.zeros((1, BS), np.float32)
    block_bias = np.full((BS, BS), NEG_BIAS, np.float32)
    sel_cls = np.zeros((B, BS), np.float32)
    batch_sel = np.zeros((B, BS), np.float32)
    for b in range(B):
        for j in range(F):
            sel_frames[b * S + 1 + j, b * F + j] = 1.0   # frame j -> sequence row j+1
            mask_place[b * F + j, b * S + 2 + j] = 1.0   # frame j validity -> mask pos j+2
        mask_base[0, b * S + 0] = 1.0                    # CLS / first two mask positions
        mask_base[0, b * S + 1] = 1.0
        block_bias[b * S:(b + 1) * S, b * S:(b + 1) * S] = 0.0
        sel_cls[b, b * S] = 1.0
        batch_sel[b, b * S:(b + 1) * S] = 1.0

    const_pieces = {
        "static_emb": static_emb,
        "sel_frames": jnp.asarray(sel_frames),
        "mask_place": jnp.asarray(mask_place),
        "mask_base": jnp.asarray(mask_base),
        "block_bias": jnp.asarray(block_bias),
        "sel_cls": jnp.asarray(sel_cls),
        "batch_sel": jnp.asarray(batch_sel),
    }

    # ---- weight slab pieces ----
    w32_pieces = {
        "fp_w": p["fp_w"], "fp_b": p["fp_b"][None],
        "fp_ln_g": p["fp_ln_g"][None], "fp_ln_b": p["fp_ln_b"][None],
        "emb_ln_g": p["emb_ln_g"][None], "emb_ln_b": p["emb_ln_b"][None],
        "ow_cls": p["out_w"][:D], "ow_avg": p["out_w"][D:], "ob": p["out_b"][None],
    }
    w96_pieces, w64_pieces = {}, {}
    for l, lp in enumerate(p["layers"]):
        w32_pieces[f"wo_{l}"] = lp["wo"]
        w32_pieces[f"bo_{l}"] = lp["bo"][None]
        w32_pieces[f"ln1_g_{l}"] = lp["ln1_g"][None]
        w32_pieces[f"ln1_b_{l}"] = lp["ln1_b"][None]
        w32_pieces[f"wf_{l}"] = lp["wf"]
        w32_pieces[f"bf_{l}"] = lp["bf"][None]
        w32_pieces[f"ln2_g_{l}"] = lp["ln2_g"][None]
        w32_pieces[f"ln2_b_{l}"] = lp["ln2_b"][None]
        # fused QKV, attention scale folded into the Q columns
        w96_pieces[f"wqkv_{l}"] = jnp.concatenate(
            [lp["wq"] * scale, lp["wk"], lp["wv"]], axis=1)
        w96_pieces[f"bqkv_{l}"] = jnp.concatenate(
            [lp["bq"] * scale, lp["bk"], lp["bv"]])[None]
        w64_pieces[f"wi_{l}"] = lp["wi"]
        w64_pieces[f"bi_{l}"] = lp["bi"][None]

    def pack(items, pieces, lane_width, offsets, total_rows):
        slab = jnp.zeros((total_rows, lane_width), jnp.float32)
        for name, _ in items:
            a = jnp.asarray(pieces[name], jnp.float32)
            r, c = a.shape
            slab = slab.at[offsets[name]:offsets[name] + r, :c].set(a)
        return slab

    const_slab = pack(_CONST_ITEMS, const_pieces, BERT_DIM, CONST_OFF, CONST_ROWS)
    w32_slab = pack(_W32_ITEMS, w32_pieces, BERT_DIM, W32_OFF, W32_ROWS)
    w96_slab = pack(_W96_ITEMS, w96_pieces, 3 * BERT_DIM, W96_OFF, W96_ROWS)
    w64_slab = pack(_W64_ITEMS, w64_pieces, INTER_DIM, W64_OFF, W64_ROWS)
    return const_slab, w32_slab, w96_slab, w64_slab


if __name__ == "__main__":
    key = jax.random.PRNGKey(0)
    kx, kp = jax.random.split(key)
    feats = jax.random.normal(kx, (BATCH, MAX_FRAMES, FEAT_DIM), jnp.float32)
    # zero out some frames of batch 1 so the nonzero-mask path is exercised
    feats = feats.at[1, 5:].set(0.0)

    params = init_params(kp)
    operands = prepare_kernel_operands(params)

    fwd = jax.jit(md_forward)
    out = fwd(operands, feats)
    out = jax.block_until_ready(out)

    assert out.shape == (BATCH, OUTPUT_DIM)
    assert bool(jnp.all(jnp.isfinite(out)))
    print("KERNEL_OK")
</pallas_src>

<mosaic_0001>
module attributes {stable_mosaic.version = 11 : i64} {
  func.func @_md_fused_kernel(%arg0: memref<16x32xf32, #tpu.memory_space<vmem>>, %arg1: memref<112x32xf32, #tpu.memory_space<vmem>>, %arg2: memref<432x32xf32, #tpu.memory_space<vmem>>, %arg3: memref<80x96xf32, #tpu.memory_space<vmem>>, %arg4: memref<80x64xf32, #tpu.memory_space<vmem>>, %arg5: memref<2x16xf32, #tpu.memory_space<vmem>>) attributes {dimension_semantics = [], scalar_prefetch = 0 : i64, scratch_operands = 0 : i64, tpu.core_type = #tpu.core_type<tc>} {
    %c0 = arith.constant 0 : index
    %c0_0 = arith.constant 0 : index
    %0 = vector.load %arg0[%c0, %c0_0] : memref<16x32xf32, #tpu.memory_space<vmem>>, vector<16x32xf32>
    %c0_1 = arith.constant 0 : index
    %c0_2 = arith.constant 0 : index
    %1 = vector.load %arg1[%c0_1, %c0_2] : memref<112x32xf32, #tpu.memory_space<vmem>>, vector<20x32xf32>
    %c24 = arith.constant 24 : index
    %c0_3 = arith.constant 0 : index
    %2 = vector.load %arg1[%c24, %c0_3] : memref<112x32xf32, #tpu.memory_space<vmem>>, vector<20x16xf32>
    %c48 = arith.constant 48 : index
    %c0_4 = arith.constant 0 : index
    %3 = vector.load %arg1[%c48, %c0_4] : memref<112x32xf32, #tpu.memory_space<vmem>>, vector<16x20xf32>
    %c64 = arith.constant 64 : index
    %c0_5 = arith.constant 0 : index
    %4 = vector.load %arg1[%c64, %c0_5] : memref<112x32xf32, #tpu.memory_space<vmem>>, vector<1x20xf32>
    %c72 = arith.constant 72 : index
    %c0_6 = arith.constant 0 : index
    %5 = vector.load %arg1[%c72, %c0_6] : memref<112x32xf32, #tpu.memory_space<vmem>>, vector<20x20xf32>
    %c96 = arith.constant 96 : index
    %c0_7 = arith.constant 0 : index
    %6 = vector.load %arg1[%c96, %c0_7] : memref<112x32xf32, #tpu.memory_space<vmem>>, vector<2x20xf32>
    %c104 = arith.constant 104 : index
    %c0_8 = arith.constant 0 : index
    %7 = vector.load %arg1[%c104, %c0_8] : memref<112x32xf32, #tpu.memory_space<vmem>>, vector<2x20xf32>
    %cst = arith.constant 1.000000e+00 : f32
    %8 = vector.broadcast %cst : f32 to vector<1x32xf32>
    %9 = math.absf %0 : vector<16x32xf32>
    %cst_9 = arith.constant dense<0.000000e+00> : vector<1x16xf32>
    %10 = tpu.matmul %8, %9, %cst_9 {dimension_numbers = #tpu.dot_dimension_numbers<[1], [1], [0], [0], [0, 0, 1, 0], [], []>} : vector<1x32xf32>, vector<16x32xf32>, vector<1x16xf32> -> vector<1x16xf32>
    %cst_10 = arith.constant 0.000000e+00 : f32
    %11 = vector.broadcast %cst_10 : f32 to vector<1x16xf32>
    %12 = arith.cmpf ogt, %10, %11 : vector<1x16xf32>
    %13 = arith.extui %12 : vector<1x16xi1> to vector<1x16xi32>
    %14 = arith.sitofp %13 : vector<1x16xi32> to vector<1x16xf32>
    %cst_11 = arith.constant dense<0.000000e+00> : vector<1x20xf32>
    %15 = tpu.matmul %14, %3, %cst_11 {dimension_numbers = #tpu.dot_dimension_numbers<[1], [0], [0], [1], [0, 0, 1, 1], [], []>} : vector<1x16xf32>, vector<16x20xf32>, vector<1x20xf32> -> vector<1x20xf32>
    %16 = arith.addf %15, %4 : vector<1x20xf32>
    %cst_12 = arith.constant 1.000000e+00 : f32
    %17 = vector.broadcast %cst_12 : f32 to vector<1x20xf32>
    %18 = arith.subf %17, %16 : vector<1x20xf32>
    %cst_13 = arith.constant -1.000000e+04 : f32
    %19 = vector.broadcast %cst_13 : f32 to vector<1x20xf32>
    %20 = arith.mulf %18, %19 : vector<1x20xf32>
    %21 = vector.broadcast %20 : vector<1x20xf32> to vector<20x20xf32>
    %22 = arith.addf %5, %21 : vector<20x20xf32>
    %c0_14 = arith.constant 0 : index
    %c0_15 = arith.constant 0 : index
    %23 = vector.load %arg2[%c0_14, %c0_15] : memref<432x32xf32, #tpu.memory_space<vmem>>, vector<32x32xf32>
    %cst_16 = arith.constant dense<0.000000e+00> : vector<16x32xf32>
    %24 = tpu.matmul %0, %23, %cst_16 {dimension_numbers = #tpu.dot_dimension_numbers<[1], [0], [0], [1], [0, 0, 1, 1], [], []>} : vector<16x32xf32>, vector<32x32xf32>, vector<16x32xf32> -> vector<16x32xf32>
    %c32 = arith.constant 32 : index
    %c0_17 = arith.constant 0 : index
    %25 = vector.load %arg2[%c32, %c0_17] : memref<432x32xf32, #tpu.memory_space<vmem>>, vector<1x32xf32>
    %26 = vector.broadcast %25 : vector<1x32xf32> to vector<16x32xf32>
    %27 = arith.addf %24, %26 : vector<16x32xf32>
    %c40 = arith.constant 40 : index
    %c0_18 = arith.constant 0 : index
    %28 = vector.load %arg2[%c40, %c0_18] : memref<432x32xf32, #tpu.memory_space<vmem>>, vector<1x32xf32>
    %c48_19 = arith.constant 48 : index
    %c0_20 = arith.constant 0 : index
    %29 = vector.load %arg2[%c48_19, %c0_20] : memref<432x32xf32, #tpu.memory_space<vmem>>, vector<1x32xf32>
    %cst_21 = arith.constant dense<0.000000e+00> : vector<16xf32>
    %30 = vector.multi_reduction <add>, %27, %cst_21 [1] : vector<16x32xf32> to vector<16xf32>
    %31 = vector.shape_cast %30 : vector<16xf32> to vector<16x1xf32>
    %cst_22 = arith.constant 3.200000e+01 : f32
    %32 = vector.broadcast %cst_22 : f32 to vector<16x1xf32>
    %33 = arith.divf %31, %32 : vector<16x1xf32>
    %34 = vector.broadcast %33 : vector<16x1xf32> to vector<16x32xf32>
    %35 = arith.subf %27, %34 : vector<16x32xf32>
    %36 = arith.mulf %35, %35 : vector<16x32xf32>
    %cst_23 = arith.constant dense<0.000000e+00> : vector<16xf32>
    %37 = vector.multi_reduction <add>, %36, %cst_23 [1] : vector<16x32xf32> to vector<16xf32>
    %38 = vector.shape_cast %37 : vector<16xf32> to vector<16x1xf32>
    %cst_24 = arith.constant 3.200000e+01 : f32
    %39 = vector.broadcast %cst_24 : f32 to vector<16x1xf32>
    %40 = arith.divf %38, %39 : vector<16x1xf32>
    %cst_25 = arith.constant 9.99999974E-6 : f32
    %41 = vector.broadcast %cst_25 : f32 to vector<16x1xf32>
    %42 = arith.addf %40, %41 : vector<16x1xf32>
    %43 = math.rsqrt %42 : vector<16x1xf32>
    %44 = vector.broadcast %43 : vector<16x1xf32> to vector<16x32xf32>
    %45 = arith.mulf %35, %44 : vector<16x32xf32>
    %46 = vector.broadcast %28 : vector<1x32xf32> to vector<16x32xf32>
    %47 = arith.mulf %45, %46 : vector<16x32xf32>
    %48 = vector.broadcast %29 : vector<1x32xf32> to vector<16x32xf32>
    %49 = arith.addf %47, %48 : vector<16x32xf32>
    %cst_26 = arith.constant dense<0.000000e+00> : vector<20x32xf32>
    %50 = tpu.matmul %2, %49, %cst_26 {dimension_numbers = #tpu.dot_dimension_numbers<[1], [0], [0], [1], [0, 0, 1, 1], [], []>} : vector<20x16xf32>, vector<16x32xf32>, vector<20x32xf32> -> vector<20x32xf32>
    %51 = arith.addf %50, %1 : vector<20x32xf32>
    %c56 = arith.constant 56 : index
    %c0_27 = arith.constant 0 : index
    %52 = vector.load %arg2[%c56, %c0_27] : memref<432x32xf32, #tpu.memory_space<vmem>>, vector<1x32xf32>
    %c64_28 = arith.constant 64 : index
    %c0_29 = arith.constant 0 : index
    %53 = vector.load %arg2[%c64_28, %c0_29] : memref<432x32xf32, #tpu.memory_space<vmem>>, vector<1x32xf32>
    %cst_30 = arith.constant dense<0.000000e+00> : vector<20xf32>
    %54 = vector.multi_reduction <add>, %51, %cst_30 [1] : vector<20x32xf32> to vector<20xf32>
    %55 = vector.shape_cast %54 : vector<20xf32> to vector<20x1xf32>
    %cst_31 = arith.constant 3.200000e+01 : f32
    %56 = vector.broadcast %cst_31 : f32 to vector<20x1xf32>
    %57 = arith.divf %55, %56 : vector<20x1xf32>
    %58 = vector.broadcast %57 : vector<20x1xf32> to vector<20x32xf32>
    %59 = arith.subf %51, %58 : vector<20x32xf32>
    %60 = arith.mulf %59, %59 : vector<20x32xf32>
    %cst_32 = arith.constant dense<0.000000e+00> : vector<20xf32>
    %61 = vector.multi_reduction <add>, %60, %cst_32 [1] : vector<20x32xf32> to vector<20xf32>
    %62 = vector.shape_cast %61 : vector<20xf32> to vector<20x1xf32>
    %cst_33 = arith.constant 3.200000e+01 : f32
    %63 = vector.broadcast %cst_33 : f32 to vector<20x1xf32>
    %64 = arith.divf %62, %63 : vector<20x1xf32>
    %cst_34 = arith.constant 9.99999996E-13 : f32
    %65 = vector.broadcast %cst_34 : f32 to vector<20x1xf32>
    %66 = arith.addf %64, %65 : vector<20x1xf32>
    %67 = math.rsqrt %66 : vector<20x1xf32>
    %68 = vector.broadcast %67 : vector<20x1xf32> to vector<20x32xf32>
    %69 = arith.mulf %59, %68 : vector<20x32xf32>
    %70 = vector.broadcast %52 : vector<1x32xf32> to vector<20x32xf32>
    %71 = arith.mulf %69, %70 : vector<20x32xf32>
    %72 = vector.broadcast %53 : vector<1x32xf32> to vector<20x32xf32>
    %73 = arith.addf %71, %72 : vector<20x32xf32>
    %c0_35 = arith.constant 0 : index
    %c0_36 = arith.constant 0 : index
    %74 = vector.load %arg3[%c0_35, %c0_36] : memref<80x96xf32, #tpu.memory_space<vmem>>, vector<32x96xf32>
    %cst_37 = arith.constant dense<0.000000e+00> : vector<20x96xf32>
    %75 = tpu.matmul %73, %74, %cst_37 {dimension_numbers = #tpu.dot_dimension_numbers<[1], [0], [0], [1], [0, 0, 1, 1], [], []>} : vector<20x32xf32>, vector<32x96xf32>, vector<20x96xf32> -> vector<20x96xf32>
    %c32_38 = arith.constant 32 : index
    %c0_39 = arith.constant 0 : index
    %76 = vector.load %arg3[%c32_38, %c0_39] : memref<80x96xf32, #tpu.memory_space<vmem>>, vector<1x96xf32>
    %77 = vector.broadcast %76 : vector<1x96xf32> to vector<20x96xf32>
    %78 = arith.addf %75, %77 : vector<20x96xf32>
    %79 = vector.extract_strided_slice %78 {offsets = [0, 0], sizes = [20, 8], strides = [1, 1]} : vector<20x96xf32> to vector<20x8xf32>
    %80 = vector.extract_strided_slice %78 {offsets = [0, 32], sizes = [20, 8], strides = [1, 1]} : vector<20x96xf32> to vector<20x8xf32>
    %81 = vector.extract_strided_slice %78 {offsets = [0, 64], sizes = [20, 8], strides = [1, 1]} : vector<20x96xf32> to vector<20x8xf32>
    %cst_40 = arith.constant dense<0.000000e+00> : vector<20x20xf32>
    %82 = tpu.matmul %79, %80, %cst_40 {dimension_numbers = #tpu.dot_dimension_numbers<[1], [1], [0], [0], [0, 0, 1, 0], [], []>} : vector<20x8xf32>, vector<20x8xf32>, vector<20x20xf32> -> vector<20x20xf32>
    %83 = arith.addf %82, %22 : vector<20x20xf32>
    %cst_41 = arith.constant dense<0xFF800000> : vector<20xf32>
    %84 = vector.multi_reduction <maximumf>, %83, %cst_41 [1] : vector<20x20xf32> to vector<20xf32>
    %85 = vector.shape_cast %84 : vector<20xf32> to vector<20x1xf32>
    %86 = vector.broadcast %85 : vector<20x1xf32> to vector<20x20xf32>
    %87 = arith.subf %83, %86 : vector<20x20xf32>
    %88 = math.exp %87 : vector<20x20xf32>
    %cst_42 = arith.constant dense<0.000000e+00> : vector<20xf32>
    %89 = vector.multi_reduction <add>, %88, %cst_42 [1] : vector<20x20xf32> to vector<20xf32>
    %90 = vector.shape_cast %89 : vector<20xf32> to vector<20x1xf32>
    %91 = vector.broadcast %90 : vector<20x1xf32> to vector<20x20xf32>
    %92 = arith.divf %88, %91 : vector<20x20xf32>
    %cst_43 = arith.constant dense<0.000000e+00> : vector<20x8xf32>
    %93 = tpu.matmul %92, %81, %cst_43 {dimension_numbers = #tpu.dot_dimension_numbers<[1], [0], [0], [1], [0, 0, 1, 1], [], []>} : vector<20x20xf32>, vector<20x8xf32>, vector<20x8xf32> -> vector<20x8xf32>
    %94 = vector.extract_strided_slice %78 {offsets = [0, 8], sizes = [20, 8], strides = [1, 1]} : vector<20x96xf32> to vector<20x8xf32>
    %95 = vector.extract_strided_slice %78 {offsets = [0, 40], sizes = [20, 8], strides = [1, 1]} : vector<20x96xf32> to vector<20x8xf32>
    %96 = vector.extract_strided_slice %78 {offsets = [0, 72], sizes = [20, 8], strides = [1, 1]} : vector<20x96xf32> to vector<20x8xf32>
    %cst_44 = arith.constant dense<0.000000e+00> : vector<20x20xf32>
    %97 = tpu.matmul %94, %95, %cst_44 {dimension_numbers = #tpu.dot_dimension_numbers<[1], [1], [0], [0], [0, 0, 1, 0], [], []>} : vector<20x8xf32>, vector<20x8xf32>, vector<20x20xf32> -> vector<20x20xf32>
    %98 = arith.addf %97, %22 : vector<20x20xf32>
    %cst_45 = arith.constant dense<0xFF800000> : vector<20xf32>
    %99 = vector.multi_reduction <maximumf>, %98, %cst_45 [1] : vector<20x20xf32> to vector<20xf32>
    %100 = vector.shape_cast %99 : vector<20xf32> to vector<20x1xf32>
    %101 = vector.broadcast %100 : vector<20x1xf32> to vector<20x20xf32>
    %102 = arith.subf %98, %101 : vector<20x20xf32>
    %103 = math.exp %102 : vector<20x20xf32>
    %cst_46 = arith.constant dense<0.000000e+00> : vector<20xf32>
    %104 = vector.multi_reduction <add>, %103, %cst_46 [1] : vector<20x20xf32> to vector<20xf32>
    %105 = vector.shape_cast %104 : vector<20xf32> to vector<20x1xf32>
    %106 = vector.broadcast %105 : vector<20x1xf32> to vector<20x20xf32>
    %107 = arith.divf %103, %106 : vector<20x20xf32>
    %cst_47 = arith.constant dense<0.000000e+00> : vector<20x8xf32>
    %108 = tpu.matmul %107, %96, %cst_47 {dimension_numbers = #tpu.dot_dimension_numbers<[1], [0], [0], [1], [0, 0, 1, 1], [], []>} : vector<20x20xf32>, vector<20x8xf32>, vector<20x8xf32> -> vector<20x8xf32>
    %109 = vector.extract_strided_slice %78 {offsets = [0, 16], sizes = [20, 8], strides = [1, 1]} : vector<20x96xf32> to vector<20x8xf32>
    %110 = vector.extract_strided_slice %78 {offsets = [0, 48], sizes = [20, 8], strides = [1, 1]} : vector<20x96xf32> to vector<20x8xf32>
    %111 = vector.extract_strided_slice %78 {offsets = [0, 80], sizes = [20, 8], strides = [1, 1]} : vector<20x96xf32> to vector<20x8xf32>
    %cst_48 = arith.constant dense<0.000000e+00> : vector<20x20xf32>
    %112 = tpu.matmul %109, %110, %cst_48 {dimension_numbers = #tpu.dot_dimension_numbers<[1], [1], [0], [0], [0, 0, 1, 0], [], []>} : vector<20x8xf32>, vector<20x8xf32>, vector<20x20xf32> -> vector<20x20xf32>
    %113 = arith.addf %112, %22 : vector<20x20xf32>
    %cst_49 = arith.constant dense<0xFF800000> : vector<20xf32>
    %114 = vector.multi_reduction <maximumf>, %113, %cst_49 [1] : vector<20x20xf32> to vector<20xf32>
    %115 = vector.shape_cast %114 : vector<20xf32> to vector<20x1xf32>
    %116 = vector.broadcast %115 : vector<20x1xf32> to vector<20x20xf32>
    %117 = arith.subf %113, %116 : vector<20x20xf32>
    %118 = math.exp %117 : vector<20x20xf32>
    %cst_50 = arith.constant dense<0.000000e+00> : vector<20xf32>
    %119 = vector.multi_reduction <add>, %118, %cst_50 [1] : vector<20x20xf32> to vector<20xf32>
    %120 = vector.shape_cast %119 : vector<20xf32> to vector<20x1xf32>
    %121 = vector.broadcast %120 : vector<20x1xf32> to vector<20x20xf32>
    %122 = arith.divf %118, %121 : vector<20x20xf32>
    %cst_51 = arith.constant dense<0.000000e+00> : vector<20x8xf32>
    %123 = tpu.matmul %122, %111, %cst_51 {dimension_numbers = #tpu.dot_dimension_numbers<[1], [0], [0], [1], [0, 0, 1, 1], [], []>} : vector<20x20xf32>, vector<20x8xf32>, vector<20x8xf32> -> vector<20x8xf32>
    %124 = vector.extract_strided_slice %78 {offsets = [0, 24], sizes = [20, 8], strides = [1, 1]} : vector<20x96xf32> to vector<20x8xf32>
    %125 = vector.extract_strided_slice %78 {offsets = [0, 56], sizes = [20, 8], strides = [1, 1]} : vector<20x96xf32> to vector<20x8xf32>
    %126 = vector.extract_strided_slice %78 {offsets = [0, 88], sizes = [20, 8], strides = [1, 1]} : vector<20x96xf32> to vector<20x8xf32>
    %cst_52 = arith.constant dense<0.000000e+00> : vector<20x20xf32>
    %127 = tpu.matmul %124, %125, %cst_52 {dimension_numbers = #tpu.dot_dimension_numbers<[1], [1], [0], [0], [0, 0, 1, 0], [], []>} : vector<20x8xf32>, vector<20x8xf32>, vector<20x20xf32> -> vector<20x20xf32>
    %128 = arith.addf %127, %22 : vector<20x20xf32>
    %cst_53 = arith.constant dense<0xFF800000> : vector<20xf32>
    %129 = vector.multi_reduction <maximumf>, %128, %cst_53 [1] : vector<20x20xf32> to vector<20xf32>
    %130 = vector.shape_cast %129 : vector<20xf32> to vector<20x1xf32>
    %131 = vector.broadcast %130 : vector<20x1xf32> to vector<20x20xf32>
    %132 = arith.subf %128, %131 : vector<20x20xf32>
    %133 = math.exp %132 : vector<20x20xf32>
    %cst_54 = arith.constant dense<0.000000e+00> : vector<20xf32>
    %134 = vector.multi_reduction <add>, %133, %cst_54 [1] : vector<20x20xf32> to vector<20xf32>
    %135 = vector.shape_cast %134 : vector<20xf32> to vector<20x1xf32>
    %136 = vector.broadcast %135 : vector<20x1xf32> to vector<20x20xf32>
    %137 = arith.divf %133, %136 : vector<20x20xf32>
    %cst_55 = arith.constant dense<0.000000e+00> : vector<20x8xf32>
    %138 = tpu.matmul %137, %126, %cst_55 {dimension_numbers = #tpu.dot_dimension_numbers<[1], [0], [0], [1], [0, 0, 1, 1], [], []>} : vector<20x20xf32>, vector<20x8xf32>, vector<20x8xf32> -> vector<20x8xf32>
    %139 = tpu.concatenate %93, %108, %123, %138 in 1 : vector<20x8xf32>, vector<20x8xf32>, vector<20x8xf32>, vector<20x8xf32> -> vector<20x32xf32>
    %c72_56 = arith.constant 72 : index
    %c0_57 = arith.constant 0 : index
    %140 = vector.load %arg2[%c72_56, %c0_57] : memref<432x32xf32, #tpu.memory_space<vmem>>, vector<32x32xf32>
    %cst_58 = arith.constant dense<0.000000e+00> : vector<20x32xf32>
    %141 = tpu.matmul %139, %140, %cst_58 {dimension_numbers = #tpu.dot_dimension_numbers<[1], [0], [0], [1], [0, 0, 1, 1], [], []>} : vector<20x32xf32>, vector<32x32xf32>, vector<20x32xf32> -> vector<20x32xf32>
    %c104_59 = arith.constant 104 : index
    %c0_60 = arith.constant 0 : index
    %142 = vector.load %arg2[%c104_59, %c0_60] : memref<432x32xf32, #tpu.memory_space<vmem>>, vector<1x32xf32>
    %143 = vector.broadcast %142 : vector<1x32xf32> to vector<20x32xf32>
    %144 = arith.addf %141, %143 : vector<20x32xf32>
    %145 = arith.addf %144, %73 : vector<20x32xf32>
    %c112 = arith.constant 112 : index
    %c0_61 = arith.constant 0 : index
    %146 = vector.load %arg2[%c112, %c0_61] : memref<432x32xf32, #tpu.memory_space<vmem>>, vector<1x32xf32>
    %c120 = arith.constant 120 : index
    %c0_62 = arith.constant 0 : index
    %147 = vector.load %arg2[%c120, %c0_62] : memref<432x32xf32, #tpu.memory_space<vmem>>, vector<1x32xf32>
    %cst_63 = arith.constant dense<0.000000e+00> : vector<20xf32>
    %148 = vector.multi_reduction <add>, %145, %cst_63 [1] : vector<20x32xf32> to vector<20xf32>
    %149 = vector.shape_cast %148 : vector<20xf32> to vector<20x1xf32>
    %cst_64 = arith.constant 3.200000e+01 : f32
    %150 = vector.broadcast %cst_64 : f32 to vector<20x1xf32>
    %151 = arith.divf %149, %150 : vector<20x1xf32>
    %152 = vector.broadcast %151 : vector<20x1xf32> to vector<20x32xf32>
    %153 = arith.subf %145, %152 : vector<20x32xf32>
    %154 = arith.mulf %153, %153 : vector<20x32xf32>
    %cst_65 = arith.constant dense<0.000000e+00> : vector<20xf32>
    %155 = vector.multi_reduction <add>, %154, %cst_65 [1] : vector<20x32xf32> to vector<20xf32>
    %156 = vector.shape_cast %155 : vector<20xf32> to vector<20x1xf32>
    %cst_66 = arith.constant 3.200000e+01 : f32
    %157 = vector.broadcast %cst_66 : f32 to vector<20x1xf32>
    %158 = arith.divf %156, %157 : vector<20x1xf32>
    %cst_67 = arith.constant 9.99999996E-13 : f32
    %159 = vector.broadcast %cst_67 : f32 to vector<20x1xf32>
    %160 = arith.addf %158, %159 : vector<20x1xf32>
    %161 = math.rsqrt %160 : vector<20x1xf32>
    %162 = vector.broadcast %161 : vector<20x1xf32> to vector<20x32xf32>
    %163 = arith.mulf %153, %162 : vector<20x32xf32>
    %164 = vector.broadcast %146 : vector<1x32xf32> to vector<20x32xf32>
    %165 = arith.mulf %163, %164 : vector<20x32xf32>
    %166 = vector.broadcast %147 : vector<1x32xf32> to vector<20x32xf32>
    %167 = arith.addf %165, %166 : vector<20x32xf32>
    %c0_68 = arith.constant 0 : index
    %c0_69 = arith.constant 0 : index
    %168 = vector.load %arg4[%c0_68, %c0_69] : memref<80x64xf32, #tpu.memory_space<vmem>>, vector<32x64xf32>
    %cst_70 = arith.constant dense<0.000000e+00> : vector<20x64xf32>
    %169 = tpu.matmul %167, %168, %cst_70 {dimension_numbers = #tpu.dot_dimension_numbers<[1], [0], [0], [1], [0, 0, 1, 1], [], []>} : vector<20x32xf32>, vector<32x64xf32>, vector<20x64xf32> -> vector<20x64xf32>
    %c32_71 = arith.constant 32 : index
    %c0_72 = arith.constant 0 : index
    %170 = vector.load %arg4[%c32_71, %c0_72] : memref<80x64xf32, #tpu.memory_space<vmem>>, vector<1x64xf32>
    %171 = vector.broadcast %170 : vector<1x64xf32> to vector<20x64xf32>
    %172 = arith.addf %169, %171 : vector<20x64xf32>
    %173 = arith.mulf %172, %172 : vector<20x64xf32>
    %174 = arith.mulf %172, %173 : vector<20x64xf32>
    %cst_73 = arith.constant 4.471500e-02 : f32
    %175 = vector.broadcast %cst_73 : f32 to vector<20x64xf32>
    %176 = arith.mulf %175, %174 : vector<20x64xf32>
    %177 = arith.addf %172, %176 : vector<20x64xf32>
    %cst_74 = arith.constant 0.797884583 : f32
    %178 = vector.broadcast %cst_74 : f32 to vector<20x64xf32>
    %179 = arith.mulf %178, %177 : vector<20x64xf32>
    %180 = math.tanh %179 : vector<20x64xf32>
    %cst_75 = arith.constant 1.000000e+00 : f32
    %181 = vector.broadcast %cst_75 : f32 to vector<20x64xf32>
    %182 = arith.addf %181, %180 : vector<20x64xf32>
    %cst_76 = arith.constant 5.000000e-01 : f32
    %183 = vector.broadcast %cst_76 : f32 to vector<20x64xf32>
    %184 = arith.mulf %183, %182 : vector<20x64xf32>
    %185 = arith.mulf %172, %184 : vector<20x64xf32>
    %c128 = arith.constant 128 : index
    %c0_77 = arith.constant 0 : index
    %186 = vector.load %arg2[%c128, %c0_77] : memref<432x32xf32, #tpu.memory_space<vmem>>, vector<64x32xf32>
    %cst_78 = arith.constant dense<0.000000e+00> : vector<20x32xf32>
    %187 = tpu.matmul %185, %186, %cst_78 {dimension_numbers = #tpu.dot_dimension_numbers<[1], [0], [0], [1], [0, 0, 1, 1], [], []>} : vector<20x64xf32>, vector<64x32xf32>, vector<20x32xf32> -> vector<20x32xf32>
    %c192 = arith.constant 192 : index
    %c0_79 = arith.constant 0 : index
    %188 = vector.load %arg2[%c192, %c0_79] : memref<432x32xf32, #tpu.memory_space<vmem>>, vector<1x32xf32>
    %189 = vector.broadcast %188 : vector<1x32xf32> to vector<20x32xf32>
    %190 = arith.addf %187, %189 : vector<20x32xf32>
    %191 = arith.addf %190, %167 : vector<20x32xf32>
    %c200 = arith.constant 200 : index
    %c0_80 = arith.constant 0 : index
    %192 = vector.load %arg2[%c200, %c0_80] : memref<432x32xf32, #tpu.memory_space<vmem>>, vector<1x32xf32>
    %c208 = arith.constant 208 : index
    %c0_81 = arith.constant 0 : index
    %193 = vector.load %arg2[%c208, %c0_81] : memref<432x32xf32, #tpu.memory_space<vmem>>, vector<1x32xf32>
    %cst_82 = arith.constant dense<0.000000e+00> : vector<20xf32>
    %194 = vector.multi_reduction <add>, %191, %cst_82 [1] : vector<20x32xf32> to vector<20xf32>
    %195 = vector.shape_cast %194 : vector<20xf32> to vector<20x1xf32>
    %cst_83 = arith.constant 3.200000e+01 : f32
    %196 = vector.broadcast %cst_83 : f32 to vector<20x1xf32>
    %197 = arith.divf %195, %196 : vector<20x1xf32>
    %198 = vector.broadcast %197 : vector<20x1xf32> to vector<20x32xf32>
    %199 = arith.subf %191, %198 : vector<20x32xf32>
    %200 = arith.mulf %199, %199 : vector<20x32xf32>
    %cst_84 = arith.constant dense<0.000000e+00> : vector<20xf32>
    %201 = vector.multi_reduction <add>, %200, %cst_84 [1] : vector<20x32xf32> to vector<20xf32>
    %202 = vector.shape_cast %201 : vector<20xf32> to vector<20x1xf32>
    %cst_85 = arith.constant 3.200000e+01 : f32
    %203 = vector.broadcast %cst_85 : f32 to vector<20x1xf32>
    %204 = arith.divf %202, %203 : vector<20x1xf32>
    %cst_86 = arith.constant 9.99999996E-13 : f32
    %205 = vector.broadcast %cst_86 : f32 to vector<20x1xf32>
    %206 = arith.addf %204, %205 : vector<20x1xf32>
    %207 = math.rsqrt %206 : vector<20x1xf32>
    %208 = vector.broadcast %207 : vector<20x1xf32> to vector<20x32xf32>
    %209 = arith.mulf %199, %208 : vector<20x32xf32>
    %210 = vector.broadcast %192 : vector<1x32xf32> to vector<20x32xf32>
    %211 = arith.mulf %209, %210 : vector<20x32xf32>
    %212 = vector.broadcast %193 : vector<1x32xf32> to vector<20x32xf32>
    %213 = arith.addf %211, %212 : vector<20x32xf32>
    %c40_87 = arith.constant 40 : index
    %c0_88 = arith.constant 0 : index
    %214 = vector.load %arg3[%c40_87, %c0_88] : memref<80x96xf32, #tpu.memory_space<vmem>>, vector<32x96xf32>
    %cst_89 = arith.constant dense<0.000000e+00> : vector<20x96xf32>
    %215 = tpu.matmul %213, %214, %cst_89 {dimension_numbers = #tpu.dot_dimension_numbers<[1], [0], [0], [1], [0, 0, 1, 1], [], []>} : vector<20x32xf32>, vector<32x96xf32>, vector<20x96xf32> -> vector<20x96xf32>
    %c72_90 = arith.constant 72 : index
    %c0_91 = arith.constant 0 : index
    %216 = vector.load %arg3[%c72_90, %c0_91] : memref<80x96xf32, #tpu.memory_space<vmem>>, vector<1x96xf32>
    %217 = vector.broadcast %216 : vector<1x96xf32> to vector<20x96xf32>
    %218 = arith.addf %215, %217 : vector<20x96xf32>
    %219 = vector.extract_strided_slice %218 {offsets = [0, 0], sizes = [20, 8], strides = [1, 1]} : vector<20x96xf32> to vector<20x8xf32>
    %220 = vector.extract_strided_slice %218 {offsets = [0, 32], sizes = [20, 8], strides = [1, 1]} : vector<20x96xf32> to vector<20x8xf32>
    %221 = vector.extract_strided_slice %218 {offsets = [0, 64], sizes = [20, 8], strides = [1, 1]} : vector<20x96xf32> to vector<20x8xf32>
    %cst_92 = arith.constant dense<0.000000e+00> : vector<20x20xf32>
    %222 = tpu.matmul %219, %220, %cst_92 {dimension_numbers = #tpu.dot_dimension_numbers<[1], [1], [0], [0], [0, 0, 1, 0], [], []>} : vector<20x8xf32>, vector<20x8xf32>, vector<20x20xf32> -> vector<20x20xf32>
    %223 = arith.addf %222, %22 : vector<20x20xf32>
    %cst_93 = arith.constant dense<0xFF800000> : vector<20xf32>
    %224 = vector.multi_reduction <maximumf>, %223, %cst_93 [1] : vector<20x20xf32> to vector<20xf32>
    %225 = vector.shape_cast %224 : vector<20xf32> to vector<20x1xf32>
    %226 = vector.broadcast %225 : vector<20x1xf32> to vector<20x20xf32>
    %227 = arith.subf %223, %226 : vector<20x20xf32>
    %228 = math.exp %227 : vector<20x20xf32>
    %cst_94 = arith.constant dense<0.000000e+00> : vector<20xf32>
    %229 = vector.multi_reduction <add>, %228, %cst_94 [1] : vector<20x20xf32> to vector<20xf32>
    %230 = vector.shape_cast %229 : vector<20xf32> to vector<20x1xf32>
    %231 = vector.broadcast %230 : vector<20x1xf32> to vector<20x20xf32>
    %232 = arith.divf %228, %231 : vector<20x20xf32>
    %cst_95 = arith.constant dense<0.000000e+00> : vector<20x8xf32>
    %233 = tpu.matmul %232, %221, %cst_95 {dimension_numbers = #tpu.dot_dimension_numbers<[1], [0], [0], [1], [0, 0, 1, 1], [], []>} : vector<20x20xf32>, vector<20x8xf32>, vector<20x8xf32> -> vector<20x8xf32>
    %234 = vector.extract_strided_slice %218 {offsets = [0, 8], sizes = [20, 8], strides = [1, 1]} : vector<20x96xf32> to vector<20x8xf32>
    %235 = vector.extract_strided_slice %218 {offsets = [0, 40], sizes = [20, 8], strides = [1, 1]} : vector<20x96xf32> to vector<20x8xf32>
    %236 = vector.extract_strided_slice %218 {offsets = [0, 72], sizes = [20, 8], strides = [1, 1]} : vector<20x96xf32> to vector<20x8xf32>
    %cst_96 = arith.constant dense<0.000000e+00> : vector<20x20xf32>
    %237 = tpu.matmul %234, %235, %cst_96 {dimension_numbers = #tpu.dot_dimension_numbers<[1], [1], [0], [0], [0, 0, 1, 0], [], []>} : vector<20x8xf32>, vector<20x8xf32>, vector<20x20xf32> -> vector<20x20xf32>
    %238 = arith.addf %237, %22 : vector<20x20xf32>
    %cst_97 = arith.constant dense<0xFF800000> : vector<20xf32>
    %239 = vector.multi_reduction <maximumf>, %238, %cst_97 [1] : vector<20x20xf32> to vector<20xf32>
    %240 = vector.shape_cast %239 : vector<20xf32> to vector<20x1xf32>
    %241 = vector.broadcast %240 : vector<20x1xf32> to vector<20x20xf32>
    %242 = arith.subf %238, %241 : vector<20x20xf32>
    %243 = math.exp %242 : vector<20x20xf32>
    %cst_98 = arith.constant dense<0.000000e+00> : vector<20xf32>
    %244 = vector.multi_reduction <add>, %243, %cst_98 [1] : vector<20x20xf32> to vector<20xf32>
    %245 = vector.shape_cast %244 : vector<20xf32> to vector<20x1xf32>
    %246 = vector.broadcast %245 : vector<20x1xf32> to vector<20x20xf32>
    %247 = arith.divf %243, %246 : vector<20x20xf32>
    %cst_99 = arith.constant dense<0.000000e+00> : vector<20x8xf32>
    %248 = tpu.matmul %247, %236, %cst_99 {dimension_numbers = #tpu.dot_dimension_numbers<[1], [0], [0], [1], [0, 0, 1, 1], [], []>} : vector<20x20xf32>, vector<20x8xf32>, vector<20x8xf32> -> vector<20x8xf32>
    %249 = vector.extract_strided_slice %218 {offsets = [0, 16], sizes = [20, 8], strides = [1, 1]} : vector<20x96xf32> to vector<20x8xf32>
    %250 = vector.extract_strided_slice %218 {offsets = [0, 48], sizes = [20, 8], strides = [1, 1]} : vector<20x96xf32> to vector<20x8xf32>
    %251 = vector.extract_strided_slice %218 {offsets = [0, 80], sizes = [20, 8], strides = [1, 1]} : vector<20x96xf32> to vector<20x8xf32>
    %cst_100 = arith.constant dense<0.000000e+00> : vector<20x20xf32>
    %252 = tpu.matmul %249, %250, %cst_100 {dimension_numbers = #tpu.dot_dimension_numbers<[1], [1], [0], [0], [0, 0, 1, 0], [], []>} : vector<20x8xf32>, vector<20x8xf32>, vector<20x20xf32> -> vector<20x20xf32>
    %253 = arith.addf %252, %22 : vector<20x20xf32>
    %cst_101 = arith.constant dense<0xFF800000> : vector<20xf32>
    %254 = vector.multi_reduction <maximumf>, %253, %cst_101 [1] : vector<20x20xf32> to vector<20xf32>
    %255 = vector.shape_cast %254 : vector<20xf32> to vector<20x1xf32>
    %256 = vector.broadcast %255 : vector<20x1xf32> to vector<20x20xf32>
    %257 = arith.subf %253, %256 : vector<20x20xf32>
    %258 = math.exp %257 : vector<20x20xf32>
    %cst_102 = arith.constant dense<0.000000e+00> : vector<20xf32>
    %259 = vector.multi_reduction <add>, %258, %cst_102 [1] : vector<20x20xf32> to vector<20xf32>
    %260 = vector.shape_cast %259 : vector<20xf32> to vector<20x1xf32>
    %261 = vector.broadcast %260 : vector<20x1xf32> to vector<20x20xf32>
    %262 = arith.divf %258, %261 : vector<20x20xf32>
    %cst_103 = arith.constant dense<0.000000e+00> : vector<20x8xf32>
    %263 = tpu.matmul %262, %251, %cst_103 {dimension_numbers = #tpu.dot_dimension_numbers<[1], [0], [0], [1], [0, 0, 1, 1], [], []>} : vector<20x20xf32>, vector<20x8xf32>, vector<20x8xf32> -> vector<20x8xf32>
    %264 = vector.extract_strided_slice %218 {offsets = [0, 24], sizes = [20, 8], strides = [1, 1]} : vector<20x96xf32> to vector<20x8xf32>
    %265 = vector.extract_strided_slice %218 {offsets = [0, 56], sizes = [20, 8], strides = [1, 1]} : vector<20x96xf32> to vector<20x8xf32>
    %266 = vector.extract_strided_slice %218 {offsets = [0, 88], sizes = [20, 8], strides = [1, 1]} : vector<20x96xf32> to vector<20x8xf32>
    %cst_104 = arith.constant dense<0.000000e+00> : vector<20x20xf32>
    %267 = tpu.matmul %264, %265, %cst_104 {dimension_numbers = #tpu.dot_dimension_numbers<[1], [1], [0], [0], [0, 0, 1, 0], [], []>} : vector<20x8xf32>, vector<20x8xf32>, vector<20x20xf32> -> vector<20x20xf32>
    %268 = arith.addf %267, %22 : vector<20x20xf32>
    %cst_105 = arith.constant dense<0xFF800000> : vector<20xf32>
    %269 = vector.multi_reduction <maximumf>, %268, %cst_105 [1] : vector<20x20xf32> to vector<20xf32>
    %270 = vector.shape_cast %269 : vector<20xf32> to vector<20x1xf32>
    %271 = vector.broadcast %270 : vector<20x1xf32> to vector<20x20xf32>
    %272 = arith.subf %268, %271 : vector<20x20xf32>
    %273 = math.exp %272 : vector<20x20xf32>
    %cst_106 = arith.constant dense<0.000000e+00> : vector<20xf32>
    %274 = vector.multi_reduction <add>, %273, %cst_106 [1] : vector<20x20xf32> to vector<20xf32>
    %275 = vector.shape_cast %274 : vector<20xf32> to vector<20x1xf32>
    %276 = vector.broadcast %275 : vector<20x1xf32> to vector<20x20xf32>
    %277 = arith.divf %273, %276 : vector<20x20xf32>
    %cst_107 = arith.constant dense<0.000000e+00> : vector<20x8xf32>
    %278 = tpu.matmul %277, %266, %cst_107 {dimension_numbers = #tpu.dot_dimension_numbers<[1], [0], [0], [1], [0, 0, 1, 1], [], []>} : vector<20x20xf32>, vector<20x8xf32>, vector<20x8xf32> -> vector<20x8xf32>
    %279 = tpu.concatenate %233, %248, %263, %278 in 1 : vector<20x8xf32>, vector<20x8xf32>, vector<20x8xf32>, vector<20x8xf32> -> vector<20x32xf32>
    %c216 = arith.constant 216 : index
    %c0_108 = arith.constant 0 : index
    %280 = vector.load %arg2[%c216, %c0_108] : memref<432x32xf32, #tpu.memory_space<vmem>>, vector<32x32xf32>
    %cst_109 = arith.constant dense<0.000000e+00> : vector<20x32xf32>
    %281 = tpu.matmul %279, %280, %cst_109 {dimension_numbers = #tpu.dot_dimension_numbers<[1], [0], [0], [1], [0, 0, 1, 1], [], []>} : vector<20x32xf32>, vector<32x32xf32>, vector<20x32xf32> -> vector<20x32xf32>
    %c248 = arith.constant 248 : index
    %c0_110 = arith.constant 0 : index
    %282 = vector.load %arg2[%c248, %c0_110] : memref<432x32xf32, #tpu.memory_space<vmem>>, vector<1x32xf32>
    %283 = vector.broadcast %282 : vector<1x32xf32> to vector<20x32xf32>
    %284 = arith.addf %281, %283 : vector<20x32xf32>
    %285 = arith.addf %284, %213 : vector<20x32xf32>
    %c256 = arith.constant 256 : index
    %c0_111 = arith.constant 0 : index
    %286 = vector.load %arg2[%c256, %c0_111] : memref<432x32xf32, #tpu.memory_space<vmem>>, vector<1x32xf32>
    %c264 = arith.constant 264 : index
    %c0_112 = arith.constant 0 : index
    %287 = vector.load %arg2[%c264, %c0_112] : memref<432x32xf32, #tpu.memory_space<vmem>>, vector<1x32xf32>
    %cst_113 = arith.constant dense<0.000000e+00> : vector<20xf32>
    %288 = vector.multi_reduction <add>, %285, %cst_113 [1] : vector<20x32xf32> to vector<20xf32>
    %289 = vector.shape_cast %288 : vector<20xf32> to vector<20x1xf32>
    %cst_114 = arith.constant 3.200000e+01 : f32
    %290 = vector.broadcast %cst_114 : f32 to vector<20x1xf32>
    %291 = arith.divf %289, %290 : vector<20x1xf32>
    %292 = vector.broadcast %291 : vector<20x1xf32> to vector<20x32xf32>
    %293 = arith.subf %285, %292 : vector<20x32xf32>
    %294 = arith.mulf %293, %293 : vector<20x32xf32>
    %cst_115 = arith.constant dense<0.000000e+00> : vector<20xf32>
    %295 = vector.multi_reduction <add>, %294, %cst_115 [1] : vector<20x32xf32> to vector<20xf32>
    %296 = vector.shape_cast %295 : vector<20xf32> to vector<20x1xf32>
    %cst_116 = arith.constant 3.200000e+01 : f32
    %297 = vector.broadcast %cst_116 : f32 to vector<20x1xf32>
    %298 = arith.divf %296, %297 : vector<20x1xf32>
    %cst_117 = arith.constant 9.99999996E-13 : f32
    %299 = vector.broadcast %cst_117 : f32 to vector<20x1xf32>
    %300 = arith.addf %298, %299 : vector<20x1xf32>
    %301 = math.rsqrt %300 : vector<20x1xf32>
    %302 = vector.broadcast %301 : vector<20x1xf32> to vector<20x32xf32>
    %303 = arith.mulf %293, %302 : vector<20x32xf32>
    %304 = vector.broadcast %286 : vector<1x32xf32> to vector<20x32xf32>
    %305 = arith.mulf %303, %304 : vector<20x32xf32>
    %306 = vector.broadcast %287 : vector<1x32xf32> to vector<20x32xf32>
    %307 = arith.addf %305, %306 : vector<20x32xf32>
    %c40_118 = arith.constant 40 : index
    %c0_119 = arith.constant 0 : index
    %308 = vector.load %arg4[%c40_118, %c0_119] : memref<80x64xf32, #tpu.memory_space<vmem>>, vector<32x64xf32>
    %cst_120 = arith.constant dense<0.000000e+00> : vector<20x64xf32>
    %309 = tpu.matmul %307, %308, %cst_120 {dimension_numbers = #tpu.dot_dimension_numbers<[1], [0], [0], [1], [0, 0, 1, 1], [], []>} : vector<20x32xf32>, vector<32x64xf32>, vector<20x64xf32> -> vector<20x64xf32>
    %c72_121 = arith.constant 72 : index
    %c0_122 = arith.constant 0 : index
    %310 = vector.load %arg4[%c72_121, %c0_122] : memref<80x64xf32, #tpu.memory_space<vmem>>, vector<1x64xf32>
    %311 = vector.broadcast %310 : vector<1x64xf32> to vector<20x64xf32>
    %312 = arith.addf %309, %311 : vector<20x64xf32>
    %313 = arith.mulf %312, %312 : vector<20x64xf32>
    %314 = arith.mulf %312, %313 : vector<20x64xf32>
    %cst_123 = arith.constant 4.471500e-02 : f32
    %315 = vector.broadcast %cst_123 : f32 to vector<20x64xf32>
    %316 = arith.mulf %315, %314 : vector<20x64xf32>
    %317 = arith.addf %312, %316 : vector<20x64xf32>
    %cst_124 = arith.constant 0.797884583 : f32
    %318 = vector.broadcast %cst_124 : f32 to vector<20x64xf32>
    %319 = arith.mulf %318, %317 : vector<20x64xf32>
    %320 = math.tanh %319 : vector<20x64xf32>
    %cst_125 = arith.constant 1.000000e+00 : f32
    %321 = vector.broadcast %cst_125 : f32 to vector<20x64xf32>
    %322 = arith.addf %321, %320 : vector<20x64xf32>
    %cst_126 = arith.constant 5.000000e-01 : f32
    %323 = vector.broadcast %cst_126 : f32 to vector<20x64xf32>
    %324 = arith.mulf %323, %322 : vector<20x64xf32>
    %325 = arith.mulf %312, %324 : vector<20x64xf32>
    %c272 = arith.constant 272 : index
    %c0_127 = arith.constant 0 : index
    %326 = vector.load %arg2[%c272, %c0_127] : memref<432x32xf32, #tpu.memory_space<vmem>>, vector<64x32xf32>
    %cst_128 = arith.constant dense<0.000000e+00> : vector<20x32xf32>
    %327 = tpu.matmul %325, %326, %cst_128 {dimension_numbers = #tpu.dot_dimension_numbers<[1], [0], [0], [1], [0, 0, 1, 1], [], []>} : vector<20x64xf32>, vector<64x32xf32>, vector<20x32xf32> -> vector<20x32xf32>
    %c336 = arith.constant 336 : index
    %c0_129 = arith.constant 0 : index
    %328 = vector.load %arg2[%c336, %c0_129] : memref<432x32xf32, #tpu.memory_space<vmem>>, vector<1x32xf32>
    %329 = vector.broadcast %328 : vector<1x32xf32> to vector<20x32xf32>
    %330 = arith.addf %327, %329 : vector<20x32xf32>
    %331 = arith.addf %330, %307 : vector<20x32xf32>
    %c344 = arith.constant 344 : index
    %c0_130 = arith.constant 0 : index
    %332 = vector.load %arg2[%c344, %c0_130] : memref<432x32xf32, #tpu.memory_space<vmem>>, vector<1x32xf32>
    %c352 = arith.constant 352 : index
    %c0_131 = arith.constant 0 : index
    %333 = vector.load %arg2[%c352, %c0_131] : memref<432x32xf32, #tpu.memory_space<vmem>>, vector<1x32xf32>
    %cst_132 = arith.constant dense<0.000000e+00> : vector<20xf32>
    %334 = vector.multi_reduction <add>, %331, %cst_132 [1] : vector<20x32xf32> to vector<20xf32>
    %335 = vector.shape_cast %334 : vector<20xf32> to vector<20x1xf32>
    %cst_133 = arith.constant 3.200000e+01 : f32
    %336 = vector.broadcast %cst_133 : f32 to vector<20x1xf32>
    %337 = arith.divf %335, %336 : vector<20x1xf32>
    %338 = vector.broadcast %337 : vector<20x1xf32> to vector<20x32xf32>
    %339 = arith.subf %331, %338 : vector<20x32xf32>
    %340 = arith.mulf %339, %339 : vector<20x32xf32>
    %cst_134 = arith.constant dense<0.000000e+00> : vector<20xf32>
    %341 = vector.multi_reduction <add>, %340, %cst_134 [1] : vector<20x32xf32> to vector<20xf32>
    %342 = vector.shape_cast %341 : vector<20xf32> to vector<20x1xf32>
    %cst_135 = arith.constant 3.200000e+01 : f32
    %343 = vector.broadcast %cst_135 : f32 to vector<20x1xf32>
    %344 = arith.divf %342, %343 : vector<20x1xf32>
    %cst_136 = arith.constant 9.99999996E-13 : f32
    %345 = vector.broadcast %cst_136 : f32 to vector<20x1xf32>
    %346 = arith.addf %344, %345 : vector<20x1xf32>
    %347 = math.rsqrt %346 : vector<20x1xf32>
    %348 = vector.broadcast %347 : vector<20x1xf32> to vector<20x32xf32>
    %349 = arith.mulf %339, %348 : vector<20x32xf32>
    %350 = vector.broadcast %332 : vector<1x32xf32> to vector<20x32xf32>
    %351 = arith.mulf %349, %350 : vector<20x32xf32>
    %352 = vector.broadcast %333 : vector<1x32xf32> to vector<20x32xf32>
    %353 = arith.addf %351, %352 : vector<20x32xf32>
    %cst_137 = arith.constant dense<0.000000e+00> : vector<2x32xf32>
    %354 = tpu.matmul %6, %353, %cst_137 {dimension_numbers = #tpu.dot_dimension_numbers<[1], [0], [0], [1], [0, 0, 1, 1], [], []>} : vector<2x20xf32>, vector<20x32xf32>, vector<2x32xf32> -> vector<2x32xf32>
    %355 = vector.broadcast %16 : vector<1x20xf32> to vector<2x20xf32>
    %356 = arith.mulf %7, %355 : vector<2x20xf32>
    %cst_138 = arith.constant dense<0.000000e+00> : vector<2xf32>
    %357 = vector.multi_reduction <add>, %356, %cst_138 [1] : vector<2x20xf32> to vector<2xf32>
    %358 = vector.shape_cast %357 : vector<2xf32> to vector<2x1xf32>
    %cst_139 = arith.constant dense<0.000000e+00> : vector<2x32xf32>
    %359 = tpu.matmul %356, %353, %cst_139 {dimension_numbers = #tpu.dot_dimension_numbers<[1], [0], [0], [1], [0, 0, 1, 1], [], []>} : vector<2x20xf32>, vector<20x32xf32>, vector<2x32xf32> -> vector<2x32xf32>
    %cst_140 = arith.constant 9.99999974E-6 : f32
    %360 = vector.broadcast %cst_140 : f32 to vector<2x1xf32>
    %361 = arith.addf %358, %360 : vector<2x1xf32>
    %362 = vector.broadcast %361 : vector<2x1xf32> to vector<2x32xf32>
    %363 = arith.divf %359, %362 : vector<2x32xf32>
    %c360 = arith.constant 360 : index
    %c0_141 = arith.constant 0 : index
    %364 = vector.load %arg2[%c360, %c0_141] : memref<432x32xf32, #tpu.memory_space<vmem>>, vector<32x16xf32>
    %cst_142 = arith.constant dense<0.000000e+00> : vector<2x16xf32>
    %365 = tpu.matmul %354, %364, %cst_142 {dimension_numbers = #tpu.dot_dimension_numbers<[1], [0], [0], [1], [0, 0, 1, 1], [], []>} : vector<2x32xf32>, vector<32x16xf32>, vector<2x16xf32> -> vector<2x16xf32>
    %c392 = arith.constant 392 : index
    %c0_143 = arith.constant 0 : index
    %366 = vector.load %arg2[%c392, %c0_143] : memref<432x32xf32, #tpu.memory_space<vmem>>, vector<32x16xf32>
    %cst_144 = arith.constant dense<0.000000e+00> : vector<2x16xf32>
    %367 = tpu.matmul %363, %366, %cst_144 {dimension_numbers = #tpu.dot_dimension_numbers<[1], [0], [0], [1], [0, 0, 1, 1], [], []>} : vector<2x32xf32>, vector<32x16xf32>, vector<2x16xf32> -> vector<2x16xf32>
    %368 = arith.addf %365, %367 : vector<2x16xf32>
    %c424 = arith.constant 424 : index
    %c0_145 = arith.constant 0 : index
    %369 = vector.load %arg2[%c424, %c0_145] : memref<432x32xf32, #tpu.memory_space<vmem>>, vector<1x16xf32>
    %370 = vector.broadcast %369 : vector<1x16xf32> to vector<2x16xf32>
    %371 = arith.addf %368, %370 : vector<2x16xf32>
    %c0_146 = arith.constant 0 : index
    %c0_147 = arith.constant 0 : index
    %372 = vector.load %arg5[%c0_146, %c0_147] : memref<2x16xf32, #tpu.memory_space<vmem>>, vector<2x16xf32>
    tpu.vector_store %arg5[%c0_146, %c0_147], %371 {strides = array<i32>} : memref<2x16xf32, #tpu.memory_space<vmem>>, vector<2x16xf32>,
    return
  }
}

</mosaic_0001>

<llo_original>
// kernel: md_forward.1
$region0: #{md_forward.1}
  #allocation0 [shape = 'u32[]', space=smem, size = 0x4, offset = 0x4, fixed_abs, tag = 'smem constant byte address 0x4 - core index']
  #allocation1 [shape = 'u32[144,128]{1,0:T(1,128)}', space=vmem, size = 0x12000, scoped, tag = 'internal scratch']
  %s0 = inlined_call_operand.vmem [shape: f32[16,32], index: 0, kind: input, shape index: {}]
  %s1 = inlined_call_operand.vmem [shape: f32[112,32], index: 1, kind: input, shape index: {}]
  %s2 = inlined_call_operand.vmem [shape: f32[432,32], index: 2, kind: input, shape index: {}]
  %s3 = inlined_call_operand.vmem [shape: f32[80,96], index: 3, kind: input, shape index: {}]
  %s4 = inlined_call_operand.vmem [shape: f32[80,64], index: 4, kind: input, shape index: {}]
  %s5 = inlined_call_operand.hbm [shape: f32[2,16], index: 5, kind: output, shape index: {}]
  %s6 = sld [smem:[#allocation0]]
  $region30: #{md_forward.1} parent=0
    _
  %s8 = ssub.s32 1, %s6
  %s9 = scalar_select 0, %s8, %s6
  $region1: #{md_forward.1} parent=0
    #allocation2 [shape = 'u8[1024]{0}', space=vmem, size = 0x400, scoped, tag = 'output window, operand 0, single buffered']
    #allocation3 [shape = 's32[1]{0}', space=sflag, size = 0x4, scoped, tag = 'scoped memory for md_forward.1']
    %10 = vsyncpa [#allocation3], 0
    // Predicated region
    $region2: #{md_forward.1} parent=1 // pred_check
      _
    $region3: #{md_forward.1} parent=1 // pred_check_branch
      %12 = sbr.rel (0) target = $region5
    $region4: #{md_forward.1} parent=1 // pred_region
      _
    $region5: #{md_forward.1} parent=1 // pred_fallthru
      _
    // Predicated region
    $region6: #{md_forward.1} parent=1 // pred_check
      _
    $region7: #{md_forward.1} parent=1 // pred_check_branch
      %14 = sbr.rel (0) target = $region9
    $region8: #{md_forward.1} parent=1 // pred_region
      _
    $region9: #{md_forward.1} parent=1 // pred_fallthru
      _
    // Predicated region
    $region10: #{md_forward.1} parent=1 // pred_check
      _
    $region11: #{md_forward.1} parent=1 // pred_check_branch
      %16 = sbr.rel (0) target = $region13
    $region12: #{md_forward.1} parent=1 // pred_region
      _
    $region13: #{md_forward.1} parent=1 // pred_fallthru
      _
    // Predicated region
    $region14: #{md_forward.1} parent=1 // pred_check
      _
    $region15: #{md_forward.1} parent=1 // pred_check_branch
      %18 = sbr.rel (0) target = $region17
    $region16: #{md_forward.1} parent=1 // pred_region
      _
    $region17: #{md_forward.1} parent=1 // pred_fallthru
      _
    // Predicated region
    $region18: #{md_forward.1} parent=1 // pred_check
      _
    $region19: #{md_forward.1} parent=1 // pred_check_branch
      %20 = sbr.rel (0) target = $region21
    $region20: #{md_forward.1} parent=1 // pred_region
      _
    $region21: #{md_forward.1} parent=1 // pred_fallthru
      _
    %v21 = vld [vmem:[%s0] sm:$0xff]
    %v22 = vld [vmem:[%s0 + $0x8] sm:$0xff]
    %v23 = vld [vmem:[%s1] sm:$0xff]
    %v24 = vld [vmem:[%s1 + $0x8] sm:$0xff]
    %v25 = vld [vmem:[%s1 + $0x10] sm:$0xf]
    %v26 = vld [vmem:[%s1 + $0x18] sm:$0xff]
    %v27 = vld [vmem:[%s1 + $0x20] sm:$0xff]
    %v28 = vld [vmem:[%s1 + $0x28] sm:$0xf]
    %v29 = vld [vmem:[%s1 + $0x30] sm:$0xff]
    %v30 = vld [vmem:[%s1 + $0x38] sm:$0xff]
    %v31 = vld [vmem:[%s1 + $0x40] sm:$0x1]
    %v32 = vld [vmem:[%s1 + $0x48] sm:$0xff]
    %v33 = vld [vmem:[%s1 + $0x50] sm:$0xff]
    %v34 = vld [vmem:[%s1 + $0x58] sm:$0xf]
    %v35 = vld [vmem:[%s1 + $0x60] sm:$0x3]
    %v36 = vld [vmem:[%s1 + $0x68] sm:$0x3]
    %v37 = vand.u32 2147483647, %v21
    %v38 = vand.u32 2147483647, %v22
    %vm39 = vcmask 261120
    %v41 = vsel %vm39, 1.0, 0
    %v44 = vsel %vm39, %v37, 0
    %v47 = vsel %vm39, %v38, 0
    %49 = vmatprep.subr.mxu0 0.0
    %50 = vmatpush1.xpose.msra.mxu0 0.0
    %51 = vmatprep.subr.mxu0 0.0
    %52 = vmatpush1.xpose.msra.mxu0 0.0
    %53 = vmatprep.subr.mxu0 0.0
    %54 = vmatpush1.xpose.msra.mxu0 0.0
    %55 = vmatprep.subr.mxu0 0.0
    %56 = vmatpush1.xpose.msra.mxu0 0.0
    %57 = vmatprep.subr.mxu0 0.0
    %58 = vmatpush1.xpose.msra.mxu0 0.0
    %59 = vmatprep.subr.mxu0 0.0
    %60 = vmatpush1.xpose.msra.mxu0 0.0
    %61 = vmatprep.subr.mxu0 0.0
    %62 = vmatpush1.xpose.msra.mxu0 0.0
    %63 = vmatprep.subr.mxu0 0.0
    %64 = vmatpush1.xpose.msra.mxu0 0.0
    %65 = vmatprep.subr.mxu0 0.0
    %66 = vmatpush1.xpose.msra.mxu0 0.0
    %67 = vmatprep.subr.mxu0 0.0
    %68 = vmatpush1.xpose.msra.mxu0 0.0
    %69 = vmatprep.subr.mxu0 0.0
    %70 = vmatpush1.xpose.msra.mxu0 0.0
    %71 = vmatprep.subr.mxu0 0.0
    %72 = vmatpush1.xpose.msra.mxu0 0.0
    %73 = vmatprep.subr.mxu0 0.0
    %74 = vmatpush1.xpose.msra.mxu0 0.0
    %75 = vmatprep.subr.mxu0 0.0
    %76 = vmatpush1.xpose.msra.mxu0 0.0
    %77 = vmatprep.subr.mxu0 0.0
    %78 = vmatpush1.xpose.msra.mxu0 %v47
    %79 = vmatprep.subr.mxu0 0.0
    %80 = vmatpush1.xpose.msra.mxu0 %v44
    %81 = vmatprep.subr.mxu0 0.0
    %82 = vmatpush2.xpose.msra.mxu0 0.0
    %83 = vmatprep.subr.mxu0 0.0
    %84 = vmatpush2.xpose.msra.mxu0 0.0
    %85 = vmatprep.subr.mxu0 0.0
    %86 = vmatpush2.xpose.msra.mxu0 0.0
    %87 = vmatprep.subr.mxu0 0.0
    %88 = vmatpush2.xpose.msra.mxu0 0.0
    %89 = vmatprep.subr.mxu0 0.0
    %90 = vmatpush2.xpose.msra.mxu0 0.0
    %91 = vmatprep.subr.mxu0 0.0
    %92 = vmatpush2.xpose.msra.mxu0 0.0
    %93 = vmatprep.subr.mxu0 0.0
    %94 = vmatpush2.xpose.msra.mxu0 0.0
    %95 = vmatprep.subr.mxu0 0.0
    %96 = vmatpush2.xpose.msra.mxu0 0.0
    %97 = vmatprep.subr.mxu0 0.0
    %98 = vmatpush2.xpose.msra.mxu0 0.0
    %99 = vmatprep.subr.mxu0 0.0
    %100 = vmatpush2.xpose.msra.mxu0 0.0
    %101 = vmatprep.subr.mxu0 0.0
    %102 = vmatpush2.xpose.msra.mxu0 0.0
    %103 = vmatprep.subr.mxu0 0.0
    %104 = vmatpush2.xpose.msra.mxu0 0.0
    %105 = vmatprep.subr.mxu0 0.0
    %106 = vmatpush2.xpose.msra.mxu0 0.0
    %107 = vmatprep.subr.mxu0 0.0
    %108 = vmatpush2.xpose.msra.mxu0 0.0
    %109 = vmatprep.subr.mxu0 0.0
    %110 = vmatpush2.xpose.msra.mxu0 0.0
    %111 = vmatprep.subr.mxu0 0.0
    %112 = vmatpush2.xpose.msra.mxu0 0.0
    %113 = vmatprep.mubr.f32.mxu0 0.0
    %114 = vmatmul.mubr.f32.gmra.mxu0 %v41
    %v115 = vpop.f32.mrf.mxu0
    %v116 = vadd.f32 0.0, %v115
    %v117 = vpop.f32.mrf.mxu0
    %118 = vdwg.mxu0
    %vm119 = vcmp.gt.f32.partialorder %v116, 0.0
    %v120 = vsel %vm119, 1, 0
    %v121 = vcvt.s32.f32 %v120
    %vm122 = vcmask 130048
    %v124 = vsel %vm122, %v121, 0
    %126 = vmatprep.subr.mxu0 0.0
    %127 = vmatpush1.msra.mxu0 0.0
    %128 = vmatprep.subr.mxu0 0.0
    %129 = vmatpush1.msra.mxu0 0.0
    %130 = vmatprep.subr.mxu0 0.0
    %131 = vmatpush1.msra.mxu0 0.0
    %132 = vmatprep.subr.mxu0 0.0
    %133 = vmatpush1.msra.mxu0 0.0
    %134 = vmatprep.subr.mxu0 0.0
    %135 = vmatpush1.msra.mxu0 0.0
    %136 = vmatprep.subr.mxu0 0.0
    %137 = vmatpush1.msra.mxu0 0.0
    %138 = vmatprep.subr.mxu0 0.0
    %139 = vmatpush1.msra.mxu0 0.0
    %140 = vmatprep.subr.mxu0 0.0
    %141 = vmatpush1.msra.mxu0 0.0
    %142 = vmatprep.subr.mxu0 0.0
    %143 = vmatpush1.msra.mxu0 0.0
    %144 = vmatprep.subr.mxu0 0.0
    %145 = vmatpush1.msra.mxu0 0.0
    %146 = vmatprep.subr.mxu0 0.0
    %147 = vmatpush1.msra.mxu0 0.0
    %148 = vmatprep.subr.mxu0 0.0
    %149 = vmatpush1.msra.mxu0 0.0
    %150 = vmatprep.subr.mxu0 0.0
    %151 = vmatpush1.msra.mxu0 0.0
    %152 = vmatprep.subr.mxu0 0.0
    %153 = vmatpush1.msra.mxu0 0.0
    %154 = vmatprep.subr.mxu0 0.0
    %155 = vmatpush1.msra.mxu0 %v30
    %156 = vmatprep.subr.mxu0 0.0
    %157 = vmatpush1.msra.mxu0 %v29
    %158 = vmatprep.subr.mxu0 0.0
    %159 = vmatpush2.msra.mxu0 0.0
    %160 = vmatprep.subr.mxu0 0.0
    %161 = vmatpush2.msra.mxu0 0.0
    %162 = vmatprep.subr.mxu0 0.0
    %163 = vmatpush2.msra.mxu0 0.0
    %164 = vmatprep.subr.mxu0 0.0
    %165 = vmatpush2.msra.mxu0 0.0
    %166 = vmatprep.subr.mxu0 0.0
    %167 = vmatpush2.msra.mxu0 0.0
    %168 = vmatprep.subr.mxu0 0.0
    %169 = vmatpush2.msra.mxu0 0.0
    %170 = vmatprep.subr.mxu0 0.0
    %171 = vmatpush2.msra.mxu0 0.0
    %172 = vmatprep.subr.mxu0 0.0
    %173 = vmatpush2.msra.mxu0 0.0
    %174 = vmatprep.subr.mxu0 0.0
    %175 = vmatpush2.msra.mxu0 0.0
    %176 = vmatprep.subr.mxu0 0.0
    %177 = vmatpush2.msra.mxu0 0.0
    %178 = vmatprep.subr.mxu0 0.0
    %179 = vmatpush2.msra.mxu0 0.0
    %180 = vmatprep.subr.mxu0 0.0
    %181 = vmatpush2.msra.mxu0 0.0
    %182 = vmatprep.subr.mxu0 0.0
    %183 = vmatpush2.msra.mxu0 0.0
    %184 = vmatprep.subr.mxu0 0.0
    %185 = vmatpush2.msra.mxu0 0.0
    %186 = vmatprep.subr.mxu0 0.0
    %187 = vmatpush2.msra.mxu0 0.0
    %188 = vmatprep.subr.mxu0 0.0
    %189 = vmatpush2.msra.mxu0 0.0
    %190 = vmatprep.mubr.f32.mxu0 0.0
    %191 = vmatmul.mubr.f32.gmra.mxu0 %v124
    %v192 = vpop.f32.mrf.mxu0
    %v193 = vadd.f32 %v31, %v192
    %v194 = vpop.f32.mrf.mxu0
    %195 = vdwg.mxu0
    %v196 = vsub.f32 1.0, %v193
    %v197 = vmul.f32 %v196, -10000.0
    %v198 = vlaneseq
    %v199 = vshrl.u32 %v198, 7
    %v200 = vsub.s32 0, %v199
    %v201 = vrot.slane %v197, %v200
    %v202 = vadd.f32 %v32, %v201
    %v203 = vadd.f32 %v33, %v201
    %v204 = vadd.f32 %v34, %v201
    %v205 = vld [vmem:[%s2] sm:$0xff]
    %v206 = vld [vmem:[%s2 + $0x8] sm:$0xff]
    %v207 = vld [vmem:[%s2 + $0x10] sm:$0xff]
    %v208 = vld [vmem:[%s2 + $0x18] sm:$0xff]
    %v209 = vld [vmem:[%s2 + $0x20] sm:$0x1]
    %v210 = vlaneseq
    %v211 = vshrl.u32 %v210, 7
    %v212 = vsub.s32 0, %v211
    %v213 = vrot.slane %v209, %v212
    %v215 = vsel %vm39, %v21, 0
    %v218 = vsel %vm39, %v22, 0
    %220 = vmatprep.subr.mxu0 0.0
    %221 = vmatpush1.msra.mxu0 0.0
    %222 = vmatprep.subr.mxu0 0.0
    %223 = vmatpush1.msra.mxu0 0.0
    %224 = vmatprep.subr.mxu0 0.0
    %225 = vmatpush1.msra.mxu0 0.0
    %226 = vmatprep.subr.mxu0 0.0
    %227 = vmatpush1.msra.mxu0 0.0
    %228 = vmatprep.subr.mxu0 0.0
    %229 = vmatpush1.msra.mxu0 0.0
    %230 = vmatprep.subr.mxu0 0.0
    %231 = vmatpush1.msra.mxu0 0.0
    %232 = vmatprep.subr.mxu0 0.0
    %233 = vmatpush1.msra.mxu0 0.0
    %234 = vmatprep.subr.mxu0 0.0
    %235 = vmatpush1.msra.mxu0 0.0
    %236 = vmatprep.subr.mxu0 0.0
    %237 = vmatpush1.msra.mxu0 0.0
    %238 = vmatprep.subr.mxu0 0.0
    %239 = vmatpush1.msra.mxu0 0.0
    %240 = vmatprep.subr.mxu0 0.0
    %241 = vmatpush1.msra.mxu0 0.0
    %242 = vmatprep.subr.mxu0 0.0
    %243 = vmatpush1.msra.mxu0 0.0
    %244 = vmatprep.subr.mxu0 0.0
    %245 = vmatpush1.msra.mxu0 %v208
    %246 = vmatprep.subr.mxu0 0.0
    %247 = vmatpush1.msra.mxu0 %v207
    %248 = vmatprep.subr.mxu0 0.0
    %249 = vmatpush1.msra.mxu0 %v206
    %250 = vmatprep.subr.mxu0 0.0
    %251 = vmatpush1.msra.mxu0 %v205
    %252 = vmatprep.subr.mxu0 0.0
    %253 = vmatpush2.msra.mxu0 0.0
    %254 = vmatprep.subr.mxu0 0.0
    %255 = vmatpush2.msra.mxu0 0.0
    %256 = vmatprep.subr.mxu0 0.0
    %257 = vmatpush2.msra.mxu0 0.0
    %258 = vmatprep.subr.mxu0 0.0
    %259 = vmatpush2.msra.mxu0 0.0
    %260 = vmatprep.subr.mxu0 0.0
    %261 = vmatpush2.msra.mxu0 0.0
    %262 = vmatprep.subr.mxu0 0.0
    %263 = vmatpush2.msra.mxu0 0.0
    %264 = vmatprep.subr.mxu0 0.0
    %265 = vmatpush2.msra.mxu0 0.0
    %266 = vmatprep.subr.mxu0 0.0
    %267 = vmatpush2.msra.mxu0 0.0
    %268 = vmatprep.subr.mxu0 0.0
    %269 = vmatpush2.msra.mxu0 0.0
    %270 = vmatprep.subr.mxu0 0.0
    %271 = vmatpush2.msra.mxu0 0.0
    %272 = vmatprep.subr.mxu0 0.0
    %273 = vmatpush2.msra.mxu0 0.0
    %274 = vmatprep.subr.mxu0 0.0
    %275 = vmatpush2.msra.mxu0 0.0
    %276 = vmatprep.subr.mxu0 0.0
    %277 = vmatpush2.msra.mxu0 0.0
    %278 = vmatprep.subr.mxu0 0.0
    %279 = vmatpush2.msra.mxu0 0.0
    %280 = vmatprep.subr.mxu0 0.0
    %281 = vmatpush2.msra.mxu0 0.0
    %282 = vmatprep.subr.mxu0 0.0
    %283 = vmatpush2.msra.mxu0 0.0
    %284 = vmatprep.mubr.f32.mxu0 0.0
    %285 = vmatmul.mubr.f32.gmra.mxu0 %v215
    %v286 = vpop.f32.mrf.mxu0
    %v287 = vadd.f32 %v213, %v286
    %v288 = vpop.f32.mrf.mxu0
    %289 = vmatprep.mubr.f32.mxu0 0.0
    %290 = vmatmul.mubr.f32.gmra.mxu0 %v218
    %v291 = vpop.f32.mrf.mxu0
    %v292 = vadd.f32 %v213, %v291
    %v293 = vpop.f32.mrf.mxu0
    %294 = vdwg.mxu0
    %v295 = vld [vmem:[%s2 + $0x28] sm:$0x1]
    %v296 = vld [vmem:[%s2 + $0x30] sm:$0x1]
    %v297 = vsel %vm39, %v287, 0.0
    %298 = vadd.xlane.f32.xlu0 %v297
    %v299 = vpop.xlane.xlu0 %298
    %v300 = vsel %vm39, %v292, 0.0
    %301 = vadd.xlane.f32.xlu0 %v300
    %v302 = vpop.xlane.xlu0 %301
    %v303 = vrcp.pop 32.0
    %v304 = vmul.f32 %v299, %v303
    %v305 = vmul.f32 %v302, %v303
    %v306 = vsub.f32 %v287, %v304
    %v307 = vsub.f32 %v292, %v305
    %v308 = vmul.f32 %v306, %v306
    %v309 = vmul.f32 %v307, %v307
    %v310 = vsel %vm39, %v308, 0.0
    %311 = vadd.xlane.f32.xlu0 %v310
    %v312 = vpop.xlane.xlu0 %311
    %v313 = vsel %vm39, %v309, 0.0
    %314 = vadd.xlane.f32.xlu0 %v313
    %v315 = vpop.xlane.xlu0 %314
    %v316 = vmul.f32 %v312, %v303
    %v317 = vmul.f32 %v315, %v303
    %v318 = vadd.f32 %v316, 1e-05
    %v319 = vadd.f32 %v317, 1e-05
    %v320 = vrsqrt.pop %v318
    %v321 = vrsqrt.pop %v319
    %v322 = vmul.f32 %v306, %v320
    %v323 = vmul.f32 %v307, %v321
    %v324 = vlaneseq
    %v325 = vshrl.u32 %v324, 7
    %v326 = vsub.s32 0, %v325
    %v327 = vrot.slane %v295, %v326
    %v328 = vmul.f32 %v322, %v327
    %v329 = vmul.f32 %v323, %v327
    %v330 = vlaneseq
    %v331 = vshrl.u32 %v330, 7
    %v332 = vsub.s32 0, %v331
    %v333 = vrot.slane %v296, %v332
    %v334 = vadd.f32 %v328, %v333
    %v335 = vadd.f32 %v329, %v333
    %v337 = vsel %vm122, %v26, 0
    %v340 = vsel %vm122, %v27, 0
    %v343 = vsel %vm122, %v28, 0
    %345 = vmatprep.subr.mxu0 0.0
    %346 = vmatpush1.msra.mxu0 0.0
    %347 = vmatprep.subr.mxu0 0.0
    %348 = vmatpush1.msra.mxu0 0.0
    %349 = vmatprep.subr.mxu0 0.0
    %350 = vmatpush1.msra.mxu0 0.0
    %351 = vmatprep.subr.mxu0 0.0
    %352 = vmatpush1.msra.mxu0 0.0
    %353 = vmatprep.subr.mxu0 0.0
    %354 = vmatpush1.msra.mxu0 0.0
    %355 = vmatprep.subr.mxu0 0.0
    %356 = vmatpush1.msra.mxu0 0.0
    %357 = vmatprep.subr.mxu0 0.0
    %358 = vmatpush1.msra.mxu0 0.0
    %359 = vmatprep.subr.mxu0 0.0
    %360 = vmatpush1.msra.mxu0 0.0
    %361 = vmatprep.subr.mxu0 0.0
    %362 = vmatpush1.msra.mxu0 0.0
    %363 = vmatprep.subr.mxu0 0.0
    %364 = vmatpush1.msra.mxu0 0.0
    %365 = vmatprep.subr.mxu0 0.0
    %366 = vmatpush1.msra.mxu0 0.0
    %367 = vmatprep.subr.mxu0 0.0
    %368 = vmatpush1.msra.mxu0 0.0
    %369 = vmatprep.subr.mxu0 0.0
    %370 = vmatpush1.msra.mxu0 0.0
    %371 = vmatprep.subr.mxu0 0.0
    %372 = vmatpush1.msra.mxu0 0.0
    %373 = vmatprep.subr.mxu0 0.0
    %374 = vmatpush1.msra.mxu0 %v335
    %375 = vmatprep.subr.mxu0 0.0
    %376 = vmatpush1.msra.mxu0 %v334
    %377 = vmatprep.subr.mxu0 0.0
    %378 = vmatpush2.msra.mxu0 0.0
    %379 = vmatprep.subr.mxu0 0.0
    %380 = vmatpush2.msra.mxu0 0.0
    %381 = vmatprep.subr.mxu0 0.0
    %382 = vmatpush2.msra.mxu0 0.0
    %383 = vmatprep.subr.mxu0 0.0
    %384 = vmatpush2.msra.mxu0 0.0
    %385 = vmatprep.subr.mxu0 0.0
    %386 = vmatpush2.msra.mxu0 0.0
    %387 = vmatprep.subr.mxu0 0.0
    %388 = vmatpush2.msra.mxu0 0.0
    %389 = vmatprep.subr.mxu0 0.0
    %390 = vmatpush2.msra.mxu0 0.0
    %391 = vmatprep.subr.mxu0 0.0
    %392 = vmatpush2.msra.mxu0 0.0
    %393 = vmatprep.subr.mxu0 0.0
    %394 = vmatpush2.msra.mxu0 0.0
    %395 = vmatprep.subr.mxu0 0.0
    %396 = vmatpush2.msra.mxu0 0.0
    %397 = vmatprep.subr.mxu0 0.0
    %398 = vmatpush2.msra.mxu0 0.0
    %399 = vmatprep.subr.mxu0 0.0
    %400 = vmatpush2.msra.mxu0 0.0
    %401 = vmatprep.subr.mxu0 0.0
    %402 = vmatpush2.msra.mxu0 0.0
    %403 = vmatprep.subr.mxu0 0.0
    %404 = vmatpush2.msra.mxu0 0.0
    %405 = vmatprep.subr.mxu0 0.0
    %406 = vmatpush2.msra.mxu0 0.0
    %407 = vmatprep.subr.mxu0 0.0
    %408 = vmatpush2.msra.mxu0 0.0
    %409 = vmatprep.mubr.f32.mxu0 0.0
    %410 = vmatmul.mubr.f32.gmra.mxu0 %v337
    %v411 = vpop.f32.mrf.mxu0
    %v412 = vadd.f32 %v23, %v411
    %v413 = vpop.f32.mrf.mxu0
    %414 = vmatprep.mubr.f32.mxu0 0.0
    %415 = vmatmul.mubr.f32.gmra.mxu0 %v340
    %v416 = vpop.f32.mrf.mxu0
    %v417 = vadd.f32 %v24, %v416
    %v418 = vpop.f32.mrf.mxu0
    %419 = vmatprep.mubr.f32.mxu0 0.0
    %420 = vmatmul.mubr.f32.gmra.mxu0 %v343
    %v421 = vpop.f32.mrf.mxu0
    %v422 = vadd.f32 %v25, %v421
    %v423 = vpop.f32.mrf.mxu0
    %424 = vdwg.mxu0
    %v425 = vld [vmem:[%s2 + $0x38] sm:$0x1]
    %v426 = vld [vmem:[%s2 + $0x40] sm:$0x1]
    %v427 = vsel %vm39, %v412, 0.0
    %428 = vadd.xlane.f32.xlu0 %v427
    %v429 = vpop.xlane.xlu0 %428
    %v430 = vsel %vm39, %v417, 0.0
    %431 = vadd.xlane.f32.xlu0 %v430
    %v432 = vpop.xlane.xlu0 %431
    %vm433 = vcmask 257024
    %v434 = vsel %vm433, %v422, 0.0
    %435 = vadd.xlane.f32.xlu0 %v434
    %v436 = vpop.xlane.xlu0 %435
    %v437 = vmul.f32 %v429, %v303
    %v438 = vmul.f32 %v432, %v303
    %v439 = vmul.f32 %v436, %v303
    %v440 = vsub.f32 %v412, %v437
    %v441 = vsub.f32 %v417, %v438
    %v442 = vsub.f32 %v422, %v439
    %v443 = vmul.f32 %v440, %v440
    %v444 = vmul.f32 %v441, %v441
    %v445 = vmul.f32 %v442, %v442
    %v446 = vsel %vm39, %v443, 0.0
    %447 = vadd.xlane.f32.xlu0 %v446
    %v448 = vpop.xlane.xlu0 %447
    %v449 = vsel %vm39, %v444, 0.0
    %450 = vadd.xlane.f32.xlu0 %v449
    %v451 = vpop.xlane.xlu0 %450
    %v452 = vsel %vm433, %v445, 0.0
    %453 = vadd.xlane.f32.xlu0 %v452
    %v454 = vpop.xlane.xlu0 %453
    %v455 = vmul.f32 %v448, %v303
    %v456 = vmul.f32 %v451, %v303
    %v457 = vmul.f32 %v454, %v303
    %v458 = vadd.f32 %v455, 1e-12
    %v459 = vadd.f32 %v456, 1e-12
    %v460 = vadd.f32 %v457, 1e-12
    %v461 = vrsqrt.pop %v458
    %v462 = vrsqrt.pop %v459
    %v463 = vrsqrt.pop %v460
    %v464 = vmul.f32 %v440, %v461
    %v465 = vmul.f32 %v441, %v462
    %v466 = vmul.f32 %v442, %v463
    %v467 = vlaneseq
    %v468 = vshrl.u32 %v467, 7
    %v469 = vsub.s32 0, %v468
    %v470 = vrot.slane %v425, %v469
    %v471 = vmul.f32 %v464, %v470
    %v472 = vmul.f32 %v465, %v470
    %v473 = vmul.f32 %v466, %v470
    %v474 = vlaneseq
    %v475 = vshrl.u32 %v474, 7
    %v476 = vsub.s32 0, %v475
    %v477 = vrot.slane %v426, %v476
    %v478 = vadd.f32 %v471, %v477
    %v479 = vadd.f32 %v472, %v477
    %v480 = vadd.f32 %v473, %v477
    %v481 = vld [vmem:[%s3] sm:$0xff]
    %v482 = vld [vmem:[%s3 + $0x8] sm:$0xff]
    %v483 = vld [vmem:[%s3 + $0x10] sm:$0xff]
    %v484 = vld [vmem:[%s3 + $0x18] sm:$0xff]
    %v485 = vld [vmem:[%s3 + $0x20] sm:$0x1]
    %v486 = vlaneseq
    %v487 = vshrl.u32 %v486, 7
    %v488 = vsub.s32 0, %v487
    %v489 = vrot.slane %v485, %v488
    %v491 = vsel %vm39, %v478, 0
    %v494 = vsel %vm39, %v479, 0
    %v497 = vsel %vm39, %v480, 0
    %499 = vmatprep.subr.mxu0 0.0
    %500 = vmatpush1.msra.mxu0 0.0
    %501 = vmatprep.subr.mxu0 0.0
    %502 = vmatpush1.msra.mxu0 0.0
    %503 = vmatprep.subr.mxu0 0.0
    %504 = vmatpush1.msra.mxu0 0.0
    %505 = vmatprep.subr.mxu0 0.0
    %506 = vmatpush1.msra.mxu0 0.0
    %507 = vmatprep.subr.mxu0 0.0
    %508 = vmatpush1.msra.mxu0 0.0
    %509 = vmatprep.subr.mxu0 0.0
    %510 = vmatpush1.msra.mxu0 0.0
    %511 = vmatprep.subr.mxu0 0.0
    %512 = vmatpush1.msra.mxu0 0.0
    %513 = vmatprep.subr.mxu0 0.0
    %514 = vmatpush1.msra.mxu0 0.0
    %515 = vmatprep.subr.mxu0 0.0
    %516 = vmatpush1.msra.mxu0 0.0
    %517 = vmatprep.subr.mxu0 0.0
    %518 = vmatpush1.msra.mxu0 0.0
    %519 = vmatprep.subr.mxu0 0.0
    %520 = vmatpush1.msra.mxu0 0.0
    %521 = vmatprep.subr.mxu0 0.0
    %522 = vmatpush1.msra.mxu0 0.0
    %523 = vmatprep.subr.mxu0 0.0
    %524 = vmatpush1.msra.mxu0 %v484
    %525 = vmatprep.subr.mxu0 0.0
    %526 = vmatpush1.msra.mxu0 %v483
    %527 = vmatprep.subr.mxu0 0.0
    %528 = vmatpush1.msra.mxu0 %v482
    %529 = vmatprep.subr.mxu0 0.0
    %530 = vmatpush1.msra.mxu0 %v481
    %531 = vmatprep.subr.mxu0 0.0
    %532 = vmatpush2.msra.mxu0 0.0
    %533 = vmatprep.subr.mxu0 0.0
    %534 = vmatpush2.msra.mxu0 0.0
    %535 = vmatprep.subr.mxu0 0.0
    %536 = vmatpush2.msra.mxu0 0.0
    %537 = vmatprep.subr.mxu0 0.0
    %538 = vmatpush2.msra.mxu0 0.0
    %539 = vmatprep.subr.mxu0 0.0
    %540 = vmatpush2.msra.mxu0 0.0
    %541 = vmatprep.subr.mxu0 0.0
    %542 = vmatpush2.msra.mxu0 0.0
    %543 = vmatprep.subr.mxu0 0.0
    %544 = vmatpush2.msra.mxu0 0.0
    %545 = vmatprep.subr.mxu0 0.0
    %546 = vmatpush2.msra.mxu0 0.0
    %547 = vmatprep.subr.mxu0 0.0
    %548 = vmatpush2.msra.mxu0 0.0
    %549 = vmatprep.subr.mxu0 0.0
    %550 = vmatpush2.msra.mxu0 0.0
    %551 = vmatprep.subr.mxu0 0.0
    %552 = vmatpush2.msra.mxu0 0.0
    %553 = vmatprep.subr.mxu0 0.0
    %554 = vmatpush2.msra.mxu0 0.0
    %555 = vmatprep.subr.mxu0 0.0
    %556 = vmatpush2.msra.mxu0 0.0
    %557 = vmatprep.subr.mxu0 0.0
    %558 = vmatpush2.msra.mxu0 0.0
    %559 = vmatprep.subr.mxu0 0.0
    %560 = vmatpush2.msra.mxu0 0.0
    %561 = vmatprep.subr.mxu0 0.0
    %562 = vmatpush2.msra.mxu0 0.0
    %563 = vmatprep.mubr.f32.mxu0 0.0
    %564 = vmatmul.mubr.f32.gmra.mxu0 %v491
    %v565 = vpop.f32.mrf.mxu0
    %v566 = vadd.f32 %v489, %v565
    %v567 = vpop.f32.mrf.mxu0
    %568 = vmatprep.mubr.f32.mxu0 0.0
    %569 = vmatmul.mubr.f32.gmra.mxu0 %v494
    %v570 = vpop.f32.mrf.mxu0
    %v571 = vadd.f32 %v489, %v570
    %v572 = vpop.f32.mrf.mxu0
    %573 = vmatprep.mubr.f32.mxu0 0.0
    %574 = vmatmul.mubr.f32.gmra.mxu0 %v497
    %v575 = vpop.f32.mrf.mxu0
    %v576 = vadd.f32 %v489, %v575
    %v577 = vpop.f32.mrf.mxu0
    %578 = vdwg.mxu0
    %582 = vrot.lane.b32.xlu0 %v566, 96
    %v583 = vpop.permute.xlu0 %582
    %584 = vrot.lane.b32.xlu0 %v571, 96
    %v585 = vpop.permute.xlu0 %584
    %586 = vrot.lane.b32.xlu0 %v576, 96
    %v587 = vpop.permute.xlu0 %586
    %vm588 = vcmask 64512
    %v589 = vsel %vm588, %v566, 0
    %v591 = vsel %vm588, %v571, 0
    %v593 = vsel %vm588, %v576, 0
    %v595 = vsel %vm588, %v583, 0
    %v597 = vsel %vm588, %v585, 0
    %v599 = vsel %vm588, %v587, 0
    %601 = vmatprep.subr.mxu0 0.0
    %602 = vmatpush1.xpose.msra.mxu0 0.0
    %603 = vmatprep.subr.mxu0 0.0
    %604 = vmatpush1.xpose.msra.mxu0 0.0
    %605 = vmatprep.subr.mxu0 0.0
    %606 = vmatpush1.xpose.msra.mxu0 0.0
    %607 = vmatprep.subr.mxu0 0.0
    %608 = vmatpush1.xpose.msra.mxu0 0.0
    %609 = vmatprep.subr.mxu0 0.0
    %610 = vmatpush1.xpose.msra.mxu0 0.0
    %611 = vmatprep.subr.mxu0 0.0
    %612 = vmatpush1.xpose.msra.mxu0 0.0
    %613 = vmatprep.subr.mxu0 0.0
    %614 = vmatpush1.xpose.msra.mxu0 0.0
    %615 = vmatprep.subr.mxu0 0.0
    %616 = vmatpush1.xpose.msra.mxu0 0.0
    %617 = vmatprep.subr.mxu0 0.0
    %618 = vmatpush1.xpose.msra.mxu0 0.0
    %619 = vmatprep.subr.mxu0 0.0
    %620 = vmatpush1.xpose.msra.mxu0 0.0
    %621 = vmatprep.subr.mxu0 0.0
    %622 = vmatpush1.xpose.msra.mxu0 0.0
    %623 = vmatprep.subr.mxu0 0.0
    %624 = vmatpush1.xpose.msra.mxu0 0.0
    %625 = vmatprep.subr.mxu0 0.0
    %626 = vmatpush1.xpose.msra.mxu0 0.0
    %627 = vmatprep.subr.mxu0 0.0
    %628 = vmatpush1.xpose.msra.mxu0 %v599
    %629 = vmatprep.subr.mxu0 0.0
    %630 = vmatpush1.xpose.msra.mxu0 %v597
    %631 = vmatprep.subr.mxu0 0.0
    %632 = vmatpush1.xpose.msra.mxu0 %v595
    %633 = vmatprep.subr.mxu0 0.0
    %634 = vmatpush2.xpose.msra.mxu0 0.0
    %635 = vmatprep.subr.mxu0 0.0
    %636 = vmatpush2.xpose.msra.mxu0 0.0
    %637 = vmatprep.subr.mxu0 0.0
    %638 = vmatpush2.xpose.msra.mxu0 0.0
    %639 = vmatprep.subr.mxu0 0.0
    %640 = vmatpush2.xpose.msra.mxu0 0.0
    %641 = vmatprep.subr.mxu0 0.0
    %642 = vmatpush2.xpose.msra.mxu0 0.0
    %643 = vmatprep.subr.mxu0 0.0
    %644 = vmatpush2.xpose.msra.mxu0 0.0
    %645 = vmatprep.subr.mxu0 0.0
    %646 = vmatpush2.xpose.msra.mxu0 0.0
    %647 = vmatprep.subr.mxu0 0.0
    %648 = vmatpush2.xpose.msra.mxu0 0.0
    %649 = vmatprep.subr.mxu0 0.0
    %650 = vmatpush2.xpose.msra.mxu0 0.0
    %651 = vmatprep.subr.mxu0 0.0
    %652 = vmatpush2.xpose.msra.mxu0 0.0
    %653 = vmatprep.subr.mxu0 0.0
    %654 = vmatpush2.xpose.msra.mxu0 0.0
    %655 = vmatprep.subr.mxu0 0.0
    %656 = vmatpush2.xpose.msra.mxu0 0.0
    %657 = vmatprep.subr.mxu0 0.0
    %658 = vmatpush2.xpose.msra.mxu0 0.0
    %659 = vmatprep.subr.mxu0 0.0
    %660 = vmatpush2.xpose.msra.mxu0 0.0
    %661 = vmatprep.subr.mxu0 0.0
    %662 = vmatpush2.xpose.msra.mxu0 0.0
    %663 = vmatprep.subr.mxu0 0.0
    %664 = vmatpush2.xpose.msra.mxu0 0.0
    %665 = vmatprep.mubr.f32.mxu0 0.0
    %666 = vmatmul.mubr.f32.gmra.mxu0 %v589
    %v667 = vpop.f32.mrf.mxu0
    %v668 = vadd.f32 %v202, %v667
    %v669 = vpop.f32.mrf.mxu0
    %670 = vmatprep.mubr.f32.mxu0 0.0
    %671 = vmatmul.mubr.f32.gmra.mxu0 %v591
    %v672 = vpop.f32.mrf.mxu0
    %v673 = vadd.f32 %v203, %v672
    %v674 = vpop.f32.mrf.mxu0
    %675 = vmatprep.mubr.f32.mxu0 0.0
    %676 = vmatmul.mubr.f32.gmra.mxu0 %v593
    %v677 = vpop.f32.mrf.mxu0
    %v678 = vadd.f32 %v204, %v677
    %v679 = vpop.f32.mrf.mxu0
    %680 = vdwg.mxu0
    %vm681 = vcmask 162816
    %v682 = vsel %vm681, %v668, -inf
    %683 = vmax.xlane.f32.xlu0 %v682
    %v684 = vpop.xlane.xlu0 %683
    %v685 = vsel %vm681, %v673, -inf
    %686 = vmax.xlane.f32.xlu0 %v685
    %v687 = vpop.xlane.xlu0 %686
    %vm688 = vcmask 158720
    %v689 = vsel %vm688, %v678, -inf
    %690 = vmax.xlane.f32.xlu0 %v689
    %v691 = vpop.xlane.xlu0 %690
    %v692 = vsub.f32 %v668, %v684
    %v693 = vsub.f32 %v673, %v687
    %v694 = vsub.f32 %v678, %v691
    %v695 = vmul.f32 %v692, 1.442695
    %v696 = vpow.pop %v695
    %v697 = vmul.f32 %v693, 1.442695
    %v698 = vpow.pop %v697
    %v699 = vmul.f32 %v694, 1.442695
    %v700 = vpow.pop %v699
    %v701 = vsel %vm681, %v696, 0.0
    %702 = vadd.xlane.f32.xlu0 %v701
    %v703 = vpop.xlane.xlu0 %702
    %v704 = vsel %vm681, %v698, 0.0
    %705 = vadd.xlane.f32.xlu0 %v704
    %v706 = vpop.xlane.xlu0 %705
    %v707 = vsel %vm688, %v700, 0.0
    %708 = vadd.xlane.f32.xlu0 %v707
    %v709 = vpop.xlane.xlu0 %708
    %v710 = vrcp.pop %v703
    %v711 = vmul.f32 %v696, %v710
    %v712 = vrcp.pop %v706
    %v713 = vmul.f32 %v698, %v712
    %v714 = vrcp.pop %v709
    %v715 = vmul.f32 %v700, %v714
    %716 = vrot.lane.b32.xlu0 %v566, 64
    %v717 = vpop.permute.xlu0 %716
    %718 = vrot.lane.b32.xlu0 %v571, 64
    %v719 = vpop.permute.xlu0 %718
    %720 = vrot.lane.b32.xlu0 %v576, 64
    %v721 = vpop.permute.xlu0 %720
    %v725 = vsel %vm681, %v711, 0
    %v728 = vsel %vm681, %v713, 0
    %v731 = vsel %vm681, %v715, 0
    %vm733 = vcmask 1043456
    %v734 = vsel %vm733, %v721, 0
    %736 = vmatprep.subr.mxu0 0.0
    %737 = vmatpush1.msra.mxu0 0.0
    %738 = vmatprep.subr.mxu0 0.0
    %739 = vmatpush1.msra.mxu0 0.0
    %740 = vmatprep.subr.mxu0 0.0
    %741 = vmatpush1.msra.mxu0 0.0
    %742 = vmatprep.subr.mxu0 0.0
    %743 = vmatpush1.msra.mxu0 0.0
    %744 = vmatprep.subr.mxu0 0.0
    %745 = vmatpush1.msra.mxu0 0.0
    %746 = vmatprep.subr.mxu0 0.0
    %747 = vmatpush1.msra.mxu0 0.0
    %748 = vmatprep.subr.mxu0 0.0
    %749 = vmatpush1.msra.mxu0 0.0
    %750 = vmatprep.subr.mxu0 0.0
    %751 = vmatpush1.msra.mxu0 0.0
    %752 = vmatprep.subr.mxu0 0.0
    %753 = vmatpush1.msra.mxu0 0.0
    %754 = vmatprep.subr.mxu0 0.0
    %755 = vmatpush1.msra.mxu0 0.0
    %756 = vmatprep.subr.mxu0 0.0
    %757 = vmatpush1.msra.mxu0 0.0
    %758 = vmatprep.subr.mxu0 0.0
    %759 = vmatpush1.msra.mxu0 0.0
    %760 = vmatprep.subr.mxu0 0.0
    %761 = vmatpush1.msra.mxu0 0.0
    %762 = vmatprep.subr.mxu0 0.0
    %763 = vmatpush1.msra.mxu0 %v734
    %764 = vmatprep.subr.mxu0 0.0
    %765 = vmatpush1.msra.mxu0 %v719
    %766 = vmatprep.subr.mxu0 0.0
    %767 = vmatpush1.msra.mxu0 %v717
    %768 = vmatprep.subr.mxu0 0.0
    %769 = vmatpush2.msra.mxu0 0.0
    %770 = vmatprep.subr.mxu0 0.0
    %771 = vmatpush2.msra.mxu0 0.0
    %772 = vmatprep.subr.mxu0 0.0
    %773 = vmatpush2.msra.mxu0 0.0
    %774 = vmatprep.subr.mxu0 0.0
    %775 = vmatpush2.msra.mxu0 0.0
    %776 = vmatprep.subr.mxu0 0.0
    %777 = vmatpush2.msra.mxu0 0.0
    %778 = vmatprep.subr.mxu0 0.0
    %779 = vmatpush2.msra.mxu0 0.0
    %780 = vmatprep.subr.mxu0 0.0
    %781 = vmatpush2.msra.mxu0 0.0
    %782 = vmatprep.subr.mxu0 0.0
    %783 = vmatpush2.msra.mxu0 0.0
    %784 = vmatprep.subr.mxu0 0.0
    %785 = vmatpush2.msra.mxu0 0.0
    %786 = vmatprep.subr.mxu0 0.0
    %787 = vmatpush2.msra.mxu0 0.0
    %788 = vmatprep.subr.mxu0 0.0
    %789 = vmatpush2.msra.mxu0 0.0
    %790 = vmatprep.subr.mxu0 0.0
    %791 = vmatpush2.msra.mxu0 0.0
    %792 = vmatprep.subr.mxu0 0.0
    %793 = vmatpush2.msra.mxu0 0.0
    %794 = vmatprep.subr.mxu0 0.0
    %795 = vmatpush2.msra.mxu0 0.0
    %796 = vmatprep.subr.mxu0 0.0
    %797 = vmatpush2.msra.mxu0 0.0
    %798 = vmatprep.subr.mxu0 0.0
    %799 = vmatpush2.msra.mxu0 0.0
    %800 = vmatprep.mubr.f32.mxu0 0.0
    %801 = vmatmul.mubr.f32.gmra.mxu0 %v725
    %v802 = vpop.f32.mrf.mxu0
    %v803 = vadd.f32 0.0, %v802
    %v804 = vpop.f32.mrf.mxu0
    %805 = vmatprep.mubr.f32.mxu0 0.0
    %806 = vmatmul.mubr.f32.gmra.mxu0 %v728
    %v807 = vpop.f32.mrf.mxu0
    %v808 = vadd.f32 0.0, %v807
    %v809 = vpop.f32.mrf.mxu0
    %810 = vmatprep.mubr.f32.mxu0 0.0
    %811 = vmatmul.mubr.f32.gmra.mxu0 %v731
    %v812 = vpop.f32.mrf.mxu0
    %v813 = vadd.f32 0.0, %v812
    %v814 = vpop.f32.mrf.mxu0
    %815 = vdwg.mxu0
    %816 = vrot.lane.b32.xlu0 %v566, 120
    %v817 = vpop.permute.xlu0 %816
    %818 = vrot.lane.b32.xlu0 %v571, 120
    %v819 = vpop.permute.xlu0 %818
    %820 = vrot.lane.b32.xlu0 %v576, 120
    %v821 = vpop.permute.xlu0 %820
    %822 = vrot.lane.b32.xlu0 %v566, 88
    %v823 = vpop.permute.xlu0 %822
    %824 = vrot.lane.b32.xlu0 %v571, 88
    %v825 = vpop.permute.xlu0 %824
    %826 = vrot.lane.b32.xlu0 %v576, 88
    %v827 = vpop.permute.xlu0 %826
    %v828 = vsel %vm588, %v817, 0
    %v830 = vsel %vm588, %v819, 0
    %v832 = vsel %vm588, %v821, 0
    %v834 = vsel %vm588, %v823, 0
    %v836 = vsel %vm588, %v825, 0
    %v838 = vsel %vm588, %v827, 0
    %840 = vmatprep.subr.mxu0 0.0
    %841 = vmatpush1.xpose.msra.mxu0 0.0
    %842 = vmatprep.subr.mxu0 0.0
    %843 = vmatpush1.xpose.msra.mxu0 0.0
    %844 = vmatprep.subr.mxu0 0.0
    %845 = vmatpush1.xpose.msra.mxu0 0.0
    %846 = vmatprep.subr.mxu0 0.0
    %847 = vmatpush1.xpose.msra.mxu0 0.0
    %848 = vmatprep.subr.mxu0 0.0
    %849 = vmatpush1.xpose.msra.mxu0 0.0
    %850 = vmatprep.subr.mxu0 0.0
    %851 = vmatpush1.xpose.msra.mxu0 0.0
    %852 = vmatprep.subr.mxu0 0.0
    %853 = vmatpush1.xpose.msra.mxu0 0.0
    %854 = vmatprep.subr.mxu0 0.0
    %855 = vmatpush1.xpose.msra.mxu0 0.0
    %856 = vmatprep.subr.mxu0 0.0
    %857 = vmatpush1.xpose.msra.mxu0 0.0
    %858 = vmatprep.subr.mxu0 0.0
    %859 = vmatpush1.xpose.msra.mxu0 0.0
    %860 = vmatprep.subr.mxu0 0.0
    %861 = vmatpush1.xpose.msra.mxu0 0.0
    %862 = vmatprep.subr.mxu0 0.0
    %863 = vmatpush1.xpose.msra.mxu0 0.0
    %864 = vmatprep.subr.mxu0 0.0
    %865 = vmatpush1.xpose.msra.mxu0 0.0
    %866 = vmatprep.subr.mxu0 0.0
    %867 = vmatpush1.xpose.msra.mxu0 %v838
    %868 = vmatprep.subr.mxu0 0.0
    %869 = vmatpush1.xpose.msra.mxu0 %v836
    %870 = vmatprep.subr.mxu0 0.0
    %871 = vmatpush1.xpose.msra.mxu0 %v834
    %872 = vmatprep.subr.mxu0 0.0
    %873 = vmatpush2.xpose.msra.mxu0 0.0
    %874 = vmatprep.subr.mxu0 0.0
    %875 = vmatpush2.xpose.msra.mxu0 0.0
    %876 = vmatprep.subr.mxu0 0.0
    %877 = vmatpush2.xpose.msra.mxu0 0.0
    %878 = vmatprep.subr.mxu0 0.0
    %879 = vmatpush2.xpose.msra.mxu0 0.0
    %880 = vmatprep.subr.mxu0 0.0
    %881 = vmatpush2.xpose.msra.mxu0 0.0
    %882 = vmatprep.subr.mxu0 0.0
    %883 = vmatpush2.xpose.msra.mxu0 0.0
    %884 = vmatprep.subr.mxu0 0.0
    %885 = vmatpush2.xpose.msra.mxu0 0.0
    %886 = vmatprep.subr.mxu0 0.0
    %887 = vmatpush2.xpose.msra.mxu0 0.0
    %888 = vmatprep.subr.mxu0 0.0
    %889 = vmatpush2.xpose.msra.mxu0 0.0
    %890 = vmatprep.subr.mxu0 0.0
    %891 = vmatpush2.xpose.msra.mxu0 0.0
    %892 = vmatprep.subr.mxu0 0.0
    %893 = vmatpush2.xpose.msra.mxu0 0.0
    %894 = vmatprep.subr.mxu0 0.0
    %895 = vmatpush2.xpose.msra.mxu0 0.0
    %896 = vmatprep.subr.mxu0 0.0
    %897 = vmatpush2.xpose.msra.mxu0 0.0
    %898 = vmatprep.subr.mxu0 0.0
    %899 = vmatpush2.xpose.msra.mxu0 0.0
    %900 = vmatprep.subr.mxu0 0.0
    %901 = vmatpush2.xpose.msra.mxu0 0.0
    %902 = vmatprep.subr.mxu0 0.0
    %903 = vmatpush2.xpose.msra.mxu0 0.0
    %904 = vmatprep.mubr.f32.mxu0 0.0
    %905 = vmatmul.mubr.f32.gmra.mxu0 %v828
    %v906 = vpop.f32.mrf.mxu0
    %v907 = vadd.f32 %v202, %v906
    %v908 = vpop.f32.mrf.mxu0
    %909 = vmatprep.mubr.f32.mxu0 0.0
    %910 = vmatmul.mubr.f32.gmra.mxu0 %v830
    %v911 = vpop.f32.mrf.mxu0
    %v912 = vadd.f32 %v203, %v911
    %v913 = vpop.f32.mrf.mxu0
    %914 = vmatprep.mubr.f32.mxu0 0.0
    %915 = vmatmul.mubr.f32.gmra.mxu0 %v832
    %v916 = vpop.f32.mrf.mxu0
    %v917 = vadd.f32 %v204, %v916
    %v918 = vpop.f32.mrf.mxu0
    %919 = vdwg.mxu0
    %v920 = vsel %vm681, %v907, -inf
    %921 = vmax.xlane.f32.xlu0 %v920
    %v922 = vpop.xlane.xlu0 %921
    %v923 = vsel %vm681, %v912, -inf
    %924 = vmax.xlane.f32.xlu0 %v923
    %v925 = vpop.xlane.xlu0 %924
    %v926 = vsel %vm688, %v917, -inf
    %927 = vmax.xlane.f32.xlu0 %v926
    %v928 = vpop.xlane.xlu0 %927
    %v929 = vsub.f32 %v907, %v922
    %v930 = vsub.f32 %v912, %v925
    %v931 = vsub.f32 %v917, %v928
    %v932 = vmul.f32 %v929, 1.442695
    %v933 = vpow.pop %v932
    %v934 = vmul.f32 %v930, 1.442695
    %v935 = vpow.pop %v934
    %v936 = vmul.f32 %v931, 1.442695
    %v937 = vpow.pop %v936
    %v938 = vsel %vm681, %v933, 0.0
    %939 = vadd.xlane.f32.xlu0 %v938
    %v940 = vpop.xlane.xlu0 %939
    %v941 = vsel %vm681, %v935, 0.0
    %942 = vadd.xlane.f32.xlu0 %v941
    %v943 = vpop.xlane.xlu0 %942
    %v944 = vsel %vm688, %v937, 0.0
    %945 = vadd.xlane.f32.xlu0 %v944
    %v946 = vpop.xlane.xlu0 %945
    %v947 = vrcp.pop %v940
    %v948 = vmul.f32 %v933, %v947
    %v949 = vrcp.pop %v943
    %v950 = vmul.f32 %v935, %v949
    %v951 = vrcp.pop %v946
    %v952 = vmul.f32 %v937, %v951
    %953 = vrot.lane.b32.xlu0 %v566, 56
    %v954 = vpop.permute.xlu0 %953
    %955 = vrot.lane.b32.xlu0 %v571, 56
    %v956 = vpop.permute.xlu0 %955
    %957 = vrot.lane.b32.xlu0 %v576, 56
    %v958 = vpop.permute.xlu0 %957
    %v962 = vsel %vm681, %v948, 0
    %v965 = vsel %vm681, %v950, 0
    %v968 = vsel %vm681, %v952, 0
    %v970 = vsel %vm733, %v958, 0
    %972 = vmatprep.subr.mxu0 0.0
    %973 = vmatpush1.msra.mxu0 0.0
    %974 = vmatprep.subr.mxu0 0.0
    %975 = vmatpush1.msra.mxu0 0.0
    %976 = vmatprep.subr.mxu0 0.0
    %977 = vmatpush1.msra.mxu0 0.0
    %978 = vmatprep.subr.mxu0 0.0
    %979 = vmatpush1.msra.mxu0 0.0
    %980 = vmatprep.subr.mxu0 0.0
    %981 = vmatpush1.msra.mxu0 0.0
    %982 = vmatprep.subr.mxu0 0.0
    %983 = vmatpush1.msra.mxu0 0.0
    %984 = vmatprep.subr.mxu0 0.0
    %985 = vmatpush1.msra.mxu0 0.0
    %986 = vmatprep.subr.mxu0 0.0
    %987 = vmatpush1.msra.mxu0 0.0
    %988 = vmatprep.subr.mxu0 0.0
    %989 = vmatpush1.msra.mxu0 0.0
    %990 = vmatprep.subr.mxu0 0.0
    %991 = vmatpush1.msra.mxu0 0.0
    %992 = vmatprep.subr.mxu0 0.0
    %993 = vmatpush1.msra.mxu0 0.0
    %994 = vmatprep.subr.mxu0 0.0
    %995 = vmatpush1.msra.mxu0 0.0
    %996 = vmatprep.subr.mxu0 0.0
    %997 = vmatpush1.msra.mxu0 0.0
    %998 = vmatprep.subr.mxu0 0.0
    %999 = vmatpush1.msra.mxu0 %v970
    %1000 = vmatprep.subr.mxu0 0.0
    %1001 = vmatpush1.msra.mxu0 %v956
    %1002 = vmatprep.subr.mxu0 0.0
    %1003 = vmatpush1.msra.mxu0 %v954
    %1004 = vmatprep.subr.mxu0 0.0
    %1005 = vmatpush2.msra.mxu0 0.0
    %1006 = vmatprep.subr.mxu0 0.0
    %1007 = vmatpush2.msra.mxu0 0.0
    %1008 = vmatprep.subr.mxu0 0.0
    %1009 = vmatpush2.msra.mxu0 0.0
    %1010 = vmatprep.subr.mxu0 0.0
    %1011 = vmatpush2.msra.mxu0 0.0
    %1012 = vmatprep.subr.mxu0 0.0
    %1013 = vmatpush2.msra.mxu0 0.0
    %1014 = vmatprep.subr.mxu0 0.0
    %1015 = vmatpush2.msra.mxu0 0.0
    %1016 = vmatprep.subr.mxu0 0.0
    %1017 = vmatpush2.msra.mxu0 0.0
    %1018 = vmatprep.subr.mxu0 0.0
    %1019 = vmatpush2.msra.mxu0 0.0
    %1020 = vmatprep.subr.mxu0 0.0
    %1021 = vmatpush2.msra.mxu0 0.0
    %1022 = vmatprep.subr.mxu0 0.0
    %1023 = vmatpush2.msra.mxu0 0.0
    %1024 = vmatprep.subr.mxu0 0.0
    %1025 = vmatpush2.msra.mxu0 0.0
    %1026 = vmatprep.subr.mxu0 0.0
    %1027 = vmatpush2.msra.mxu0 0.0
    %1028 = vmatprep.subr.mxu0 0.0
    %1029 = vmatpush2.msra.mxu0 0.0
    %1030 = vmatprep.subr.mxu0 0.0
    %1031 = vmatpush2.msra.mxu0 0.0
    %1032 = vmatprep.subr.mxu0 0.0
    %1033 = vmatpush2.msra.mxu0 0.0
    %1034 = vmatprep.subr.mxu0 0.0
    %1035 = vmatpush2.msra.mxu0 0.0
    %1036 = vmatprep.mubr.f32.mxu0 0.0
    %1037 = vmatmul.mubr.f32.gmra.mxu0 %v962
    %v1038 = vpop.f32.mrf.mxu0
    %v1039 = vadd.f32 0.0, %v1038
    %v1040 = vpop.f32.mrf.mxu0
    %1041 = vmatprep.mubr.f32.mxu0 0.0
    %1042 = vmatmul.mubr.f32.gmra.mxu0 %v965
    %v1043 = vpop.f32.mrf.mxu0
    %v1044 = vadd.f32 0.0, %v1043
    %v1045 = vpop.f32.mrf.mxu0
    %1046 = vmatprep.mubr.f32.mxu0 0.0
    %1047 = vmatmul.mubr.f32.gmra.mxu0 %v968
    %v1048 = vpop.f32.mrf.mxu0
    %v1049 = vadd.f32 0.0, %v1048
    %v1050 = vpop.f32.mrf.mxu0
    %1051 = vdwg.mxu0
    %1052 = vrot.lane.b32.xlu0 %v566, 112
    %v1053 = vpop.permute.xlu0 %1052
    %1054 = vrot.lane.b32.xlu0 %v571, 112
    %v1055 = vpop.permute.xlu0 %1054
    %1056 = vrot.lane.b32.xlu0 %v576, 112
    %v1057 = vpop.permute.xlu0 %1056
    %1058 = vrot.lane.b32.xlu0 %v566, 80
    %v1059 = vpop.permute.xlu0 %1058
    %1060 = vrot.lane.b32.xlu0 %v571, 80
    %v1061 = vpop.permute.xlu0 %1060
    %1062 = vrot.lane.b32.xlu0 %v576, 80
    %v1063 = vpop.permute.xlu0 %1062
    %v1064 = vsel %vm588, %v1053, 0
    %v1066 = vsel %vm588, %v1055, 0
    %v1068 = vsel %vm588, %v1057, 0
    %v1070 = vsel %vm588, %v1059, 0
    %v1072 = vsel %vm588, %v1061, 0
    %v1074 = vsel %vm588, %v1063, 0
    %1076 = vmatprep.subr.mxu0 0.0
    %1077 = vmatpush1.xpose.msra.mxu0 0.0
    %1078 = vmatprep.subr.mxu0 0.0
    %1079 = vmatpush1.xpose.msra.mxu0 0.0
    %1080 = vmatprep.subr.mxu0 0.0
    %1081 = vmatpush1.xpose.msra.mxu0 0.0
    %1082 = vmatprep.subr.mxu0 0.0
    %1083 = vmatpush1.xpose.msra.mxu0 0.0
    %1084 = vmatprep.subr.mxu0 0.0
    %1085 = vmatpush1.xpose.msra.mxu0 0.0
    %1086 = vmatprep.subr.mxu0 0.0
    %1087 = vmatpush1.xpose.msra.mxu0 0.0
    %1088 = vmatprep.subr.mxu0 0.0
    %1089 = vmatpush1.xpose.msra.mxu0 0.0
    %1090 = vmatprep.subr.mxu0 0.0
    %1091 = vmatpush1.xpose.msra.mxu0 0.0
    %1092 = vmatprep.subr.mxu0 0.0
    %1093 = vmatpush1.xpose.msra.mxu0 0.0
    %1094 = vmatprep.subr.mxu0 0.0
    %1095 = vmatpush1.xpose.msra.mxu0 0.0
    %1096 = vmatprep.subr.mxu0 0.0
    %1097 = vmatpush1.xpose.msra.mxu0 0.0
    %1098 = vmatprep.subr.mxu0 0.0
    %1099 = vmatpush1.xpose.msra.mxu0 0.0
    %1100 = vmatprep.subr.mxu0 0.0
    %1101 = vmatpush1.xpose.msra.mxu0 0.0
    %1102 = vmatprep.subr.mxu0 0.0
    %1103 = vmatpush1.xpose.msra.mxu0 %v1074
    %1104 = vmatprep.subr.mxu0 0.0
    %1105 = vmatpush1.xpose.msra.mxu0 %v1072
    %1106 = vmatprep.subr.mxu0 0.0
    %1107 = vmatpush1.xpose.msra.mxu0 %v1070
    %1108 = vmatprep.subr.mxu0 0.0
    %1109 = vmatpush2.xpose.msra.mxu0 0.0
    %1110 = vmatprep.subr.mxu0 0.0
    %1111 = vmatpush2.xpose.msra.mxu0 0.0
    %1112 = vmatprep.subr.mxu0 0.0
    %1113 = vmatpush2.xpose.msra.mxu0 0.0
    %1114 = vmatprep.subr.mxu0 0.0
    %1115 = vmatpush2.xpose.msra.mxu0 0.0
    %1116 = vmatprep.subr.mxu0 0.0
    %1117 = vmatpush2.xpose.msra.mxu0 0.0
    %1118 = vmatprep.subr.mxu0 0.0
    %1119 = vmatpush2.xpose.msra.mxu0 0.0
    %1120 = vmatprep.subr.mxu0 0.0
    %1121 = vmatpush2.xpose.msra.mxu0 0.0
    %1122 = vmatprep.subr.mxu0 0.0
    %1123 = vmatpush2.xpose.msra.mxu0 0.0
    %1124 = vmatprep.subr.mxu0 0.0
    %1125 = vmatpush2.xpose.msra.mxu0 0.0
    %1126 = vmatprep.subr.mxu0 0.0
    %1127 = vmatpush2.xpose.msra.mxu0 0.0
    %1128 = vmatprep.subr.mxu0 0.0
    %1129 = vmatpush2.xpose.msra.mxu0 0.0
    %1130 = vmatprep.subr.mxu0 0.0
    %1131 = vmatpush2.xpose.msra.mxu0 0.0
    %1132 = vmatprep.subr.mxu0 0.0
    %1133 = vmatpush2.xpose.msra.mxu0 0.0
    %1134 = vmatprep.subr.mxu0 0.0
    %1135 = vmatpush2.xpose.msra.mxu0 0.0
    %1136 = vmatprep.subr.mxu0 0.0
    %1137 = vmatpush2.xpose.msra.mxu0 0.0
    %1138 = vmatprep.subr.mxu0 0.0
    %1139 = vmatpush2.xpose.msra.mxu0 0.0
    %1140 = vmatprep.mubr.f32.mxu0 0.0
    %1141 = vmatmul.mubr.f32.gmra.mxu0 %v1064
    %v1142 = vpop.f32.mrf.mxu0
    %v1143 = vadd.f32 %v202, %v1142
    %v1144 = vpop.f32.mrf.mxu0
    %1145 = vmatprep.mubr.f32.mxu0 0.0
    %1146 = vmatmul.mubr.f32.gmra.mxu0 %v1066
    %v1147 = vpop.f32.mrf.mxu0
    %v1148 = vadd.f32 %v203, %v1147
    %v1149 = vpop.f32.mrf.mxu0
    %1150 = vmatprep.mubr.f32.mxu0 0.0
    %1151 = vmatmul.mubr.f32.gmra.mxu0 %v1068
    %v1152 = vpop.f32.mrf.mxu0
    %v1153 = vadd.f32 %v204, %v1152
    %v1154 = vpop.f32.mrf.mxu0
    %1155 = vdwg.mxu0
    %v1156 = vsel %vm681, %v1143, -inf
    %1157 = vmax.xlane.f32.xlu0 %v1156
    %v1158 = vpop.xlane.xlu0 %1157
    %v1159 = vsel %vm681, %v1148, -inf
    %1160 = vmax.xlane.f32.xlu0 %v1159
    %v1161 = vpop.xlane.xlu0 %1160
    %v1162 = vsel %vm688, %v1153, -inf
    %1163 = vmax.xlane.f32.xlu0 %v1162
    %v1164 = vpop.xlane.xlu0 %1163
    %v1165 = vsub.f32 %v1143, %v1158
    %v1166 = vsub.f32 %v1148, %v1161
    %v1167 = vsub.f32 %v1153, %v1164
    %v1168 = vmul.f32 %v1165, 1.442695
    %v1169 = vpow.pop %v1168
    %v1170 = vmul.f32 %v1166, 1.442695
    %v1171 = vpow.pop %v1170
    %v1172 = vmul.f32 %v1167, 1.442695
    %v1173 = vpow.pop %v1172
    %v1174 = vsel %vm681, %v1169, 0.0
    %1175 = vadd.xlane.f32.xlu0 %v1174
    %v1176 = vpop.xlane.xlu0 %1175
    %v1177 = vsel %vm681, %v1171, 0.0
    %1178 = vadd.xlane.f32.xlu0 %v1177
    %v1179 = vpop.xlane.xlu0 %1178
    %v1180 = vsel %vm688, %v1173, 0.0
    %1181 = vadd.xlane.f32.xlu0 %v1180
    %v1182 = vpop.xlane.xlu0 %1181
    %v1183 = vrcp.pop %v1176
    %v1184 = vmul.f32 %v1169, %v1183
    %v1185 = vrcp.pop %v1179
    %v1186 = vmul.f32 %v1171, %v1185
    %v1187 = vrcp.pop %v1182
    %v1188 = vmul.f32 %v1173, %v1187
    %1189 = vrot.lane.b32.xlu0 %v566, 48
    %v1190 = vpop.permute.xlu0 %1189
    %1191 = vrot.lane.b32.xlu0 %v571, 48
    %v1192 = vpop.permute.xlu0 %1191
    %1193 = vrot.lane.b32.xlu0 %v576, 48
    %v1194 = vpop.permute.xlu0 %1193
    %v1198 = vsel %vm681, %v1184, 0
    %v1201 = vsel %vm681, %v1186, 0
    %v1204 = vsel %vm681, %v1188, 0
    %v1206 = vsel %vm733, %v1194, 0
    %1208 = vmatprep.subr.mxu0 0.0
    %1209 = vmatpush1.msra.mxu0 0.0
    %1210 = vmatprep.subr.mxu0 0.0
    %1211 = vmatpush1.msra.mxu0 0.0
    %1212 = vmatprep.subr.mxu0 0.0
    %1213 = vmatpush1.msra.mxu0 0.0
    %1214 = vmatprep.subr.mxu0 0.0
    %1215 = vmatpush1.msra.mxu0 0.0
    %1216 = vmatprep.subr.mxu0 0.0
    %1217 = vmatpush1.msra.mxu0 0.0
    %1218 = vmatprep.subr.mxu0 0.0
    %1219 = vmatpush1.msra.mxu0 0.0
    %1220 = vmatprep.subr.mxu0 0.0
    %1221 = vmatpush1.msra.mxu0 0.0
    %1222 = vmatprep.subr.mxu0 0.0
    %1223 = vmatpush1.msra.mxu0 0.0
    %1224 = vmatprep.subr.mxu0 0.0
    %1225 = vmatpush1.msra.mxu0 0.0
    %1226 = vmatprep.subr.mxu0 0.0
    %1227 = vmatpush1.msra.mxu0 0.0
    %1228 = vmatprep.subr.mxu0 0.0
    %1229 = vmatpush1.msra.mxu0 0.0
    %1230 = vmatprep.subr.mxu0 0.0
    %1231 = vmatpush1.msra.mxu0 0.0
    %1232 = vmatprep.subr.mxu0 0.0
    %1233 = vmatpush1.msra.mxu0 0.0
    %1234 = vmatprep.subr.mxu0 0.0
    %1235 = vmatpush1.msra.mxu0 %v1206
    %1236 = vmatprep.subr.mxu0 0.0
    %1237 = vmatpush1.msra.mxu0 %v1192
    %1238 = vmatprep.subr.mxu0 0.0
    %1239 = vmatpush1.msra.mxu0 %v1190
    %1240 = vmatprep.subr.mxu0 0.0
    %1241 = vmatpush2.msra.mxu0 0.0
    %1242 = vmatprep.subr.mxu0 0.0
    %1243 = vmatpush2.msra.mxu0 0.0
    %1244 = vmatprep.subr.mxu0 0.0
    %1245 = vmatpush2.msra.mxu0 0.0
    %1246 = vmatprep.subr.mxu0 0.0
    %1247 = vmatpush2.msra.mxu0 0.0
    %1248 = vmatprep.subr.mxu0 0.0
    %1249 = vmatpush2.msra.mxu0 0.0
    %1250 = vmatprep.subr.mxu0 0.0
    %1251 = vmatpush2.msra.mxu0 0.0
    %1252 = vmatprep.subr.mxu0 0.0
    %1253 = vmatpush2.msra.mxu0 0.0
    %1254 = vmatprep.subr.mxu0 0.0
    %1255 = vmatpush2.msra.mxu0 0.0
    %1256 = vmatprep.subr.mxu0 0.0
    %1257 = vmatpush2.msra.mxu0 0.0
    %1258 = vmatprep.subr.mxu0 0.0
    %1259 = vmatpush2.msra.mxu0 0.0
    %1260 = vmatprep.subr.mxu0 0.0
    %1261 = vmatpush2.msra.mxu0 0.0
    %1262 = vmatprep.subr.mxu0 0.0
    %1263 = vmatpush2.msra.mxu0 0.0
    %1264 = vmatprep.subr.mxu0 0.0
    %1265 = vmatpush2.msra.mxu0 0.0
    %1266 = vmatprep.subr.mxu0 0.0
    %1267 = vmatpush2.msra.mxu0 0.0
    %1268 = vmatprep.subr.mxu0 0.0
    %1269 = vmatpush2.msra.mxu0 0.0
    %1270 = vmatprep.subr.mxu0 0.0
    %1271 = vmatpush2.msra.mxu0 0.0
    %1272 = vmatprep.mubr.f32.mxu0 0.0
    %1273 = vmatmul.mubr.f32.gmra.mxu0 %v1198
    %v1274 = vpop.f32.mrf.mxu0
    %v1275 = vadd.f32 0.0, %v1274
    %v1276 = vpop.f32.mrf.mxu0
    %1277 = vmatprep.mubr.f32.mxu0 0.0
    %1278 = vmatmul.mubr.f32.gmra.mxu0 %v1201
    %v1279 = vpop.f32.mrf.mxu0
    %v1280 = vadd.f32 0.0, %v1279
    %v1281 = vpop.f32.mrf.mxu0
    %1282 = vmatprep.mubr.f32.mxu0 0.0
    %1283 = vmatmul.mubr.f32.gmra.mxu0 %v1204
    %v1284 = vpop.f32.mrf.mxu0
    %v1285 = vadd.f32 0.0, %v1284
    %v1286 = vpop.f32.mrf.mxu0
    %1287 = vdwg.mxu0
    %1288 = vrot.lane.b32.xlu0 %v566, 104
    %v1289 = vpop.permute.xlu0 %1288
    %1290 = vrot.lane.b32.xlu0 %v571, 104
    %v1291 = vpop.permute.xlu0 %1290
    %1292 = vrot.lane.b32.xlu0 %v576, 104
    %v1293 = vpop.permute.xlu0 %1292
    %1294 = vrot.lane.b32.xlu0 %v566, 72
    %v1295 = vpop.permute.xlu0 %1294
    %1296 = vrot.lane.b32.xlu0 %v571, 72
    %v1297 = vpop.permute.xlu0 %1296
    %1298 = vrot.lane.b32.xlu0 %v576, 72
    %v1299 = vpop.permute.xlu0 %1298
    %v1300 = vsel %vm588, %v1289, 0
    %v1302 = vsel %vm588, %v1291, 0
    %v1304 = vsel %vm588, %v1293, 0
    %v1306 = vsel %vm588, %v1295, 0
    %v1308 = vsel %vm588, %v1297, 0
    %v1310 = vsel %vm588, %v1299, 0
    %1312 = vmatprep.subr.mxu0 0.0
    %1313 = vmatpush1.xpose.msra.mxu0 0.0
    %1314 = vmatprep.subr.mxu0 0.0
    %1315 = vmatpush1.xpose.msra.mxu0 0.0
    %1316 = vmatprep.subr.mxu0 0.0
    %1317 = vmatpush1.xpose.msra.mxu0 0.0
    %1318 = vmatprep.subr.mxu0 0.0
    %1319 = vmatpush1.xpose.msra.mxu0 0.0
    %1320 = vmatprep.subr.mxu0 0.0
    %1321 = vmatpush1.xpose.msra.mxu0 0.0
    %1322 = vmatprep.subr.mxu0 0.0
    %1323 = vmatpush1.xpose.msra.mxu0 0.0
    %1324 = vmatprep.subr.mxu0 0.0
    %1325 = vmatpush1.xpose.msra.mxu0 0.0
    %1326 = vmatprep.subr.mxu0 0.0
    %1327 = vmatpush1.xpose.msra.mxu0 0.0
    %1328 = vmatprep.subr.mxu0 0.0
    %1329 = vmatpush1.xpose.msra.mxu0 0.0
    %1330 = vmatprep.subr.mxu0 0.0
    %1331 = vmatpush1.xpose.msra.mxu0 0.0
    %1332 = vmatprep.subr.mxu0 0.0
    %1333 = vmatpush1.xpose.msra.mxu0 0.0
    %1334 = vmatprep.subr.mxu0 0.0
    %1335 = vmatpush1.xpose.msra.mxu0 0.0
    %1336 = vmatprep.subr.mxu0 0.0
    %1337 = vmatpush1.xpose.msra.mxu0 0.0
    %1338 = vmatprep.subr.mxu0 0.0
    %1339 = vmatpush1.xpose.msra.mxu0 %v1310
    %1340 = vmatprep.subr.mxu0 0.0
    %1341 = vmatpush1.xpose.msra.mxu0 %v1308
    %1342 = vmatprep.subr.mxu0 0.0
    %1343 = vmatpush1.xpose.msra.mxu0 %v1306
    %1344 = vmatprep.subr.mxu0 0.0
    %1345 = vmatpush2.xpose.msra.mxu0 0.0
    %1346 = vmatprep.subr.mxu0 0.0
    %1347 = vmatpush2.xpose.msra.mxu0 0.0
    %1348 = vmatprep.subr.mxu0 0.0
    %1349 = vmatpush2.xpose.msra.mxu0 0.0
    %1350 = vmatprep.subr.mxu0 0.0
    %1351 = vmatpush2.xpose.msra.mxu0 0.0
    %1352 = vmatprep.subr.mxu0 0.0
    %1353 = vmatpush2.xpose.msra.mxu0 0.0
    %1354 = vmatprep.subr.mxu0 0.0
    %1355 = vmatpush2.xpose.msra.mxu0 0.0
    %1356 = vmatprep.subr.mxu0 0.0
    %1357 = vmatpush2.xpose.msra.mxu0 0.0
    %1358 = vmatprep.subr.mxu0 0.0
    %1359 = vmatpush2.xpose.msra.mxu0 0.0
    %1360 = vmatprep.subr.mxu0 0.0
    %1361 = vmatpush2.xpose.msra.mxu0 0.0
    %1362 = vmatprep.subr.mxu0 0.0
    %1363 = vmatpush2.xpose.msra.mxu0 0.0
    %1364 = vmatprep.subr.mxu0 0.0
    %1365 = vmatpush2.xpose.msra.mxu0 0.0
    %1366 = vmatprep.subr.mxu0 0.0
    %1367 = vmatpush2.xpose.msra.mxu0 0.0
    %1368 = vmatprep.subr.mxu0 0.0
    %1369 = vmatpush2.xpose.msra.mxu0 0.0
    %1370 = vmatprep.subr.mxu0 0.0
    %1371 = vmatpush2.xpose.msra.mxu0 0.0
    %1372 = vmatprep.subr.mxu0 0.0
    %1373 = vmatpush2.xpose.msra.mxu0 0.0
    %1374 = vmatprep.subr.mxu0 0.0
    %1375 = vmatpush2.xpose.msra.mxu0 0.0
    %1376 = vmatprep.mubr.f32.mxu0 0.0
    %1377 = vmatmul.mubr.f32.gmra.mxu0 %v1300
    %v1378 = vpop.f32.mrf.mxu0
    %v1379 = vadd.f32 %v202, %v1378
    %v1380 = vpop.f32.mrf.mxu0
    %1381 = vmatprep.mubr.f32.mxu0 0.0
    %1382 = vmatmul.mubr.f32.gmra.mxu0 %v1302
    %v1383 = vpop.f32.mrf.mxu0
    %v1384 = vadd.f32 %v203, %v1383
    %v1385 = vpop.f32.mrf.mxu0
    %1386 = vmatprep.mubr.f32.mxu0 0.0
    %1387 = vmatmul.mubr.f32.gmra.mxu0 %v1304
    %v1388 = vpop.f32.mrf.mxu0
    %v1389 = vadd.f32 %v204, %v1388
    %v1390 = vpop.f32.mrf.mxu0
    %1391 = vdwg.mxu0
    %v1392 = vsel %vm681, %v1379, -inf
    %1393 = vmax.xlane.f32.xlu0 %v1392
    %v1394 = vpop.xlane.xlu0 %1393
    %v1395 = vsel %vm681, %v1384, -inf
    %1396 = vmax.xlane.f32.xlu0 %v1395
    %v1397 = vpop.xlane.xlu0 %1396
    %v1398 = vsel %vm688, %v1389, -inf
    %1399 = vmax.xlane.f32.xlu0 %v1398
    %v1400 = vpop.xlane.xlu0 %1399
    %v1401 = vsub.f32 %v1379, %v1394
    %v1402 = vsub.f32 %v1384, %v1397
    %v1403 = vsub.f32 %v1389, %v1400
    %v1404 = vmul.f32 %v1401, 1.442695
    %v1405 = vpow.pop %v1404
    %v1406 = vmul.f32 %v1402, 1.442695
    %v1407 = vpow.pop %v1406
    %v1408 = vmul.f32 %v1403, 1.442695
    %v1409 = vpow.pop %v1408
    %v1410 = vsel %vm681, %v1405, 0.0
    %1411 = vadd.xlane.f32.xlu0 %v1410
    %v1412 = vpop.xlane.xlu0 %1411
    %v1413 = vsel %vm681, %v1407, 0.0
    %1414 = vadd.xlane.f32.xlu0 %v1413
    %v1415 = vpop.xlane.xlu0 %1414
    %v1416 = vsel %vm688, %v1409, 0.0
    %1417 = vadd.xlane.f32.xlu0 %v1416
    %v1418 = vpop.xlane.xlu0 %1417
    %v1419 = vrcp.pop %v1412
    %v1420 = vmul.f32 %v1405, %v1419
    %v1421 = vrcp.pop %v1415
    %v1422 = vmul.f32 %v1407, %v1421
    %v1423 = vrcp.pop %v1418
    %v1424 = vmul.f32 %v1409, %v1423
    %1425 = vrot.lane.b32.xlu0 %v566, 40
    %v1426 = vpop.permute.xlu0 %1425
    %1427 = vrot.lane.b32.xlu0 %v571, 40
    %v1428 = vpop.permute.xlu0 %1427
    %1429 = vrot.lane.b32.xlu0 %v576, 40
    %v1430 = vpop.permute.xlu0 %1429
    %v1434 = vsel %vm681, %v1420, 0
    %v1437 = vsel %vm681, %v1422, 0
    %v1440 = vsel %vm681, %v1424, 0
    %v1442 = vsel %vm733, %v1430, 0
    %1444 = vmatprep.subr.mxu0 0.0
    %1445 = vmatpush1.msra.mxu0 0.0
    %1446 = vmatprep.subr.mxu0 0.0
    %1447 = vmatpush1.msra.mxu0 0.0
    %1448 = vmatprep.subr.mxu0 0.0
    %1449 = vmatpush1.msra.mxu0 0.0
    %1450 = vmatprep.subr.mxu0 0.0
    %1451 = vmatpush1.msra.mxu0 0.0
    %1452 = vmatprep.subr.mxu0 0.0
    %1453 = vmatpush1.msra.mxu0 0.0
    %1454 = vmatprep.subr.mxu0 0.0
    %1455 = vmatpush1.msra.mxu0 0.0
    %1456 = vmatprep.subr.mxu0 0.0
    %1457 = vmatpush1.msra.mxu0 0.0
    %1458 = vmatprep.subr.mxu0 0.0
    %1459 = vmatpush1.msra.mxu0 0.0
    %1460 = vmatprep.subr.mxu0 0.0
    %1461 = vmatpush1.msra.mxu0 0.0
    %1462 = vmatprep.subr.mxu0 0.0
    %1463 = vmatpush1.msra.mxu0 0.0
    %1464 = vmatprep.subr.mxu0 0.0
    %1465 = vmatpush1.msra.mxu0 0.0
    %1466 = vmatprep.subr.mxu0 0.0
    %1467 = vmatpush1.msra.mxu0 0.0
    %1468 = vmatprep.subr.mxu0 0.0
    %1469 = vmatpush1.msra.mxu0 0.0
    %1470 = vmatprep.subr.mxu0 0.0
    %1471 = vmatpush1.msra.mxu0 %v1442
    %1472 = vmatprep.subr.mxu0 0.0
    %1473 = vmatpush1.msra.mxu0 %v1428
    %1474 = vmatprep.subr.mxu0 0.0
    %1475 = vmatpush1.msra.mxu0 %v1426
    %1476 = vmatprep.subr.mxu0 0.0
    %1477 = vmatpush2.msra.mxu0 0.0
    %1478 = vmatprep.subr.mxu0 0.0
    %1479 = vmatpush2.msra.mxu0 0.0
    %1480 = vmatprep.subr.mxu0 0.0
    %1481 = vmatpush2.msra.mxu0 0.0
    %1482 = vmatprep.subr.mxu0 0.0
    %1483 = vmatpush2.msra.mxu0 0.0
    %1484 = vmatprep.subr.mxu0 0.0
    %1485 = vmatpush2.msra.mxu0 0.0
    %1486 = vmatprep.subr.mxu0 0.0
    %1487 = vmatpush2.msra.mxu0 0.0
    %1488 = vmatprep.subr.mxu0 0.0
    %1489 = vmatpush2.msra.mxu0 0.0
    %1490 = vmatprep.subr.mxu0 0.0
    %1491 = vmatpush2.msra.mxu0 0.0
    %1492 = vmatprep.subr.mxu0 0.0
    %1493 = vmatpush2.msra.mxu0 0.0
    %1494 = vmatprep.subr.mxu0 0.0
    %1495 = vmatpush2.msra.mxu0 0.0
    %1496 = vmatprep.subr.mxu0 0.0
    %1497 = vmatpush2.msra.mxu0 0.0
    %1498 = vmatprep.subr.mxu0 0.0
    %1499 = vmatpush2.msra.mxu0 0.0
    %1500 = vmatprep.subr.mxu0 0.0
    %1501 = vmatpush2.msra.mxu0 0.0
    %1502 = vmatprep.subr.mxu0 0.0
    %1503 = vmatpush2.msra.mxu0 0.0
    %1504 = vmatprep.subr.mxu0 0.0
    %1505 = vmatpush2.msra.mxu0 0.0
    %1506 = vmatprep.subr.mxu0 0.0
    %1507 = vmatpush2.msra.mxu0 0.0
    %1508 = vmatprep.mubr.f32.mxu0 0.0
    %1509 = vmatmul.mubr.f32.gmra.mxu0 %v1434
    %v1510 = vpop.f32.mrf.mxu0
    %v1511 = vadd.f32 0.0, %v1510
    %v1512 = vpop.f32.mrf.mxu0
    %1513 = vmatprep.mubr.f32.mxu0 0.0
    %1514 = vmatmul.mubr.f32.gmra.mxu0 %v1437
    %v1515 = vpop.f32.mrf.mxu0
    %v1516 = vadd.f32 0.0, %v1515
    %v1517 = vpop.f32.mrf.mxu0
    %1518 = vmatprep.mubr.f32.mxu0 0.0
    %1519 = vmatmul.mubr.f32.gmra.mxu0 %v1440
    %v1520 = vpop.f32.mrf.mxu0
    %v1521 = vadd.f32 0.0, %v1520
    %v1522 = vpop.f32.mrf.mxu0
    %1523 = vdwg.mxu0
    %1527 = vrot.lane.b32.xlu0 %v1039, 8
    %v1528 = vpop.permute.xlu0 %1527
    %1529 = vrot.lane.b32.xlu0 %v1044, 8
    %v1530 = vpop.permute.xlu0 %1529
    %1531 = vrot.lane.b32.xlu0 %v1049, 8
    %v1532 = vpop.permute.xlu0 %1531
    %1539 = vrot.lane.b32.xlu0 %v1275, 16
    %v1540 = vpop.permute.xlu0 %1539
    %1541 = vrot.lane.b32.xlu0 %v1280, 16
    %v1542 = vpop.permute.xlu0 %1541
    %1543 = vrot.lane.b32.xlu0 %v1285, 16
    %v1544 = vpop.permute.xlu0 %1543
    %1551 = vrot.lane.b32.xlu0 %v1511, 24
    %v1552 = vpop.permute.xlu0 %1551
    %1553 = vrot.lane.b32.xlu0 %v1516, 24
    %v1554 = vpop.permute.xlu0 %1553
    %1555 = vrot.lane.b32.xlu0 %v1521, 24
    %v1556 = vpop.permute.xlu0 %1555
    %v1560 = vsel %vm588, %v803, %v1528
    %v1561 = vsel %vm588, %v808, %v1530
    %v1562 = vsel %vm588, %v813, %v1532
    %v1563 = vsel %vm122, %v1560, %v1540
    %v1564 = vsel %vm122, %v1561, %v1542
    %v1565 = vsel %vm122, %v1562, %v1544
    %vm1566 = vcmask 195584
    %v1567 = vsel %vm1566, %v1563, %v1552
    %v1568 = vsel %vm1566, %v1564, %v1554
    %v1569 = vsel %vm1566, %v1565, %v1556
    %v1570 = vld [vmem:[%s2 + $0x48] sm:$0xff]
    %v1571 = vld [vmem:[%s2 + $0x50] sm:$0xff]
    %v1572 = vld [vmem:[%s2 + $0x58] sm:$0xff]
    %v1573 = vld [vmem:[%s2 + $0x60] sm:$0xff]
    %v1574 = vld [vmem:[%s2 + $0x68] sm:$0x1]
    %v1575 = vlaneseq
    %v1576 = vshrl.u32 %v1575, 7
    %v1577 = vsub.s32 0, %v1576
    %v1578 = vrot.slane %v1574, %v1577
    %v1580 = vsel %vm39, %v1567, 0
    %v1583 = vsel %vm39, %v1568, 0
    %v1586 = vsel %vm39, %v1569, 0
    %1588 = vmatprep.subr.mxu0 0.0
    %1589 = vmatpush1.msra.mxu0 0.0
    %1590 = vmatprep.subr.mxu0 0.0
    %1591 = vmatpush1.msra.mxu0 0.0
    %1592 = vmatprep.subr.mxu0 0.0
    %1593 = vmatpush1.msra.mxu0 0.0
    %1594 = vmatprep.subr.mxu0 0.0
    %1595 = vmatpush1.msra.mxu0 0.0
    %1596 = vmatprep.subr.mxu0 0.0
    %1597 = vmatpush1.msra.mxu0 0.0
    %1598 = vmatprep.subr.mxu0 0.0
    %1599 = vmatpush1.msra.mxu0 0.0
    %1600 = vmatprep.subr.mxu0 0.0
    %1601 = vmatpush1.msra.mxu0 0.0
    %1602 = vmatprep.subr.mxu0 0.0
    %1603 = vmatpush1.msra.mxu0 0.0
    %1604 = vmatprep.subr.mxu0 0.0
    %1605 = vmatpush1.msra.mxu0 0.0
    %1606 = vmatprep.subr.mxu0 0.0
    %1607 = vmatpush1.msra.mxu0 0.0
    %1608 = vmatprep.subr.mxu0 0.0
    %1609 = vmatpush1.msra.mxu0 0.0
    %1610 = vmatprep.subr.mxu0 0.0
    %1611 = vmatpush1.msra.mxu0 0.0
    %1612 = vmatprep.subr.mxu0 0.0
    %1613 = vmatpush1.msra.mxu0 %v1573
    %1614 = vmatprep.subr.mxu0 0.0
    %1615 = vmatpush1.msra.mxu0 %v1572
    %1616 = vmatprep.subr.mxu0 0.0
    %1617 = vmatpush1.msra.mxu0 %v1571
    %1618 = vmatprep.subr.mxu0 0.0
    %1619 = vmatpush1.msra.mxu0 %v1570
    %1620 = vmatprep.subr.mxu0 0.0
    %1621 = vmatpush2.msra.mxu0 0.0
    %1622 = vmatprep.subr.mxu0 0.0
    %1623 = vmatpush2.msra.mxu0 0.0
    %1624 = vmatprep.subr.mxu0 0.0
    %1625 = vmatpush2.msra.mxu0 0.0
    %1626 = vmatprep.subr.mxu0 0.0
    %1627 = vmatpush2.msra.mxu0 0.0
    %1628 = vmatprep.subr.mxu0 0.0
    %1629 = vmatpush2.msra.mxu0 0.0
    %1630 = vmatprep.subr.mxu0 0.0
    %1631 = vmatpush2.msra.mxu0 0.0
    %1632 = vmatprep.subr.mxu0 0.0
    %1633 = vmatpush2.msra.mxu0 0.0
    %1634 = vmatprep.subr.mxu0 0.0
    %1635 = vmatpush2.msra.mxu0 0.0
    %1636 = vmatprep.subr.mxu0 0.0
    %1637 = vmatpush2.msra.mxu0 0.0
    %1638 = vmatprep.subr.mxu0 0.0
    %1639 = vmatpush2.msra.mxu0 0.0
    %1640 = vmatprep.subr.mxu0 0.0
    %1641 = vmatpush2.msra.mxu0 0.0
    %1642 = vmatprep.subr.mxu0 0.0
    %1643 = vmatpush2.msra.mxu0 0.0
    %1644 = vmatprep.subr.mxu0 0.0
    %1645 = vmatpush2.msra.mxu0 0.0
    %1646 = vmatprep.subr.mxu0 0.0
    %1647 = vmatpush2.msra.mxu0 0.0
    %1648 = vmatprep.subr.mxu0 0.0
    %1649 = vmatpush2.msra.mxu0 0.0
    %1650 = vmatprep.subr.mxu0 0.0
    %1651 = vmatpush2.msra.mxu0 0.0
    %1652 = vmatprep.mubr.f32.mxu0 0.0
    %1653 = vmatmul.mubr.f32.gmra.mxu0 %v1580
    %v1654 = vpop.f32.mrf.mxu0
    %v1655 = vadd.f32 %v1578, %v1654
    %v1656 = vpop.f32.mrf.mxu0
    %1657 = vmatprep.mubr.f32.mxu0 0.0
    %1658 = vmatmul.mubr.f32.gmra.mxu0 %v1583
    %v1659 = vpop.f32.mrf.mxu0
    %v1660 = vadd.f32 %v1578, %v1659
    %v1661 = vpop.f32.mrf.mxu0
    %1662 = vmatprep.mubr.f32.mxu0 0.0
    %1663 = vmatmul.mubr.f32.gmra.mxu0 %v1586
    %v1664 = vpop.f32.mrf.mxu0
    %v1665 = vadd.f32 %v1578, %v1664
    %v1666 = vpop.f32.mrf.mxu0
    %1667 = vdwg.mxu0
    %v1668 = vadd.f32 %v1655, %v478
    %v1669 = vadd.f32 %v1660, %v479
    %v1670 = vadd.f32 %v1665, %v480
    %v1671 = vld [vmem:[%s2 + $0x70] sm:$0x1]
    %v1672 = vld [vmem:[%s2 + $0x78] sm:$0x1]
    %v1673 = vsel %vm39, %v1668, 0.0
    %1674 = vadd.xlane.f32.xlu0 %v1673
    %v1675 = vpop.xlane.xlu0 %1674
    %v1676 = vsel %vm39, %v1669, 0.0
    %1677 = vadd.xlane.f32.xlu0 %v1676
    %v1678 = vpop.xlane.xlu0 %1677
    %v1679 = vsel %vm433, %v1670, 0.0
    %1680 = vadd.xlane.f32.xlu0 %v1679
    %v1681 = vpop.xlane.xlu0 %1680
    %v1682 = vmul.f32 %v1675, %v303
    %v1683 = vmul.f32 %v1678, %v303
    %v1684 = vmul.f32 %v1681, %v303
    %v1685 = vsub.f32 %v1668, %v1682
    %v1686 = vsub.f32 %v1669, %v1683
    %v1687 = vsub.f32 %v1670, %v1684
    %v1688 = vmul.f32 %v1685, %v1685
    %v1689 = vmul.f32 %v1686, %v1686
    %v1690 = vmul.f32 %v1687, %v1687
    %v1691 = vsel %vm39, %v1688, 0.0
    %1692 = vadd.xlane.f32.xlu0 %v1691
    %v1693 = vpop.xlane.xlu0 %1692
    %v1694 = vsel %vm39, %v1689, 0.0
    %1695 = vadd.xlane.f32.xlu0 %v1694
    %v1696 = vpop.xlane.xlu0 %1695
    %v1697 = vsel %vm433, %v1690, 0.0
    %1698 = vadd.xlane.f32.xlu0 %v1697
    %v1699 = vpop.xlane.xlu0 %1698
    %v1700 = vmul.f32 %v1693, %v303
    %v1701 = vmul.f32 %v1696, %v303
    %v1702 = vmul.f32 %v1699, %v303
    %v1703 = vadd.f32 %v1700, 1e-12
    %v1704 = vadd.f32 %v1701, 1e-12
    %v1705 = vadd.f32 %v1702, 1e-12
    %v1706 = vrsqrt.pop %v1703
    %v1707 = vrsqrt.pop %v1704
    %v1708 = vrsqrt.pop %v1705
    %v1709 = vmul.f32 %v1685, %v1706
    %v1710 = vmul.f32 %v1686, %v1707
    %v1711 = vmul.f32 %v1687, %v1708
    %v1712 = vlaneseq
    %v1713 = vshrl.u32 %v1712, 7
    %v1714 = vsub.s32 0, %v1713
    %v1715 = vrot.slane %v1671, %v1714
    %v1716 = vmul.f32 %v1709, %v1715
    %v1717 = vmul.f32 %v1710, %v1715
    %v1718 = vmul.f32 %v1711, %v1715
    %v1719 = vlaneseq
    %v1720 = vshrl.u32 %v1719, 7
    %v1721 = vsub.s32 0, %v1720
    %v1722 = vrot.slane %v1672, %v1721
    %v1723 = vadd.f32 %v1716, %v1722
    %v1724 = vadd.f32 %v1717, %v1722
    %v1725 = vadd.f32 %v1718, %v1722
    %v1726 = vld [vmem:[%s4] sm:$0xff]
    %v1727 = vld [vmem:[%s4 + $0x8] sm:$0xff]
    %v1728 = vld [vmem:[%s4 + $0x10] sm:$0xff]
    %v1729 = vld [vmem:[%s4 + $0x18] sm:$0xff]
    %v1730 = vld [vmem:[%s4 + $0x20] sm:$0x1]
    %v1731 = vlaneseq
    %v1732 = vshrl.u32 %v1731, 7
    %v1733 = vsub.s32 0, %v1732
    %v1734 = vrot.slane %v1730, %v1733
    %v1736 = vsel %vm39, %v1723, 0
    %v1739 = vsel %vm39, %v1724, 0
    %v1742 = vsel %vm39, %v1725, 0
    %1744 = vmatprep.subr.mxu0 0.0
    %1745 = vmatpush1.msra.mxu0 0.0
    %1746 = vmatprep.subr.mxu0 0.0
    %1747 = vmatpush1.msra.mxu0 0.0
    %1748 = vmatprep.subr.mxu0 0.0
    %1749 = vmatpush1.msra.mxu0 0.0
    %1750 = vmatprep.subr.mxu0 0.0
    %1751 = vmatpush1.msra.mxu0 0.0
    %1752 = vmatprep.subr.mxu0 0.0
    %1753 = vmatpush1.msra.mxu0 0.0
    %1754 = vmatprep.subr.mxu0 0.0
    %1755 = vmatpush1.msra.mxu0 0.0
    %1756 = vmatprep.subr.mxu0 0.0
    %1757 = vmatpush1.msra.mxu0 0.0
    %1758 = vmatprep.subr.mxu0 0.0
    %1759 = vmatpush1.msra.mxu0 0.0
    %1760 = vmatprep.subr.mxu0 0.0
    %1761 = vmatpush1.msra.mxu0 0.0
    %1762 = vmatprep.subr.mxu0 0.0
    %1763 = vmatpush1.msra.mxu0 0.0
    %1764 = vmatprep.subr.mxu0 0.0
    %1765 = vmatpush1.msra.mxu0 0.0
    %1766 = vmatprep.subr.mxu0 0.0
    %1767 = vmatpush1.msra.mxu0 0.0
    %1768 = vmatprep.subr.mxu0 0.0
    %1769 = vmatpush1.msra.mxu0 %v1729
    %1770 = vmatprep.subr.mxu0 0.0
    %1771 = vmatpush1.msra.mxu0 %v1728
    %1772 = vmatprep.subr.mxu0 0.0
    %1773 = vmatpush1.msra.mxu0 %v1727
    %1774 = vmatprep.subr.mxu0 0.0
    %1775 = vmatpush1.msra.mxu0 %v1726
    %1776 = vmatprep.subr.mxu0 0.0
    %1777 = vmatpush2.msra.mxu0 0.0
    %1778 = vmatprep.subr.mxu0 0.0
    %1779 = vmatpush2.msra.mxu0 0.0
    %1780 = vmatprep.subr.mxu0 0.0
    %1781 = vmatpush2.msra.mxu0 0.0
    %1782 = vmatprep.subr.mxu0 0.0
    %1783 = vmatpush2.msra.mxu0 0.0
    %1784 = vmatprep.subr.mxu0 0.0
    %1785 = vmatpush2.msra.mxu0 0.0
    %1786 = vmatprep.subr.mxu0 0.0
    %1787 = vmatpush2.msra.mxu0 0.0
    %1788 = vmatprep.subr.mxu0 0.0
    %1789 = vmatpush2.msra.mxu0 0.0
    %1790 = vmatprep.subr.mxu0 0.0
    %1791 = vmatpush2.msra.mxu0 0.0
    %1792 = vmatprep.subr.mxu0 0.0
    %1793 = vmatpush2.msra.mxu0 0.0
    %1794 = vmatprep.subr.mxu0 0.0
    %1795 = vmatpush2.msra.mxu0 0.0
    %1796 = vmatprep.subr.mxu0 0.0
    %1797 = vmatpush2.msra.mxu0 0.0
    %1798 = vmatprep.subr.mxu0 0.0
    %1799 = vmatpush2.msra.mxu0 0.0
    %1800 = vmatprep.subr.mxu0 0.0
    %1801 = vmatpush2.msra.mxu0 0.0
    %1802 = vmatprep.subr.mxu0 0.0
    %1803 = vmatpush2.msra.mxu0 0.0
    %1804 = vmatprep.subr.mxu0 0.0
    %1805 = vmatpush2.msra.mxu0 0.0
    %1806 = vmatprep.subr.mxu0 0.0
    %1807 = vmatpush2.msra.mxu0 0.0
    %1808 = vmatprep.mubr.f32.mxu0 0.0
    %1809 = vmatmul.mubr.f32.gmra.mxu0 %v1736
    %v1810 = vpop.f32.mrf.mxu0
    %v1811 = vadd.f32 %v1734, %v1810
    %v1812 = vpop.f32.mrf.mxu0
    %1813 = vmatprep.mubr.f32.mxu0 0.0
    %1814 = vmatmul.mubr.f32.gmra.mxu0 %v1739
    %v1815 = vpop.f32.mrf.mxu0
    %v1816 = vadd.f32 %v1734, %v1815
    %v1817 = vpop.f32.mrf.mxu0
    %1818 = vmatprep.mubr.f32.mxu0 0.0
    %1819 = vmatmul.mubr.f32.gmra.mxu0 %v1742
    %v1820 = vpop.f32.mrf.mxu0
    %v1821 = vadd.f32 %v1734, %v1820
    %v1822 = vpop.f32.mrf.mxu0
    %1823 = vdwg.mxu0
    %v1824 = vmul.f32 %v1811, %v1811
    %v1825 = vmul.f32 %v1816, %v1816
    %v1826 = vmul.f32 %v1821, %v1821
    %v1827 = vmul.f32 %v1811, %v1824
    %v1828 = vmul.f32 %v1816, %v1825
    %v1829 = vmul.f32 %v1821, %v1826
    %v1830 = vmul.f32 %v1827, 0.044715
    %v1831 = vmul.f32 %v1828, 0.044715
    %v1832 = vmul.f32 %v1829, 0.044715
    %v1833 = vadd.f32 %v1811, %v1830
    %v1834 = vadd.f32 %v1816, %v1831
    %v1835 = vadd.f32 %v1821, %v1832
    %v1836 = vmul.f32 %v1833, 0.7978846
    %v1837 = vmul.f32 %v1834, 0.7978846
    %v1838 = vmul.f32 %v1835, 0.7978846
    %v1839 = vtanh.pop %v1836
    %v1840 = vtanh.pop %v1837
    %v1841 = vtanh.pop %v1838
    %v1842 = vadd.f32 %v1839, 1.0
    %v1843 = vadd.f32 %v1840, 1.0
    %v1844 = vadd.f32 %v1841, 1.0
    %v1845 = vmul.f32 %v1842, 0.5
    %v1846 = vmul.f32 %v1843, 0.5
    %v1847 = vmul.f32 %v1844, 0.5
    %v1848 = vmul.f32 %v1811, %v1845
    %v1849 = vmul.f32 %v1816, %v1846
    %v1850 = vmul.f32 %v1821, %v1847
    %v1851 = vld [vmem:[%s2 + $0x80] sm:$0xff]
    %v1852 = vld [vmem:[%s2 + $0x88] sm:$0xff]
    %v1853 = vld [vmem:[%s2 + $0x90] sm:$0xff]
    %v1854 = vld [vmem:[%s2 + $0x98] sm:$0xff]
    %v1855 = vld [vmem:[%s2 + $0xa0] sm:$0xff]
    %v1856 = vld [vmem:[%s2 + $0xa8] sm:$0xff]
    %v1857 = vld [vmem:[%s2 + $0xb0] sm:$0xff]
    %v1858 = vld [vmem:[%s2 + $0xb8] sm:$0xff]
    %v1859 = vld [vmem:[%s2 + $0xc0] sm:$0x1]
    %v1860 = vlaneseq
    %v1861 = vshrl.u32 %v1860, 7
    %v1862 = vsub.s32 0, %v1861
    %v1863 = vrot.slane %v1859, %v1862
    %vm1864 = vcmask 523264
    %v1866 = vsel %vm1864, %v1848, 0
    %v1869 = vsel %vm1864, %v1849, 0
    %v1872 = vsel %vm1864, %v1850, 0
    %1874 = vmatprep.subr.mxu0 0.0
    %1875 = vmatpush1.msra.mxu0 0.0
    %1876 = vmatprep.subr.mxu0 0.0
    %1877 = vmatpush1.msra.mxu0 0.0
    %1878 = vmatprep.subr.mxu0 0.0
    %1879 = vmatpush1.msra.mxu0 0.0
    %1880 = vmatprep.subr.mxu0 0.0
    %1881 = vmatpush1.msra.mxu0 0.0
    %1882 = vmatprep.subr.mxu0 0.0
    %1883 = vmatpush1.msra.mxu0 0.0
    %1884 = vmatprep.subr.mxu0 0.0
    %1885 = vmatpush1.msra.mxu0 0.0
    %1886 = vmatprep.subr.mxu0 0.0
    %1887 = vmatpush1.msra.mxu0 0.0
    %1888 = vmatprep.subr.mxu0 0.0
    %1889 = vmatpush1.msra.mxu0 0.0
    %1890 = vmatprep.subr.mxu0 0.0
    %1891 = vmatpush1.msra.mxu0 %v1858
    %1892 = vmatprep.subr.mxu0 0.0
    %1893 = vmatpush1.msra.mxu0 %v1857
    %1894 = vmatprep.subr.mxu0 0.0
    %1895 = vmatpush1.msra.mxu0 %v1856
    %1896 = vmatprep.subr.mxu0 0.0
    %1897 = vmatpush1.msra.mxu0 %v1855
    %1898 = vmatprep.subr.mxu0 0.0
    %1899 = vmatpush1.msra.mxu0 %v1854
    %1900 = vmatprep.subr.mxu0 0.0
    %1901 = vmatpush1.msra.mxu0 %v1853
    %1902 = vmatprep.subr.mxu0 0.0
    %1903 = vmatpush1.msra.mxu0 %v1852
    %1904 = vmatprep.subr.mxu0 0.0
    %1905 = vmatpush1.msra.mxu0 %v1851
    %1906 = vmatprep.subr.mxu0 0.0
    %1907 = vmatpush2.msra.mxu0 0.0
    %1908 = vmatprep.subr.mxu0 0.0
    %1909 = vmatpush2.msra.mxu0 0.0
    %1910 = vmatprep.subr.mxu0 0.0
    %1911 = vmatpush2.msra.mxu0 0.0
    %1912 = vmatprep.subr.mxu0 0.0
    %1913 = vmatpush2.msra.mxu0 0.0
    %1914 = vmatprep.subr.mxu0 0.0
    %1915 = vmatpush2.msra.mxu0 0.0
    %1916 = vmatprep.subr.mxu0 0.0
    %1917 = vmatpush2.msra.mxu0 0.0
    %1918 = vmatprep.subr.mxu0 0.0
    %1919 = vmatpush2.msra.mxu0 0.0
    %1920 = vmatprep.subr.mxu0 0.0
    %1921 = vmatpush2.msra.mxu0 0.0
    %1922 = vmatprep.subr.mxu0 0.0
    %1923 = vmatpush2.msra.mxu0 0.0
    %1924 = vmatprep.subr.mxu0 0.0
    %1925 = vmatpush2.msra.mxu0 0.0
    %1926 = vmatprep.subr.mxu0 0.0
    %1927 = vmatpush2.msra.mxu0 0.0
    %1928 = vmatprep.subr.mxu0 0.0
    %1929 = vmatpush2.msra.mxu0 0.0
    %1930 = vmatprep.subr.mxu0 0.0
    %1931 = vmatpush2.msra.mxu0 0.0
    %1932 = vmatprep.subr.mxu0 0.0
    %1933 = vmatpush2.msra.mxu0 0.0
    %1934 = vmatprep.subr.mxu0 0.0
    %1935 = vmatpush2.msra.mxu0 0.0
    %1936 = vmatprep.subr.mxu0 0.0
    %1937 = vmatpush2.msra.mxu0 0.0
    %1938 = vmatprep.mubr.f32.mxu0 0.0
    %1939 = vmatmul.mubr.f32.gmra.mxu0 %v1866
    %v1940 = vpop.f32.mrf.mxu0
    %v1941 = vadd.f32 %v1863, %v1940
    %v1942 = vpop.f32.mrf.mxu0
    %1943 = vmatprep.mubr.f32.mxu0 0.0
    %1944 = vmatmul.mubr.f32.gmra.mxu0 %v1869
    %v1945 = vpop.f32.mrf.mxu0
    %v1946 = vadd.f32 %v1863, %v1945
    %v1947 = vpop.f32.mrf.mxu0
    %1948 = vmatprep.mubr.f32.mxu0 0.0
    %1949 = vmatmul.mubr.f32.gmra.mxu0 %v1872
    %v1950 = vpop.f32.mrf.mxu0
    %v1951 = vadd.f32 %v1863, %v1950
    %v1952 = vpop.f32.mrf.mxu0
    %1953 = vdwg.mxu0
    %v1954 = vadd.f32 %v1941, %v1723
    %v1955 = vadd.f32 %v1946, %v1724
    %v1956 = vadd.f32 %v1951, %v1725
    %v1957 = vld [vmem:[%s2 + $0xc8] sm:$0x1]
    %v1958 = vld [vmem:[%s2 + $0xd0] sm:$0x1]
    %v1959 = vsel %vm39, %v1954, 0.0
    %1960 = vadd.xlane.f32.xlu0 %v1959
    %v1961 = vpop.xlane.xlu0 %1960
    %v1962 = vsel %vm39, %v1955, 0.0
    %1963 = vadd.xlane.f32.xlu0 %v1962
    %v1964 = vpop.xlane.xlu0 %1963
    %v1965 = vsel %vm433, %v1956, 0.0
    %1966 = vadd.xlane.f32.xlu0 %v1965
    %v1967 = vpop.xlane.xlu0 %1966
    %v1968 = vmul.f32 %v1961, %v303
    %v1969 = vmul.f32 %v1964, %v303
    %v1970 = vmul.f32 %v1967, %v303
    %v1971 = vsub.f32 %v1954, %v1968
    %v1972 = vsub.f32 %v1955, %v1969
    %v1973 = vsub.f32 %v1956, %v1970
    %v1974 = vmul.f32 %v1971, %v1971
    %v1975 = vmul.f32 %v1972, %v1972
    %v1976 = vmul.f32 %v1973, %v1973
    %v1977 = vsel %vm39, %v1974, 0.0
    %1978 = vadd.xlane.f32.xlu0 %v1977
    %v1979 = vpop.xlane.xlu0 %1978
    %v1980 = vsel %vm39, %v1975, 0.0
    %1981 = vadd.xlane.f32.xlu0 %v1980
    %v1982 = vpop.xlane.xlu0 %1981
    %v1983 = vsel %vm433, %v1976, 0.0
    %1984 = vadd.xlane.f32.xlu0 %v1983
    %v1985 = vpop.xlane.xlu0 %1984
    %v1986 = vmul.f32 %v1979, %v303
    %v1987 = vmul.f32 %v1982, %v303
    %v1988 = vmul.f32 %v1985, %v303
    %v1989 = vadd.f32 %v1986, 1e-12
    %v1990 = vadd.f32 %v1987, 1e-12
    %v1991 = vadd.f32 %v1988, 1e-12
    %v1992 = vrsqrt.pop %v1989
    %v1993 = vrsqrt.pop %v1990
    %v1994 = vrsqrt.pop %v1991
    %v1995 = vmul.f32 %v1971, %v1992
    %v1996 = vmul.f32 %v1972, %v1993
    %v1997 = vmul.f32 %v1973, %v1994
    %v1998 = vlaneseq
    %v1999 = vshrl.u32 %v1998, 7
    %v2000 = vsub.s32 0, %v1999
    %v2001 = vrot.slane %v1957, %v2000
    %v2002 = vmul.f32 %v1995, %v2001
    %v2003 = vmul.f32 %v1996, %v2001
    %v2004 = vmul.f32 %v1997, %v2001
    %v2005 = vlaneseq
    %v2006 = vshrl.u32 %v2005, 7
    %v2007 = vsub.s32 0, %v2006
    %v2008 = vrot.slane %v1958, %v2007
    %v2009 = vadd.f32 %v2002, %v2008
    %v2010 = vadd.f32 %v2003, %v2008
    %v2011 = vadd.f32 %v2004, %v2008
    %v2012 = vld [vmem:[%s3 + $0x28] sm:$0xff]
    %v2013 = vld [vmem:[%s3 + $0x30] sm:$0xff]
    %v2014 = vld [vmem:[%s3 + $0x38] sm:$0xff]
    %v2015 = vld [vmem:[%s3 + $0x40] sm:$0xff]
    %v2016 = vld [vmem:[%s3 + $0x48] sm:$0x1]
    %v2017 = vlaneseq
    %v2018 = vshrl.u32 %v2017, 7
    %v2019 = vsub.s32 0, %v2018
    %v2020 = vrot.slane %v2016, %v2019
    %v2022 = vsel %vm39, %v2009, 0
    %v2025 = vsel %vm39, %v2010, 0
    %v2028 = vsel %vm39, %v2011, 0
    %2030 = vmatprep.subr.mxu0 0.0
    %2031 = vmatpush1.msra.mxu0 0.0
    %2032 = vmatprep.subr.mxu0 0.0
    %2033 = vmatpush1.msra.mxu0 0.0
    %2034 = vmatprep.subr.mxu0 0.0
    %2035 = vmatpush1.msra.mxu0 0.0
    %2036 = vmatprep.subr.mxu0 0.0
    %2037 = vmatpush1.msra.mxu0 0.0
    %2038 = vmatprep.subr.mxu0 0.0
    %2039 = vmatpush1.msra.mxu0 0.0
    %2040 = vmatprep.subr.mxu0 0.0
    %2041 = vmatpush1.msra.mxu0 0.0
    %2042 = vmatprep.subr.mxu0 0.0
    %2043 = vmatpush1.msra.mxu0 0.0
    %2044 = vmatprep.subr.mxu0 0.0
    %2045 = vmatpush1.msra.mxu0 0.0
    %2046 = vmatprep.subr.mxu0 0.0
    %2047 = vmatpush1.msra.mxu0 0.0
    %2048 = vmatprep.subr.mxu0 0.0
    %2049 = vmatpush1.msra.mxu0 0.0
    %2050 = vmatprep.subr.mxu0 0.0
    %2051 = vmatpush1.msra.mxu0 0.0
    %2052 = vmatprep.subr.mxu0 0.0
    %2053 = vmatpush1.msra.mxu0 0.0
    %2054 = vmatprep.subr.mxu0 0.0
    %2055 = vmatpush1.msra.mxu0 %v2015
    %2056 = vmatprep.subr.mxu0 0.0
    %2057 = vmatpush1.msra.mxu0 %v2014
    %2058 = vmatprep.subr.mxu0 0.0
    %2059 = vmatpush1.msra.mxu0 %v2013
    %2060 = vmatprep.subr.mxu0 0.0
    %2061 = vmatpush1.msra.mxu0 %v2012
    %2062 = vmatprep.subr.mxu0 0.0
    %2063 = vmatpush2.msra.mxu0 0.0
    %2064 = vmatprep.subr.mxu0 0.0
    %2065 = vmatpush2.msra.mxu0 0.0
    %2066 = vmatprep.subr.mxu0 0.0
    %2067 = vmatpush2.msra.mxu0 0.0
    %2068 = vmatprep.subr.mxu0 0.0
    %2069 = vmatpush2.msra.mxu0 0.0
    %2070 = vmatprep.subr.mxu0 0.0
    %2071 = vmatpush2.msra.mxu0 0.0
    %2072 = vmatprep.subr.mxu0 0.0
    %2073 = vmatpush2.msra.mxu0 0.0
    %2074 = vmatprep.subr.mxu0 0.0
    %2075 = vmatpush2.msra.mxu0 0.0
    %2076 = vmatprep.subr.mxu0 0.0
    %2077 = vmatpush2.msra.mxu0 0.0
    %2078 = vmatprep.subr.mxu0 0.0
    %2079 = vmatpush2.msra.mxu0 0.0
    %2080 = vmatprep.subr.mxu0 0.0
    %2081 = vmatpush2.msra.mxu0 0.0
    %2082 = vmatprep.subr.mxu0 0.0
    %2083 = vmatpush2.msra.mxu0 0.0
    %2084 = vmatprep.subr.mxu0 0.0
    %2085 = vmatpush2.msra.mxu0 0.0
    %2086 = vmatprep.subr.mxu0 0.0
    %2087 = vmatpush2.msra.mxu0 0.0
    %2088 = vmatprep.subr.mxu0 0.0
    %2089 = vmatpush2.msra.mxu0 0.0
    %2090 = vmatprep.subr.mxu0 0.0
    %2091 = vmatpush2.msra.mxu0 0.0
    %2092 = vmatprep.subr.mxu0 0.0
    %2093 = vmatpush2.msra.mxu0 0.0
    %2094 = vmatprep.mubr.f32.mxu0 0.0
    %2095 = vmatmul.mubr.f32.gmra.mxu0 %v2022
    %v2096 = vpop.f32.mrf.mxu0
    %v2097 = vadd.f32 %v2020, %v2096
    %v2098 = vpop.f32.mrf.mxu0
    %2099 = vmatprep.mubr.f32.mxu0 0.0
    %2100 = vmatmul.mubr.f32.gmra.mxu0 %v2025
    %v2101 = vpop.f32.mrf.mxu0
    %v2102 = vadd.f32 %v2020, %v2101
    %v2103 = vpop.f32.mrf.mxu0
    %2104 = vmatprep.mubr.f32.mxu0 0.0
    %2105 = vmatmul.mubr.f32.gmra.mxu0 %v2028
    %v2106 = vpop.f32.mrf.mxu0
    %v2107 = vadd.f32 %v2020, %v2106
    %v2108 = vpop.f32.mrf.mxu0
    %2109 = vdwg.mxu0
    %2113 = vrot.lane.b32.xlu0 %v2097, 96
    %v2114 = vpop.permute.xlu0 %2113
    %2115 = vrot.lane.b32.xlu0 %v2102, 96
    %v2116 = vpop.permute.xlu0 %2115
    %2117 = vrot.lane.b32.xlu0 %v2107, 96
    %v2118 = vpop.permute.xlu0 %2117
    %v2119 = vsel %vm588, %v2097, 0
    %v2121 = vsel %vm588, %v2102, 0
    %v2123 = vsel %vm588, %v2107, 0
    %v2125 = vsel %vm588, %v2114, 0
    %v2127 = vsel %vm588, %v2116, 0
    %v2129 = vsel %vm588, %v2118, 0
    %2131 = vmatprep.subr.mxu0 0.0
    %2132 = vmatpush1.xpose.msra.mxu0 0.0
    %2133 = vmatprep.subr.mxu0 0.0
    %2134 = vmatpush1.xpose.msra.mxu0 0.0
    %2135 = vmatprep.subr.mxu0 0.0
    %2136 = vmatpush1.xpose.msra.mxu0 0.0
    %2137 = vmatprep.subr.mxu0 0.0
    %2138 = vmatpush1.xpose.msra.mxu0 0.0
    %2139 = vmatprep.subr.mxu0 0.0
    %2140 = vmatpush1.xpose.msra.mxu0 0.0
    %2141 = vmatprep.subr.mxu0 0.0
    %2142 = vmatpush1.xpose.msra.mxu0 0.0
    %2143 = vmatprep.subr.mxu0 0.0
    %2144 = vmatpush1.xpose.msra.mxu0 0.0
    %2145 = vmatprep.subr.mxu0 0.0
    %2146 = vmatpush1.xpose.msra.mxu0 0.0
    %2147 = vmatprep.subr.mxu0 0.0
    %2148 = vmatpush1.xpose.msra.mxu0 0.0
    %2149 = vmatprep.subr.mxu0 0.0
    %2150 = vmatpush1.xpose.msra.mxu0 0.0
    %2151 = vmatprep.subr.mxu0 0.0
    %2152 = vmatpush1.xpose.msra.mxu0 0.0
    %2153 = vmatprep.subr.mxu0 0.0
    %2154 = vmatpush1.xpose.msra.mxu0 0.0
    %2155 = vmatprep.subr.mxu0 0.0
    %2156 = vmatpush1.xpose.msra.mxu0 0.0
    %2157 = vmatprep.subr.mxu0 0.0
    %2158 = vmatpush1.xpose.msra.mxu0 %v2129
    %2159 = vmatprep.subr.mxu0 0.0
    %2160 = vmatpush1.xpose.msra.mxu0 %v2127
    %2161 = vmatprep.subr.mxu0 0.0
    %2162 = vmatpush1.xpose.msra.mxu0 %v2125
    %2163 = vmatprep.subr.mxu0 0.0
    %2164 = vmatpush2.xpose.msra.mxu0 0.0
    %2165 = vmatprep.subr.mxu0 0.0
    %2166 = vmatpush2.xpose.msra.mxu0 0.0
    %2167 = vmatprep.subr.mxu0 0.0
    %2168 = vmatpush2.xpose.msra.mxu0 0.0
    %2169 = vmatprep.subr.mxu0 0.0
    %2170 = vmatpush2.xpose.msra.mxu0 0.0
    %2171 = vmatprep.subr.mxu0 0.0
    %2172 = vmatpush2.xpose.msra.mxu0 0.0
    %2173 = vmatprep.subr.mxu0 0.0
    %2174 = vmatpush2.xpose.msra.mxu0 0.0
    %2175 = vmatprep.subr.mxu0 0.0
    %2176 = vmatpush2.xpose.msra.mxu0 0.0
    %2177 = vmatprep.subr.mxu0 0.0
    %2178 = vmatpush2.xpose.msra.mxu0 0.0
    %2179 = vmatprep.subr.mxu0 0.0
    %2180 = vmatpush2.xpose.msra.mxu0 0.0
    %2181 = vmatprep.subr.mxu0 0.0
    %2182 = vmatpush2.xpose.msra.mxu0 0.0
    %2183 = vmatprep.subr.mxu0 0.0
    %2184 = vmatpush2.xpose.msra.mxu0 0.0
    %2185 = vmatprep.subr.mxu0 0.0
    %2186 = vmatpush2.xpose.msra.mxu0 0.0
    %2187 = vmatprep.subr.mxu0 0.0
    %2188 = vmatpush2.xpose.msra.mxu0 0.0
    %2189 = vmatprep.subr.mxu0 0.0
    %2190 = vmatpush2.xpose.msra.mxu0 0.0
    %2191 = vmatprep.subr.mxu0 0.0
    %2192 = vmatpush2.xpose.msra.mxu0 0.0
    %2193 = vmatprep.subr.mxu0 0.0
    %2194 = vmatpush2.xpose.msra.mxu0 0.0
    %2195 = vmatprep.mubr.f32.mxu0 0.0
    %2196 = vmatmul.mubr.f32.gmra.mxu0 %v2119
    %v2197 = vpop.f32.mrf.mxu0
    %v2198 = vadd.f32 %v202, %v2197
    %v2199 = vpop.f32.mrf.mxu0
    %2200 = vmatprep.mubr.f32.mxu0 0.0
    %2201 = vmatmul.mubr.f32.gmra.mxu0 %v2121
    %v2202 = vpop.f32.mrf.mxu0
    %v2203 = vadd.f32 %v203, %v2202
    %v2204 = vpop.f32.mrf.mxu0
    %2205 = vmatprep.mubr.f32.mxu0 0.0
    %2206 = vmatmul.mubr.f32.gmra.mxu0 %v2123
    %v2207 = vpop.f32.mrf.mxu0
    %v2208 = vadd.f32 %v204, %v2207
    %v2209 = vpop.f32.mrf.mxu0
    %2210 = vdwg.mxu0
    %v2211 = vsel %vm681, %v2198, -inf
    %2212 = vmax.xlane.f32.xlu0 %v2211
    %v2213 = vpop.xlane.xlu0 %2212
    %v2214 = vsel %vm681, %v2203, -inf
    %2215 = vmax.xlane.f32.xlu0 %v2214
    %v2216 = vpop.xlane.xlu0 %2215
    %v2217 = vsel %vm688, %v2208, -inf
    %2218 = vmax.xlane.f32.xlu0 %v2217
    %v2219 = vpop.xlane.xlu0 %2218
    %v2220 = vsub.f32 %v2198, %v2213
    %v2221 = vsub.f32 %v2203, %v2216
    %v2222 = vsub.f32 %v2208, %v2219
    %v2223 = vmul.f32 %v2220, 1.442695
    %v2224 = vpow.pop %v2223
    %v2225 = vmul.f32 %v2221, 1.442695
    %v2226 = vpow.pop %v2225
    %v2227 = vmul.f32 %v2222, 1.442695
    %v2228 = vpow.pop %v2227
    %v2229 = vsel %vm681, %v2224, 0.0
    %2230 = vadd.xlane.f32.xlu0 %v2229
    %v2231 = vpop.xlane.xlu0 %2230
    %v2232 = vsel %vm681, %v2226, 0.0
    %2233 = vadd.xlane.f32.xlu0 %v2232
    %v2234 = vpop.xlane.xlu0 %2233
    %v2235 = vsel %vm688, %v2228, 0.0
    %2236 = vadd.xlane.f32.xlu0 %v2235
    %v2237 = vpop.xlane.xlu0 %2236
    %v2238 = vrcp.pop %v2231
    %v2239 = vmul.f32 %v2224, %v2238
    %v2240 = vrcp.pop %v2234
    %v2241 = vmul.f32 %v2226, %v2240
    %v2242 = vrcp.pop %v2237
    %v2243 = vmul.f32 %v2228, %v2242
    %2244 = vrot.lane.b32.xlu0 %v2097, 64
    %v2245 = vpop.permute.xlu0 %2244
    %2246 = vrot.lane.b32.xlu0 %v2102, 64
    %v2247 = vpop.permute.xlu0 %2246
    %2248 = vrot.lane.b32.xlu0 %v2107, 64
    %v2249 = vpop.permute.xlu0 %2248
    %v2253 = vsel %vm681, %v2239, 0
    %v2256 = vsel %vm681, %v2241, 0
    %v2259 = vsel %vm681, %v2243, 0
    %v2261 = vsel %vm733, %v2249, 0
    %2263 = vmatprep.subr.mxu0 0.0
    %2264 = vmatpush1.msra.mxu0 0.0
    %2265 = vmatprep.subr.mxu0 0.0
    %2266 = vmatpush1.msra.mxu0 0.0
    %2267 = vmatprep.subr.mxu0 0.0
    %2268 = vmatpush1.msra.mxu0 0.0
    %2269 = vmatprep.subr.mxu0 0.0
    %2270 = vmatpush1.msra.mxu0 0.0
    %2271 = vmatprep.subr.mxu0 0.0
    %2272 = vmatpush1.msra.mxu0 0.0
    %2273 = vmatprep.subr.mxu0 0.0
    %2274 = vmatpush1.msra.mxu0 0.0
    %2275 = vmatprep.subr.mxu0 0.0
    %2276 = vmatpush1.msra.mxu0 0.0
    %2277 = vmatprep.subr.mxu0 0.0
    %2278 = vmatpush1.msra.mxu0 0.0
    %2279 = vmatprep.subr.mxu0 0.0
    %2280 = vmatpush1.msra.mxu0 0.0
    %2281 = vmatprep.subr.mxu0 0.0
    %2282 = vmatpush1.msra.mxu0 0.0
    %2283 = vmatprep.subr.mxu0 0.0
    %2284 = vmatpush1.msra.mxu0 0.0
    %2285 = vmatprep.subr.mxu0 0.0
    %2286 = vmatpush1.msra.mxu0 0.0
    %2287 = vmatprep.subr.mxu0 0.0
    %2288 = vmatpush1.msra.mxu0 0.0
    %2289 = vmatprep.subr.mxu0 0.0
    %2290 = vmatpush1.msra.mxu0 %v2261
    %2291 = vmatprep.subr.mxu0 0.0
    %2292 = vmatpush1.msra.mxu0 %v2247
    %2293 = vmatprep.subr.mxu0 0.0
    %2294 = vmatpush1.msra.mxu0 %v2245
    %2295 = vmatprep.subr.mxu0 0.0
    %2296 = vmatpush2.msra.mxu0 0.0
    %2297 = vmatprep.subr.mxu0 0.0
    %2298 = vmatpush2.msra.mxu0 0.0
    %2299 = vmatprep.subr.mxu0 0.0
    %2300 = vmatpush2.msra.mxu0 0.0
    %2301 = vmatprep.subr.mxu0 0.0
    %2302 = vmatpush2.msra.mxu0 0.0
    %2303 = vmatprep.subr.mxu0 0.0
    %2304 = vmatpush2.msra.mxu0 0.0
    %2305 = vmatprep.subr.mxu0 0.0
    %2306 = vmatpush2.msra.mxu0 0.0
    %2307 = vmatprep.subr.mxu0 0.0
    %2308 = vmatpush2.msra.mxu0 0.0
    %2309 = vmatprep.subr.mxu0 0.0
    %2310 = vmatpush2.msra.mxu0 0.0
    %2311 = vmatprep.subr.mxu0 0.0
    %2312 = vmatpush2.msra.mxu0 0.0
    %2313 = vmatprep.subr.mxu0 0.0
    %2314 = vmatpush2.msra.mxu0 0.0
    %2315 = vmatprep.subr.mxu0 0.0
    %2316 = vmatpush2.msra.mxu0 0.0
    %2317 = vmatprep.subr.mxu0 0.0
    %2318 = vmatpush2.msra.mxu0 0.0
    %2319 = vmatprep.subr.mxu0 0.0
    %2320 = vmatpush2.msra.mxu0 0.0
    %2321 = vmatprep.subr.mxu0 0.0
    %2322 = vmatpush2.msra.mxu0 0.0
    %2323 = vmatprep.subr.mxu0 0.0
    %2324 = vmatpush2.msra.mxu0 0.0
    %2325 = vmatprep.subr.mxu0 0.0
    %2326 = vmatpush2.msra.mxu0 0.0
    %2327 = vmatprep.mubr.f32.mxu0 0.0
    %2328 = vmatmul.mubr.f32.gmra.mxu0 %v2253
    %v2329 = vpop.f32.mrf.mxu0
    %v2330 = vadd.f32 0.0, %v2329
    %v2331 = vpop.f32.mrf.mxu0
    %2332 = vmatprep.mubr.f32.mxu0 0.0
    %2333 = vmatmul.mubr.f32.gmra.mxu0 %v2256
    %v2334 = vpop.f32.mrf.mxu0
    %v2335 = vadd.f32 0.0, %v2334
    %v2336 = vpop.f32.mrf.mxu0
    %2337 = vmatprep.mubr.f32.mxu0 0.0
    %2338 = vmatmul.mubr.f32.gmra.mxu0 %v2259
    %v2339 = vpop.f32.mrf.mxu0
    %v2340 = vadd.f32 0.0, %v2339
    %v2341 = vpop.f32.mrf.mxu0
    %2342 = vdwg.mxu0
    %2343 = vrot.lane.b32.xlu0 %v2097, 120
    %v2344 = vpop.permute.xlu0 %2343
    %2345 = vrot.lane.b32.xlu0 %v2102, 120
    %v2346 = vpop.permute.xlu0 %2345
    %2347 = vrot.lane.b32.xlu0 %v2107, 120
    %v2348 = vpop.permute.xlu0 %2347
    %2349 = vrot.lane.b32.xlu0 %v2097, 88
    %v2350 = vpop.permute.xlu0 %2349
    %2351 = vrot.lane.b32.xlu0 %v2102, 88
    %v2352 = vpop.permute.xlu0 %2351
    %2353 = vrot.lane.b32.xlu0 %v2107, 88
    %v2354 = vpop.permute.xlu0 %2353
    %v2355 = vsel %vm588, %v2344, 0
    %v2357 = vsel %vm588, %v2346, 0
    %v2359 = vsel %vm588, %v2348, 0
    %v2361 = vsel %vm588, %v2350, 0
    %v2363 = vsel %vm588, %v2352, 0
    %v2365 = vsel %vm588, %v2354, 0
    %2367 = vmatprep.subr.mxu0 0.0
    %2368 = vmatpush1.xpose.msra.mxu0 0.0
    %2369 = vmatprep.subr.mxu0 0.0
    %2370 = vmatpush1.xpose.msra.mxu0 0.0
    %2371 = vmatprep.subr.mxu0 0.0
    %2372 = vmatpush1.xpose.msra.mxu0 0.0
    %2373 = vmatprep.subr.mxu0 0.0
    %2374 = vmatpush1.xpose.msra.mxu0 0.0
    %2375 = vmatprep.subr.mxu0 0.0
    %2376 = vmatpush1.xpose.msra.mxu0 0.0
    %2377 = vmatprep.subr.mxu0 0.0
    %2378 = vmatpush1.xpose.msra.mxu0 0.0
    %2379 = vmatprep.subr.mxu0 0.0
    %2380 = vmatpush1.xpose.msra.mxu0 0.0
    %2381 = vmatprep.subr.mxu0 0.0
    %2382 = vmatpush1.xpose.msra.mxu0 0.0
    %2383 = vmatprep.subr.mxu0 0.0
    %2384 = vmatpush1.xpose.msra.mxu0 0.0
    %2385 = vmatprep.subr.mxu0 0.0
    %2386 = vmatpush1.xpose.msra.mxu0 0.0
    %2387 = vmatprep.subr.mxu0 0.0
    %2388 = vmatpush1.xpose.msra.mxu0 0.0
    %2389 = vmatprep.subr.mxu0 0.0
    %2390 = vmatpush1.xpose.msra.mxu0 0.0
    %2391 = vmatprep.subr.mxu0 0.0
    %2392 = vmatpush1.xpose.msra.mxu0 0.0
    %2393 = vmatprep.subr.mxu0 0.0
    %2394 = vmatpush1.xpose.msra.mxu0 %v2365
    %2395 = vmatprep.subr.mxu0 0.0
    %2396 = vmatpush1.xpose.msra.mxu0 %v2363
    %2397 = vmatprep.subr.mxu0 0.0
    %2398 = vmatpush1.xpose.msra.mxu0 %v2361
    %2399 = vmatprep.subr.mxu0 0.0
    %2400 = vmatpush2.xpose.msra.mxu0 0.0
    %2401 = vmatprep.subr.mxu0 0.0
    %2402 = vmatpush2.xpose.msra.mxu0 0.0
    %2403 = vmatprep.subr.mxu0 0.0
    %2404 = vmatpush2.xpose.msra.mxu0 0.0
    %2405 = vmatprep.subr.mxu0 0.0
    %2406 = vmatpush2.xpose.msra.mxu0 0.0
    %2407 = vmatprep.subr.mxu0 0.0
    %2408 = vmatpush2.xpose.msra.mxu0 0.0
    %2409 = vmatprep.subr.mxu0 0.0
    %2410 = vmatpush2.xpose.msra.mxu0 0.0
    %2411 = vmatprep.subr.mxu0 0.0
    %2412 = vmatpush2.xpose.msra.mxu0 0.0
    %2413 = vmatprep.subr.mxu0 0.0
    %2414 = vmatpush2.xpose.msra.mxu0 0.0
    %2415 = vmatprep.subr.mxu0 0.0
    %2416 = vmatpush2.xpose.msra.mxu0 0.0
    %2417 = vmatprep.subr.mxu0 0.0
    %2418 = vmatpush2.xpose.msra.mxu0 0.0
    %2419 = vmatprep.subr.mxu0 0.0
    %2420 = vmatpush2.xpose.msra.mxu0 0.0
    %2421 = vmatprep.subr.mxu0 0.0
    %2422 = vmatpush2.xpose.msra.mxu0 0.0
    %2423 = vmatprep.subr.mxu0 0.0
    %2424 = vmatpush2.xpose.msra.mxu0 0.0
    %2425 = vmatprep.subr.mxu0 0.0
    %2426 = vmatpush2.xpose.msra.mxu0 0.0
    %2427 = vmatprep.subr.mxu0 0.0
    %2428 = vmatpush2.xpose.msra.mxu0 0.0
    %2429 = vmatprep.subr.mxu0 0.0
    %2430 = vmatpush2.xpose.msra.mxu0 0.0
    %2431 = vmatprep.mubr.f32.mxu0 0.0
    %2432 = vmatmul.mubr.f32.gmra.mxu0 %v2355
    %v2433 = vpop.f32.mrf.mxu0
    %v2434 = vadd.f32 %v202, %v2433
    %v2435 = vpop.f32.mrf.mxu0
    %2436 = vmatprep.mubr.f32.mxu0 0.0
    %2437 = vmatmul.mubr.f32.gmra.mxu0 %v2357
    %v2438 = vpop.f32.mrf.mxu0
    %v2439 = vadd.f32 %v203, %v2438
    %v2440 = vpop.f32.mrf.mxu0
    %2441 = vmatprep.mubr.f32.mxu0 0.0
    %2442 = vmatmul.mubr.f32.gmra.mxu0 %v2359
    %v2443 = vpop.f32.mrf.mxu0
    %v2444 = vadd.f32 %v204, %v2443
    %v2445 = vpop.f32.mrf.mxu0
    %2446 = vdwg.mxu0
    %v2447 = vsel %vm681, %v2434, -inf
    %2448 = vmax.xlane.f32.xlu0 %v2447
    %v2449 = vpop.xlane.xlu0 %2448
    %v2450 = vsel %vm681, %v2439, -inf
    %2451 = vmax.xlane.f32.xlu0 %v2450
    %v2452 = vpop.xlane.xlu0 %2451
    %v2453 = vsel %vm688, %v2444, -inf
    %2454 = vmax.xlane.f32.xlu0 %v2453
    %v2455 = vpop.xlane.xlu0 %2454
    %v2456 = vsub.f32 %v2434, %v2449
    %v2457 = vsub.f32 %v2439, %v2452
    %v2458 = vsub.f32 %v2444, %v2455
    %v2459 = vmul.f32 %v2456, 1.442695
    %v2460 = vpow.pop %v2459
    %v2461 = vmul.f32 %v2457, 1.442695
    %v2462 = vpow.pop %v2461
    %v2463 = vmul.f32 %v2458, 1.442695
    %v2464 = vpow.pop %v2463
    %v2465 = vsel %vm681, %v2460, 0.0
    %2466 = vadd.xlane.f32.xlu0 %v2465
    %v2467 = vpop.xlane.xlu0 %2466
    %v2468 = vsel %vm681, %v2462, 0.0
    %2469 = vadd.xlane.f32.xlu0 %v2468
    %v2470 = vpop.xlane.xlu0 %2469
    %v2471 = vsel %vm688, %v2464, 0.0
    %2472 = vadd.xlane.f32.xlu0 %v2471
    %v2473 = vpop.xlane.xlu0 %2472
    %v2474 = vrcp.pop %v2467
    %v2475 = vmul.f32 %v2460, %v2474
    %v2476 = vrcp.pop %v2470
    %v2477 = vmul.f32 %v2462, %v2476
    %v2478 = vrcp.pop %v2473
    %v2479 = vmul.f32 %v2464, %v2478
    %2480 = vrot.lane.b32.xlu0 %v2097, 56
    %v2481 = vpop.permute.xlu0 %2480
    %2482 = vrot.lane.b32.xlu0 %v2102, 56
    %v2483 = vpop.permute.xlu0 %2482
    %2484 = vrot.lane.b32.xlu0 %v2107, 56
    %v2485 = vpop.permute.xlu0 %2484
    %v2489 = vsel %vm681, %v2475, 0
    %v2492 = vsel %vm681, %v2477, 0
    %v2495 = vsel %vm681, %v2479, 0
    %v2497 = vsel %vm733, %v2485, 0
    %2499 = vmatprep.subr.mxu0 0.0
    %2500 = vmatpush1.msra.mxu0 0.0
    %2501 = vmatprep.subr.mxu0 0.0
    %2502 = vmatpush1.msra.mxu0 0.0
    %2503 = vmatprep.subr.mxu0 0.0
    %2504 = vmatpush1.msra.mxu0 0.0
    %2505 = vmatprep.subr.mxu0 0.0
    %2506 = vmatpush1.msra.mxu0 0.0
    %2507 = vmatprep.subr.mxu0 0.0
    %2508 = vmatpush1.msra.mxu0 0.0
    %2509 = vmatprep.subr.mxu0 0.0
    %2510 = vmatpush1.msra.mxu0 0.0
    %2511 = vmatprep.subr.mxu0 0.0
    %2512 = vmatpush1.msra.mxu0 0.0
    %2513 = vmatprep.subr.mxu0 0.0
    %2514 = vmatpush1.msra.mxu0 0.0
    %2515 = vmatprep.subr.mxu0 0.0
    %2516 = vmatpush1.msra.mxu0 0.0
    %2517 = vmatprep.subr.mxu0 0.0
    %2518 = vmatpush1.msra.mxu0 0.0
    %2519 = vmatprep.subr.mxu0 0.0
    %2520 = vmatpush1.msra.mxu0 0.0
    %2521 = vmatprep.subr.mxu0 0.0
    %2522 = vmatpush1.msra.mxu0 0.0
    %2523 = vmatprep.subr.mxu0 0.0
    %2524 = vmatpush1.msra.mxu0 0.0
    %2525 = vmatprep.subr.mxu0 0.0
    %2526 = vmatpush1.msra.mxu0 %v2497
    %2527 = vmatprep.subr.mxu0 0.0
    %2528 = vmatpush1.msra.mxu0 %v2483
    %2529 = vmatprep.subr.mxu0 0.0
    %2530 = vmatpush1.msra.mxu0 %v2481
    %2531 = vmatprep.subr.mxu0 0.0
    %2532 = vmatpush2.msra.mxu0 0.0
    %2533 = vmatprep.subr.mxu0 0.0
    %2534 = vmatpush2.msra.mxu0 0.0
    %2535 = vmatprep.subr.mxu0 0.0
    %2536 = vmatpush2.msra.mxu0 0.0
    %2537 = vmatprep.subr.mxu0 0.0
    %2538 = vmatpush2.msra.mxu0 0.0
    %2539 = vmatprep.subr.mxu0 0.0
    %2540 = vmatpush2.msra.mxu0 0.0
    %2541 = vmatprep.subr.mxu0 0.0
    %2542 = vmatpush2.msra.mxu0 0.0
    %2543 = vmatprep.subr.mxu0 0.0
    %2544 = vmatpush2.msra.mxu0 0.0
    %2545 = vmatprep.subr.mxu0 0.0
    %2546 = vmatpush2.msra.mxu0 0.0
    %2547 = vmatprep.subr.mxu0 0.0
    %2548 = vmatpush2.msra.mxu0 0.0
    %2549 = vmatprep.subr.mxu0 0.0
    %2550 = vmatpush2.msra.mxu0 0.0
    %2551 = vmatprep.subr.mxu0 0.0
    %2552 = vmatpush2.msra.mxu0 0.0
    %2553 = vmatprep.subr.mxu0 0.0
    %2554 = vmatpush2.msra.mxu0 0.0
    %2555 = vmatprep.subr.mxu0 0.0
    %2556 = vmatpush2.msra.mxu0 0.0
    %2557 = vmatprep.subr.mxu0 0.0
    %2558 = vmatpush2.msra.mxu0 0.0
    %2559 = vmatprep.subr.mxu0 0.0
    %2560 = vmatpush2.msra.mxu0 0.0
    %2561 = vmatprep.subr.mxu0 0.0
    %2562 = vmatpush2.msra.mxu0 0.0
    %2563 = vmatprep.mubr.f32.mxu0 0.0
    %2564 = vmatmul.mubr.f32.gmra.mxu0 %v2489
    %v2565 = vpop.f32.mrf.mxu0
    %v2566 = vadd.f32 0.0, %v2565
    %v2567 = vpop.f32.mrf.mxu0
    %2568 = vmatprep.mubr.f32.mxu0 0.0
    %2569 = vmatmul.mubr.f32.gmra.mxu0 %v2492
    %v2570 = vpop.f32.mrf.mxu0
    %v2571 = vadd.f32 0.0, %v2570
    %v2572 = vpop.f32.mrf.mxu0
    %2573 = vmatprep.mubr.f32.mxu0 0.0
    %2574 = vmatmul.mubr.f32.gmra.mxu0 %v2495
    %v2575 = vpop.f32.mrf.mxu0
    %v2576 = vadd.f32 0.0, %v2575
    %v2577 = vpop.f32.mrf.mxu0
    %2578 = vdwg.mxu0
    %2579 = vrot.lane.b32.xlu0 %v2097, 112
    %v2580 = vpop.permute.xlu0 %2579
    %2581 = vrot.lane.b32.xlu0 %v2102, 112
    %v2582 = vpop.permute.xlu0 %2581
    %2583 = vrot.lane.b32.xlu0 %v2107, 112
    %v2584 = vpop.permute.xlu0 %2583
    %2585 = vrot.lane.b32.xlu0 %v2097, 80
    %v2586 = vpop.permute.xlu0 %2585
    %2587 = vrot.lane.b32.xlu0 %v2102, 80
    %v2588 = vpop.permute.xlu0 %2587
    %2589 = vrot.lane.b32.xlu0 %v2107, 80
    %v2590 = vpop.permute.xlu0 %2589
    %v2591 = vsel %vm588, %v2580, 0
    %v2593 = vsel %vm588, %v2582, 0
    %v2595 = vsel %vm588, %v2584, 0
    %v2597 = vsel %vm588, %v2586, 0
    %v2599 = vsel %vm588, %v2588, 0
    %v2601 = vsel %vm588, %v2590, 0
    %2603 = vmatprep.subr.mxu0 0.0
    %2604 = vmatpush1.xpose.msra.mxu0 0.0
    %2605 = vmatprep.subr.mxu0 0.0
    %2606 = vmatpush1.xpose.msra.mxu0 0.0
    %2607 = vmatprep.subr.mxu0 0.0
    %2608 = vmatpush1.xpose.msra.mxu0 0.0
    %2609 = vmatprep.subr.mxu0 0.0
    %2610 = vmatpush1.xpose.msra.mxu0 0.0
    %2611 = vmatprep.subr.mxu0 0.0
    %2612 = vmatpush1.xpose.msra.mxu0 0.0
    %2613 = vmatprep.subr.mxu0 0.0
    %2614 = vmatpush1.xpose.msra.mxu0 0.0
    %2615 = vmatprep.subr.mxu0 0.0
    %2616 = vmatpush1.xpose.msra.mxu0 0.0
    %2617 = vmatprep.subr.mxu0 0.0
    %2618 = vmatpush1.xpose.msra.mxu0 0.0
    %2619 = vmatprep.subr.mxu0 0.0
    %2620 = vmatpush1.xpose.msra.mxu0 0.0
    %2621 = vmatprep.subr.mxu0 0.0
    %2622 = vmatpush1.xpose.msra.mxu0 0.0
    %2623 = vmatprep.subr.mxu0 0.0
    %2624 = vmatpush1.xpose.msra.mxu0 0.0
    %2625 = vmatprep.subr.mxu0 0.0
    %2626 = vmatpush1.xpose.msra.mxu0 0.0
    %2627 = vmatprep.subr.mxu0 0.0
    %2628 = vmatpush1.xpose.msra.mxu0 0.0
    %2629 = vmatprep.subr.mxu0 0.0
    %2630 = vmatpush1.xpose.msra.mxu0 %v2601
    %2631 = vmatprep.subr.mxu0 0.0
    %2632 = vmatpush1.xpose.msra.mxu0 %v2599
    %2633 = vmatprep.subr.mxu0 0.0
    %2634 = vmatpush1.xpose.msra.mxu0 %v2597
    %2635 = vmatprep.subr.mxu0 0.0
    %2636 = vmatpush2.xpose.msra.mxu0 0.0
    %2637 = vmatprep.subr.mxu0 0.0
    %2638 = vmatpush2.xpose.msra.mxu0 0.0
    %2639 = vmatprep.subr.mxu0 0.0
    %2640 = vmatpush2.xpose.msra.mxu0 0.0
    %2641 = vmatprep.subr.mxu0 0.0
    %2642 = vmatpush2.xpose.msra.mxu0 0.0
    %2643 = vmatprep.subr.mxu0 0.0
    %2644 = vmatpush2.xpose.msra.mxu0 0.0
    %2645 = vmatprep.subr.mxu0 0.0
    %2646 = vmatpush2.xpose.msra.mxu0 0.0
    %2647 = vmatprep.subr.mxu0 0.0
    %2648 = vmatpush2.xpose.msra.mxu0 0.0
    %2649 = vmatprep.subr.mxu0 0.0
    %2650 = vmatpush2.xpose.msra.mxu0 0.0
    %2651 = vmatprep.subr.mxu0 0.0
    %2652 = vmatpush2.xpose.msra.mxu0 0.0
    %2653 = vmatprep.subr.mxu0 0.0
    %2654 = vmatpush2.xpose.msra.mxu0 0.0
    %2655 = vmatprep.subr.mxu0 0.0
    %2656 = vmatpush2.xpose.msra.mxu0 0.0
    %2657 = vmatprep.subr.mxu0 0.0
    %2658 = vmatpush2.xpose.msra.mxu0 0.0
    %2659 = vmatprep.subr.mxu0 0.0
    %2660 = vmatpush2.xpose.msra.mxu0 0.0
    %2661 = vmatprep.subr.mxu0 0.0
    %2662 = vmatpush2.xpose.msra.mxu0 0.0
    %2663 = vmatprep.subr.mxu0 0.0
    %2664 = vmatpush2.xpose.msra.mxu0 0.0
    %2665 = vmatprep.subr.mxu0 0.0
    %2666 = vmatpush2.xpose.msra.mxu0 0.0
    %2667 = vmatprep.mubr.f32.mxu0 0.0
    %2668 = vmatmul.mubr.f32.gmra.mxu0 %v2591
    %v2669 = vpop.f32.mrf.mxu0
    %v2670 = vadd.f32 %v202, %v2669
    %v2671 = vpop.f32.mrf.mxu0
    %2672 = vmatprep.mubr.f32.mxu0 0.0
    %2673 = vmatmul.mubr.f32.gmra.mxu0 %v2593
    %v2674 = vpop.f32.mrf.mxu0
    %v2675 = vadd.f32 %v203, %v2674
    %v2676 = vpop.f32.mrf.mxu0
    %2677 = vmatprep.mubr.f32.mxu0 0.0
    %2678 = vmatmul.mubr.f32.gmra.mxu0 %v2595
    %v2679 = vpop.f32.mrf.mxu0
    %v2680 = vadd.f32 %v204, %v2679
    %v2681 = vpop.f32.mrf.mxu0
    %2682 = vdwg.mxu0
    %v2683 = vsel %vm681, %v2670, -inf
    %2684 = vmax.xlane.f32.xlu0 %v2683
    %v2685 = vpop.xlane.xlu0 %2684
    %v2686 = vsel %vm681, %v2675, -inf
    %2687 = vmax.xlane.f32.xlu0 %v2686
    %v2688 = vpop.xlane.xlu0 %2687
    %v2689 = vsel %vm688, %v2680, -inf
    %2690 = vmax.xlane.f32.xlu0 %v2689
    %v2691 = vpop.xlane.xlu0 %2690
    %v2692 = vsub.f32 %v2670, %v2685
    %v2693 = vsub.f32 %v2675, %v2688
    %v2694 = vsub.f32 %v2680, %v2691
    %v2695 = vmul.f32 %v2692, 1.442695
    %v2696 = vpow.pop %v2695
    %v2697 = vmul.f32 %v2693, 1.442695
    %v2698 = vpow.pop %v2697
    %v2699 = vmul.f32 %v2694, 1.442695
    %v2700 = vpow.pop %v2699
    %v2701 = vsel %vm681, %v2696, 0.0
    %2702 = vadd.xlane.f32.xlu0 %v2701
    %v2703 = vpop.xlane.xlu0 %2702
    %v2704 = vsel %vm681, %v2698, 0.0
    %2705 = vadd.xlane.f32.xlu0 %v2704
    %v2706 = vpop.xlane.xlu0 %2705
    %v2707 = vsel %vm688, %v2700, 0.0
    %2708 = vadd.xlane.f32.xlu0 %v2707
    %v2709 = vpop.xlane.xlu0 %2708
    %v2710 = vrcp.pop %v2703
    %v2711 = vmul.f32 %v2696, %v2710
    %v2712 = vrcp.pop %v2706
    %v2713 = vmul.f32 %v2698, %v2712
    %v2714 = vrcp.pop %v2709
    %v2715 = vmul.f32 %v2700, %v2714
    %2716 = vrot.lane.b32.xlu0 %v2097, 48
    %v2717 = vpop.permute.xlu0 %2716
    %2718 = vrot.lane.b32.xlu0 %v2102, 48
    %v2719 = vpop.permute.xlu0 %2718
    %2720 = vrot.lane.b32.xlu0 %v2107, 48
    %v2721 = vpop.permute.xlu0 %2720
    %v2725 = vsel %vm681, %v2711, 0
    %v2728 = vsel %vm681, %v2713, 0
    %v2731 = vsel %vm681, %v2715, 0
    %v2733 = vsel %vm733, %v2721, 0
    %2735 = vmatprep.subr.mxu0 0.0
    %2736 = vmatpush1.msra.mxu0 0.0
    %2737 = vmatprep.subr.mxu0 0.0
    %2738 = vmatpush1.msra.mxu0 0.0
    %2739 = vmatprep.subr.mxu0 0.0
    %2740 = vmatpush1.msra.mxu0 0.0
    %2741 = vmatprep.subr.mxu0 0.0
    %2742 = vmatpush1.msra.mxu0 0.0
    %2743 = vmatprep.subr.mxu0 0.0
    %2744 = vmatpush1.msra.mxu0 0.0
    %2745 = vmatprep.subr.mxu0 0.0
    %2746 = vmatpush1.msra.mxu0 0.0
    %2747 = vmatprep.subr.mxu0 0.0
    %2748 = vmatpush1.msra.mxu0 0.0
    %2749 = vmatprep.subr.mxu0 0.0
    %2750 = vmatpush1.msra.mxu0 0.0
    %2751 = vmatprep.subr.mxu0 0.0
    %2752 = vmatpush1.msra.mxu0 0.0
    %2753 = vmatprep.subr.mxu0 0.0
    %2754 = vmatpush1.msra.mxu0 0.0
    %2755 = vmatprep.subr.mxu0 0.0
    %2756 = vmatpush1.msra.mxu0 0.0
    %2757 = vmatprep.subr.mxu0 0.0
    %2758 = vmatpush1.msra.mxu0 0.0
    %2759 = vmatprep.subr.mxu0 0.0
    %2760 = vmatpush1.msra.mxu0 0.0
    %2761 = vmatprep.subr.mxu0 0.0
    %2762 = vmatpush1.msra.mxu0 %v2733
    %2763 = vmatprep.subr.mxu0 0.0
    %2764 = vmatpush1.msra.mxu0 %v2719
    %2765 = vmatprep.subr.mxu0 0.0
    %2766 = vmatpush1.msra.mxu0 %v2717
    %2767 = vmatprep.subr.mxu0 0.0
    %2768 = vmatpush2.msra.mxu0 0.0
    %2769 = vmatprep.subr.mxu0 0.0
    %2770 = vmatpush2.msra.mxu0 0.0
    %2771 = vmatprep.subr.mxu0 0.0
    %2772 = vmatpush2.msra.mxu0 0.0
    %2773 = vmatprep.subr.mxu0 0.0
    %2774 = vmatpush2.msra.mxu0 0.0
    %2775 = vmatprep.subr.mxu0 0.0
    %2776 = vmatpush2.msra.mxu0 0.0
    %2777 = vmatprep.subr.mxu0 0.0
    %2778 = vmatpush2.msra.mxu0 0.0
    %2779 = vmatprep.subr.mxu0 0.0
    %2780 = vmatpush2.msra.mxu0 0.0
    %2781 = vmatprep.subr.mxu0 0.0
    %2782 = vmatpush2.msra.mxu0 0.0
    %2783 = vmatprep.subr.mxu0 0.0
    %2784 = vmatpush2.msra.mxu0 0.0
    %2785 = vmatprep.subr.mxu0 0.0
    %2786 = vmatpush2.msra.mxu0 0.0
    %2787 = vmatprep.subr.mxu0 0.0
    %2788 = vmatpush2.msra.mxu0 0.0
    %2789 = vmatprep.subr.mxu0 0.0
    %2790 = vmatpush2.msra.mxu0 0.0
    %2791 = vmatprep.subr.mxu0 0.0
    %2792 = vmatpush2.msra.mxu0 0.0
    %2793 = vmatprep.subr.mxu0 0.0
    %2794 = vmatpush2.msra.mxu0 0.0
    %2795 = vmatprep.subr.mxu0 0.0
    %2796 = vmatpush2.msra.mxu0 0.0
    %2797 = vmatprep.subr.mxu0 0.0
    %2798 = vmatpush2.msra.mxu0 0.0
    %2799 = vmatprep.mubr.f32.mxu0 0.0
    %2800 = vmatmul.mubr.f32.gmra.mxu0 %v2725
    %v2801 = vpop.f32.mrf.mxu0
    %v2802 = vadd.f32 0.0, %v2801
    %v2803 = vpop.f32.mrf.mxu0
    %2804 = vmatprep.mubr.f32.mxu0 0.0
    %2805 = vmatmul.mubr.f32.gmra.mxu0 %v2728
    %v2806 = vpop.f32.mrf.mxu0
    %v2807 = vadd.f32 0.0, %v2806
    %v2808 = vpop.f32.mrf.mxu0
    %2809 = vmatprep.mubr.f32.mxu0 0.0
    %2810 = vmatmul.mubr.f32.gmra.mxu0 %v2731
    %v2811 = vpop.f32.mrf.mxu0
    %v2812 = vadd.f32 0.0, %v2811
    %v2813 = vpop.f32.mrf.mxu0
    %2814 = vdwg.mxu0
    %2815 = vrot.lane.b32.xlu0 %v2097, 104
    %v2816 = vpop.permute.xlu0 %2815
    %2817 = vrot.lane.b32.xlu0 %v2102, 104
    %v2818 = vpop.permute.xlu0 %2817
    %2819 = vrot.lane.b32.xlu0 %v2107, 104
    %v2820 = vpop.permute.xlu0 %2819
    %2821 = vrot.lane.b32.xlu0 %v2097, 72
    %v2822 = vpop.permute.xlu0 %2821
    %2823 = vrot.lane.b32.xlu0 %v2102, 72
    %v2824 = vpop.permute.xlu0 %2823
    %2825 = vrot.lane.b32.xlu0 %v2107, 72
    %v2826 = vpop.permute.xlu0 %2825
    %v2827 = vsel %vm588, %v2816, 0
    %v2829 = vsel %vm588, %v2818, 0
    %v2831 = vsel %vm588, %v2820, 0
    %v2833 = vsel %vm588, %v2822, 0
    %v2835 = vsel %vm588, %v2824, 0
    %v2837 = vsel %vm588, %v2826, 0
    %2839 = vmatprep.subr.mxu0 0.0
    %2840 = vmatpush1.xpose.msra.mxu0 0.0
    %2841 = vmatprep.subr.mxu0 0.0
    %2842 = vmatpush1.xpose.msra.mxu0 0.0
    %2843 = vmatprep.subr.mxu0 0.0
    %2844 = vmatpush1.xpose.msra.mxu0 0.0
    %2845 = vmatprep.subr.mxu0 0.0
    %2846 = vmatpush1.xpose.msra.mxu0 0.0
    %2847 = vmatprep.subr.mxu0 0.0
    %2848 = vmatpush1.xpose.msra.mxu0 0.0
    %2849 = vmatprep.subr.mxu0 0.0
    %2850 = vmatpush1.xpose.msra.mxu0 0.0
    %2851 = vmatprep.subr.mxu0 0.0
    %2852 = vmatpush1.xpose.msra.mxu0 0.0
    %2853 = vmatprep.subr.mxu0 0.0
    %2854 = vmatpush1.xpose.msra.mxu0 0.0
    %2855 = vmatprep.subr.mxu0 0.0
    %2856 = vmatpush1.xpose.msra.mxu0 0.0
    %2857 = vmatprep.subr.mxu0 0.0
    %2858 = vmatpush1.xpose.msra.mxu0 0.0
    %2859 = vmatprep.subr.mxu0 0.0
    %2860 = vmatpush1.xpose.msra.mxu0 0.0
    %2861 = vmatprep.subr.mxu0 0.0
    %2862 = vmatpush1.xpose.msra.mxu0 0.0
    %2863 = vmatprep.subr.mxu0 0.0
    %2864 = vmatpush1.xpose.msra.mxu0 0.0
    %2865 = vmatprep.subr.mxu0 0.0
    %2866 = vmatpush1.xpose.msra.mxu0 %v2837
    %2867 = vmatprep.subr.mxu0 0.0
    %2868 = vmatpush1.xpose.msra.mxu0 %v2835
    %2869 = vmatprep.subr.mxu0 0.0
    %2870 = vmatpush1.xpose.msra.mxu0 %v2833
    %2871 = vmatprep.subr.mxu0 0.0
    %2872 = vmatpush2.xpose.msra.mxu0 0.0
    %2873 = vmatprep.subr.mxu0 0.0
    %2874 = vmatpush2.xpose.msra.mxu0 0.0
    %2875 = vmatprep.subr.mxu0 0.0
    %2876 = vmatpush2.xpose.msra.mxu0 0.0
    %2877 = vmatprep.subr.mxu0 0.0
    %2878 = vmatpush2.xpose.msra.mxu0 0.0
    %2879 = vmatprep.subr.mxu0 0.0
    %2880 = vmatpush2.xpose.msra.mxu0 0.0
    %2881 = vmatprep.subr.mxu0 0.0
    %2882 = vmatpush2.xpose.msra.mxu0 0.0
    %2883 = vmatprep.subr.mxu0 0.0
    %2884 = vmatpush2.xpose.msra.mxu0 0.0
    %2885 = vmatprep.subr.mxu0 0.0
    %2886 = vmatpush2.xpose.msra.mxu0 0.0
    %2887 = vmatprep.subr.mxu0 0.0
    %2888 = vmatpush2.xpose.msra.mxu0 0.0
    %2889 = vmatprep.subr.mxu0 0.0
    %2890 = vmatpush2.xpose.msra.mxu0 0.0
    %2891 = vmatprep.subr.mxu0 0.0
    %2892 = vmatpush2.xpose.msra.mxu0 0.0
    %2893 = vmatprep.subr.mxu0 0.0
    %2894 = vmatpush2.xpose.msra.mxu0 0.0
    %2895 = vmatprep.subr.mxu0 0.0
    %2896 = vmatpush2.xpose.msra.mxu0 0.0
    %2897 = vmatprep.subr.mxu0 0.0
    %2898 = vmatpush2.xpose.msra.mxu0 0.0
    %2899 = vmatprep.subr.mxu0 0.0
    %2900 = vmatpush2.xpose.msra.mxu0 0.0
    %2901 = vmatprep.subr.mxu0 0.0
    %2902 = vmatpush2.xpose.msra.mxu0 0.0
    %2903 = vmatprep.mubr.f32.mxu0 0.0
    %2904 = vmatmul.mubr.f32.gmra.mxu0 %v2827
    %v2905 = vpop.f32.mrf.mxu0
    %v2906 = vadd.f32 %v202, %v2905
    %v2907 = vpop.f32.mrf.mxu0
    %2908 = vmatprep.mubr.f32.mxu0 0.0
    %2909 = vmatmul.mubr.f32.gmra.mxu0 %v2829
    %v2910 = vpop.f32.mrf.mxu0
    %v2911 = vadd.f32 %v203, %v2910
    %v2912 = vpop.f32.mrf.mxu0
    %2913 = vmatprep.mubr.f32.mxu0 0.0
    %2914 = vmatmul.mubr.f32.gmra.mxu0 %v2831
    %v2915 = vpop.f32.mrf.mxu0
    %v2916 = vadd.f32 %v204, %v2915
    %v2917 = vpop.f32.mrf.mxu0
    %2918 = vdwg.mxu0
    %v2919 = vsel %vm681, %v2906, -inf
    %2920 = vmax.xlane.f32.xlu0 %v2919
    %v2921 = vpop.xlane.xlu0 %2920
    %v2922 = vsel %vm681, %v2911, -inf
    %2923 = vmax.xlane.f32.xlu0 %v2922
    %v2924 = vpop.xlane.xlu0 %2923
    %v2925 = vsel %vm688, %v2916, -inf
    %2926 = vmax.xlane.f32.xlu0 %v2925
    %v2927 = vpop.xlane.xlu0 %2926
    %v2928 = vsub.f32 %v2906, %v2921
    %v2929 = vsub.f32 %v2911, %v2924
    %v2930 = vsub.f32 %v2916, %v2927
    %v2931 = vmul.f32 %v2928, 1.442695
    %v2932 = vpow.pop %v2931
    %v2933 = vmul.f32 %v2929, 1.442695
    %v2934 = vpow.pop %v2933
    %v2935 = vmul.f32 %v2930, 1.442695
    %v2936 = vpow.pop %v2935
    %v2937 = vsel %vm681, %v2932, 0.0
    %2938 = vadd.xlane.f32.xlu0 %v2937
    %v2939 = vpop.xlane.xlu0 %2938
    %v2940 = vsel %vm681, %v2934, 0.0
    %2941 = vadd.xlane.f32.xlu0 %v2940
    %v2942 = vpop.xlane.xlu0 %2941
    %v2943 = vsel %vm688, %v2936, 0.0
    %2944 = vadd.xlane.f32.xlu0 %v2943
    %v2945 = vpop.xlane.xlu0 %2944
    %v2946 = vrcp.pop %v2939
    %v2947 = vmul.f32 %v2932, %v2946
    %v2948 = vrcp.pop %v2942
    %v2949 = vmul.f32 %v2934, %v2948
    %v2950 = vrcp.pop %v2945
    %v2951 = vmul.f32 %v2936, %v2950
    %2952 = vrot.lane.b32.xlu0 %v2097, 40
    %v2953 = vpop.permute.xlu0 %2952
    %2954 = vrot.lane.b32.xlu0 %v2102, 40
    %v2955 = vpop.permute.xlu0 %2954
    %2956 = vrot.lane.b32.xlu0 %v2107, 40
    %v2957 = vpop.permute.xlu0 %2956
    %v2961 = vsel %vm681, %v2947, 0
    %v2964 = vsel %vm681, %v2949, 0
    %v2967 = vsel %vm681, %v2951, 0
    %v2969 = vsel %vm733, %v2957, 0
    %2971 = vmatprep.subr.mxu0 0.0
    %2972 = vmatpush1.msra.mxu0 0.0
    %2973 = vmatprep.subr.mxu0 0.0
    %2974 = vmatpush1.msra.mxu0 0.0
    %2975 = vmatprep.subr.mxu0 0.0
    %2976 = vmatpush1.msra.mxu0 0.0
    %2977 = vmatprep.subr.mxu0 0.0
    %2978 = vmatpush1.msra.mxu0 0.0
    %2979 = vmatprep.subr.mxu0 0.0
    %2980 = vmatpush1.msra.mxu0 0.0
    %2981 = vmatprep.subr.mxu0 0.0
    %2982 = vmatpush1.msra.mxu0 0.0
    %2983 = vmatprep.subr.mxu0 0.0
    %2984 = vmatpush1.msra.mxu0 0.0
    %2985 = vmatprep.subr.mxu0 0.0
    %2986 = vmatpush1.msra.mxu0 0.0
    %2987 = vmatprep.subr.mxu0 0.0
    %2988 = vmatpush1.msra.mxu0 0.0
    %2989 = vmatprep.subr.mxu0 0.0
    %2990 = vmatpush1.msra.mxu0 0.0
    %2991 = vmatprep.subr.mxu0 0.0
    %2992 = vmatpush1.msra.mxu0 0.0
    %2993 = vmatprep.subr.mxu0 0.0
    %2994 = vmatpush1.msra.mxu0 0.0
    %2995 = vmatprep.subr.mxu0 0.0
    %2996 = vmatpush1.msra.mxu0 0.0
    %2997 = vmatprep.subr.mxu0 0.0
    %2998 = vmatpush1.msra.mxu0 %v2969
    %2999 = vmatprep.subr.mxu0 0.0
    %3000 = vmatpush1.msra.mxu0 %v2955
    %3001 = vmatprep.subr.mxu0 0.0
    %3002 = vmatpush1.msra.mxu0 %v2953
    %3003 = vmatprep.subr.mxu0 0.0
    %3004 = vmatpush2.msra.mxu0 0.0
    %3005 = vmatprep.subr.mxu0 0.0
    %3006 = vmatpush2.msra.mxu0 0.0
    %3007 = vmatprep.subr.mxu0 0.0
    %3008 = vmatpush2.msra.mxu0 0.0
    %3009 = vmatprep.subr.mxu0 0.0
    %3010 = vmatpush2.msra.mxu0 0.0
    %3011 = vmatprep.subr.mxu0 0.0
    %3012 = vmatpush2.msra.mxu0 0.0
    %3013 = vmatprep.subr.mxu0 0.0
    %3014 = vmatpush2.msra.mxu0 0.0
    %3015 = vmatprep.subr.mxu0 0.0
    %3016 = vmatpush2.msra.mxu0 0.0
    %3017 = vmatprep.subr.mxu0 0.0
    %3018 = vmatpush2.msra.mxu0 0.0
    %3019 = vmatprep.subr.mxu0 0.0
    %3020 = vmatpush2.msra.mxu0 0.0
    %3021 = vmatprep.subr.mxu0 0.0
    %3022 = vmatpush2.msra.mxu0 0.0
    %3023 = vmatprep.subr.mxu0 0.0
    %3024 = vmatpush2.msra.mxu0 0.0
    %3025 = vmatprep.subr.mxu0 0.0
    %3026 = vmatpush2.msra.mxu0 0.0
    %3027 = vmatprep.subr.mxu0 0.0
    %3028 = vmatpush2.msra.mxu0 0.0
    %3029 = vmatprep.subr.mxu0 0.0
    %3030 = vmatpush2.msra.mxu0 0.0
    %3031 = vmatprep.subr.mxu0 0.0
    %3032 = vmatpush2.msra.mxu0 0.0
    %3033 = vmatprep.subr.mxu0 0.0
    %3034 = vmatpush2.msra.mxu0 0.0
    %3035 = vmatprep.mubr.f32.mxu0 0.0
    %3036 = vmatmul.mubr.f32.gmra.mxu0 %v2961
    %v3037 = vpop.f32.mrf.mxu0
    %v3038 = vadd.f32 0.0, %v3037
    %v3039 = vpop.f32.mrf.mxu0
    %3040 = vmatprep.mubr.f32.mxu0 0.0
    %3041 = vmatmul.mubr.f32.gmra.mxu0 %v2964
    %v3042 = vpop.f32.mrf.mxu0
    %v3043 = vadd.f32 0.0, %v3042
    %v3044 = vpop.f32.mrf.mxu0
    %3045 = vmatprep.mubr.f32.mxu0 0.0
    %3046 = vmatmul.mubr.f32.gmra.mxu0 %v2967
    %v3047 = vpop.f32.mrf.mxu0
    %v3048 = vadd.f32 0.0, %v3047
    %v3049 = vpop.f32.mrf.mxu0
    %3050 = vdwg.mxu0
    %3054 = vrot.lane.b32.xlu0 %v2566, 8
    %v3055 = vpop.permute.xlu0 %3054
    %3056 = vrot.lane.b32.xlu0 %v2571, 8
    %v3057 = vpop.permute.xlu0 %3056
    %3058 = vrot.lane.b32.xlu0 %v2576, 8
    %v3059 = vpop.permute.xlu0 %3058
    %3066 = vrot.lane.b32.xlu0 %v2802, 16
    %v3067 = vpop.permute.xlu0 %3066
    %3068 = vrot.lane.b32.xlu0 %v2807, 16
    %v3069 = vpop.permute.xlu0 %3068
    %3070 = vrot.lane.b32.xlu0 %v2812, 16
    %v3071 = vpop.permute.xlu0 %3070
    %3078 = vrot.lane.b32.xlu0 %v3038, 24
    %v3079 = vpop.permute.xlu0 %3078
    %3080 = vrot.lane.b32.xlu0 %v3043, 24
    %v3081 = vpop.permute.xlu0 %3080
    %3082 = vrot.lane.b32.xlu0 %v3048, 24
    %v3083 = vpop.permute.xlu0 %3082
    %v3087 = vsel %vm588, %v2330, %v3055
    %v3088 = vsel %vm588, %v2335, %v3057
    %v3089 = vsel %vm588, %v2340, %v3059
    %v3090 = vsel %vm122, %v3087, %v3067
    %v3091 = vsel %vm122, %v3088, %v3069
    %v3092 = vsel %vm122, %v3089, %v3071
    %v3093 = vsel %vm1566, %v3090, %v3079
    %v3094 = vsel %vm1566, %v3091, %v3081
    %v3095 = vsel %vm1566, %v3092, %v3083
    %v3096 = vld [vmem:[%s2 + $0xd8] sm:$0xff]
    %v3097 = vld [vmem:[%s2 + $0xe0] sm:$0xff]
    %v3098 = vld [vmem:[%s2 + $0xe8] sm:$0xff]
    %v3099 = vld [vmem:[%s2 + $0xf0] sm:$0xff]
    %v3100 = vld [vmem:[%s2 + $0xf8] sm:$0x1]
    %v3101 = vlaneseq
    %v3102 = vshrl.u32 %v3101, 7
    %v3103 = vsub.s32 0, %v3102
    %v3104 = vrot.slane %v3100, %v3103
    %v3106 = vsel %vm39, %v3093, 0
    %v3109 = vsel %vm39, %v3094, 0
    %v3112 = vsel %vm39, %v3095, 0
    %3114 = vmatprep.subr.mxu0 0.0
    %3115 = vmatpush1.msra.mxu0 0.0
    %3116 = vmatprep.subr.mxu0 0.0
    %3117 = vmatpush1.msra.mxu0 0.0
    %3118 = vmatprep.subr.mxu0 0.0
    %3119 = vmatpush1.msra.mxu0 0.0
    %3120 = vmatprep.subr.mxu0 0.0
    %3121 = vmatpush1.msra.mxu0 0.0
    %3122 = vmatprep.subr.mxu0 0.0
    %3123 = vmatpush1.msra.mxu0 0.0
    %3124 = vmatprep.subr.mxu0 0.0
    %3125 = vmatpush1.msra.mxu0 0.0
    %3126 = vmatprep.subr.mxu0 0.0
    %3127 = vmatpush1.msra.mxu0 0.0
    %3128 = vmatprep.subr.mxu0 0.0
    %3129 = vmatpush1.msra.mxu0 0.0
    %3130 = vmatprep.subr.mxu0 0.0
    %3131 = vmatpush1.msra.mxu0 0.0
    %3132 = vmatprep.subr.mxu0 0.0
    %3133 = vmatpush1.msra.mxu0 0.0
    %3134 = vmatprep.subr.mxu0 0.0
    %3135 = vmatpush1.msra.mxu0 0.0
    %3136 = vmatprep.subr.mxu0 0.0
    %3137 = vmatpush1.msra.mxu0 0.0
    %3138 = vmatprep.subr.mxu0 0.0
    %3139 = vmatpush1.msra.mxu0 %v3099
    %3140 = vmatprep.subr.mxu0 0.0
    %3141 = vmatpush1.msra.mxu0 %v3098
    %3142 = vmatprep.subr.mxu0 0.0
    %3143 = vmatpush1.msra.mxu0 %v3097
    %3144 = vmatprep.subr.mxu0 0.0
    %3145 = vmatpush1.msra.mxu0 %v3096
    %3146 = vmatprep.subr.mxu0 0.0
    %3147 = vmatpush2.msra.mxu0 0.0
    %3148 = vmatprep.subr.mxu0 0.0
    %3149 = vmatpush2.msra.mxu0 0.0
    %3150 = vmatprep.subr.mxu0 0.0
    %3151 = vmatpush2.msra.mxu0 0.0
    %3152 = vmatprep.subr.mxu0 0.0
    %3153 = vmatpush2.msra.mxu0 0.0
    %3154 = vmatprep.subr.mxu0 0.0
    %3155 = vmatpush2.msra.mxu0 0.0
    %3156 = vmatprep.subr.mxu0 0.0
    %3157 = vmatpush2.msra.mxu0 0.0
    %3158 = vmatprep.subr.mxu0 0.0
    %3159 = vmatpush2.msra.mxu0 0.0
    %3160 = vmatprep.subr.mxu0 0.0
    %3161 = vmatpush2.msra.mxu0 0.0
    %3162 = vmatprep.subr.mxu0 0.0
    %3163 = vmatpush2.msra.mxu0 0.0
    %3164 = vmatprep.subr.mxu0 0.0
    %3165 = vmatpush2.msra.mxu0 0.0
    %3166 = vmatprep.subr.mxu0 0.0
    %3167 = vmatpush2.msra.mxu0 0.0
    %3168 = vmatprep.subr.mxu0 0.0
    %3169 = vmatpush2.msra.mxu0 0.0
    %3170 = vmatprep.subr.mxu0 0.0
    %3171 = vmatpush2.msra.mxu0 0.0
    %3172 = vmatprep.subr.mxu0 0.0
    %3173 = vmatpush2.msra.mxu0 0.0
    %3174 = vmatprep.subr.mxu0 0.0
    %3175 = vmatpush2.msra.mxu0 0.0
    %3176 = vmatprep.subr.mxu0 0.0
    %3177 = vmatpush2.msra.mxu0 0.0
    %3178 = vmatprep.mubr.f32.mxu0 0.0
    %3179 = vmatmul.mubr.f32.gmra.mxu0 %v3106
    %v3180 = vpop.f32.mrf.mxu0
    %v3181 = vadd.f32 %v3104, %v3180
    %v3182 = vpop.f32.mrf.mxu0
    %3183 = vmatprep.mubr.f32.mxu0 0.0
    %3184 = vmatmul.mubr.f32.gmra.mxu0 %v3109
    %v3185 = vpop.f32.mrf.mxu0
    %v3186 = vadd.f32 %v3104, %v3185
    %v3187 = vpop.f32.mrf.mxu0
    %3188 = vmatprep.mubr.f32.mxu0 0.0
    %3189 = vmatmul.mubr.f32.gmra.mxu0 %v3112
    %v3190 = vpop.f32.mrf.mxu0
    %v3191 = vadd.f32 %v3104, %v3190
    %v3192 = vpop.f32.mrf.mxu0
    %3193 = vdwg.mxu0
    %v3194 = vadd.f32 %v3181, %v2009
    %v3195 = vadd.f32 %v3186, %v2010
    %v3196 = vadd.f32 %v3191, %v2011
    %v3197 = vld [vmem:[%s2 + $0x100] sm:$0x1]
    %v3198 = vld [vmem:[%s2 + $0x108] sm:$0x1]
    %v3199 = vsel %vm39, %v3194, 0.0
    %3200 = vadd.xlane.f32.xlu0 %v3199
    %v3201 = vpop.xlane.xlu0 %3200
    %v3202 = vsel %vm39, %v3195, 0.0
    %3203 = vadd.xlane.f32.xlu0 %v3202
    %v3204 = vpop.xlane.xlu0 %3203
    %v3205 = vsel %vm433, %v3196, 0.0
    %3206 = vadd.xlane.f32.xlu0 %v3205
    %v3207 = vpop.xlane.xlu0 %3206
    %v3208 = vmul.f32 %v3201, %v303
    %v3209 = vmul.f32 %v3204, %v303
    %v3210 = vmul.f32 %v3207, %v303
    %v3211 = vsub.f32 %v3194, %v3208
    %v3212 = vsub.f32 %v3195, %v3209
    %v3213 = vsub.f32 %v3196, %v3210
    %v3214 = vmul.f32 %v3211, %v3211
    %v3215 = vmul.f32 %v3212, %v3212
    %v3216 = vmul.f32 %v3213, %v3213
    %v3217 = vsel %vm39, %v3214, 0.0
    %3218 = vadd.xlane.f32.xlu0 %v3217
    %v3219 = vpop.xlane.xlu0 %3218
    %v3220 = vsel %vm39, %v3215, 0.0
    %3221 = vadd.xlane.f32.xlu0 %v3220
    %v3222 = vpop.xlane.xlu0 %3221
    %v3223 = vsel %vm433, %v3216, 0.0
    %3224 = vadd.xlane.f32.xlu0 %v3223
    %v3225 = vpop.xlane.xlu0 %3224
    %v3226 = vmul.f32 %v3219, %v303
    %v3227 = vmul.f32 %v3222, %v303
    %v3228 = vmul.f32 %v3225, %v303
    %v3229 = vadd.f32 %v3226, 1e-12
    %v3230 = vadd.f32 %v3227, 1e-12
    %v3231 = vadd.f32 %v3228, 1e-12
    %v3232 = vrsqrt.pop %v3229
    %v3233 = vrsqrt.pop %v3230
    %v3234 = vrsqrt.pop %v3231
    %v3235 = vmul.f32 %v3211, %v3232
    %v3236 = vmul.f32 %v3212, %v3233
    %v3237 = vmul.f32 %v3213, %v3234
    %v3238 = vlaneseq
    %v3239 = vshrl.u32 %v3238, 7
    %v3240 = vsub.s32 0, %v3239
    %v3241 = vrot.slane %v3197, %v3240
    %v3242 = vmul.f32 %v3235, %v3241
    %v3243 = vmul.f32 %v3236, %v3241
    %v3244 = vmul.f32 %v3237, %v3241
    %v3245 = vlaneseq
    %v3246 = vshrl.u32 %v3245, 7
    %v3247 = vsub.s32 0, %v3246
    %v3248 = vrot.slane %v3198, %v3247
    %v3249 = vadd.f32 %v3242, %v3248
    %v3250 = vadd.f32 %v3243, %v3248
    %v3251 = vadd.f32 %v3244, %v3248
    %v3252 = vld [vmem:[%s4 + $0x28] sm:$0xff]
    %v3253 = vld [vmem:[%s4 + $0x30] sm:$0xff]
    %v3254 = vld [vmem:[%s4 + $0x38] sm:$0xff]
    %v3255 = vld [vmem:[%s4 + $0x40] sm:$0xff]
    %v3256 = vld [vmem:[%s4 + $0x48] sm:$0x1]
    %v3257 = vlaneseq
    %v3258 = vshrl.u32 %v3257, 7
    %v3259 = vsub.s32 0, %v3258
    %v3260 = vrot.slane %v3256, %v3259
    %v3262 = vsel %vm39, %v3249, 0
    %v3265 = vsel %vm39, %v3250, 0
    %v3268 = vsel %vm39, %v3251, 0
    %3270 = vmatprep.subr.mxu0 0.0
    %3271 = vmatpush1.msra.mxu0 0.0
    %3272 = vmatprep.subr.mxu0 0.0
    %3273 = vmatpush1.msra.mxu0 0.0
    %3274 = vmatprep.subr.mxu0 0.0
    %3275 = vmatpush1.msra.mxu0 0.0
    %3276 = vmatprep.subr.mxu0 0.0
    %3277 = vmatpush1.msra.mxu0 0.0
    %3278 = vmatprep.subr.mxu0 0.0
    %3279 = vmatpush1.msra.mxu0 0.0
    %3280 = vmatprep.subr.mxu0 0.0
    %3281 = vmatpush1.msra.mxu0 0.0
    %3282 = vmatprep.subr.mxu0 0.0
    %3283 = vmatpush1.msra.mxu0 0.0
    %3284 = vmatprep.subr.mxu0 0.0
    %3285 = vmatpush1.msra.mxu0 0.0
    %3286 = vmatprep.subr.mxu0 0.0
    %3287 = vmatpush1.msra.mxu0 0.0
    %3288 = vmatprep.subr.mxu0 0.0
    %3289 = vmatpush1.msra.mxu0 0.0
    %3290 = vmatprep.subr.mxu0 0.0
    %3291 = vmatpush1.msra.mxu0 0.0
    %3292 = vmatprep.subr.mxu0 0.0
    %3293 = vmatpush1.msra.mxu0 0.0
    %3294 = vmatprep.subr.mxu0 0.0
    %3295 = vmatpush1.msra.mxu0 %v3255
    %3296 = vmatprep.subr.mxu0 0.0
    %3297 = vmatpush1.msra.mxu0 %v3254
    %3298 = vmatprep.subr.mxu0 0.0
    %3299 = vmatpush1.msra.mxu0 %v3253
    %3300 = vmatprep.subr.mxu0 0.0
    %3301 = vmatpush1.msra.mxu0 %v3252
    %3302 = vmatprep.subr.mxu0 0.0
    %3303 = vmatpush2.msra.mxu0 0.0
    %3304 = vmatprep.subr.mxu0 0.0
    %3305 = vmatpush2.msra.mxu0 0.0
    %3306 = vmatprep.subr.mxu0 0.0
    %3307 = vmatpush2.msra.mxu0 0.0
    %3308 = vmatprep.subr.mxu0 0.0
    %3309 = vmatpush2.msra.mxu0 0.0
    %3310 = vmatprep.subr.mxu0 0.0
    %3311 = vmatpush2.msra.mxu0 0.0
    %3312 = vmatprep.subr.mxu0 0.0
    %3313 = vmatpush2.msra.mxu0 0.0
    %3314 = vmatprep.subr.mxu0 0.0
    %3315 = vmatpush2.msra.mxu0 0.0
    %3316 = vmatprep.subr.mxu0 0.0
    %3317 = vmatpush2.msra.mxu0 0.0
    %3318 = vmatprep.subr.mxu0 0.0
    %3319 = vmatpush2.msra.mxu0 0.0
    %3320 = vmatprep.subr.mxu0 0.0
    %3321 = vmatpush2.msra.mxu0 0.0
    %3322 = vmatprep.subr.mxu0 0.0
    %3323 = vmatpush2.msra.mxu0 0.0
    %3324 = vmatprep.subr.mxu0 0.0
    %3325 = vmatpush2.msra.mxu0 0.0
    %3326 = vmatprep.subr.mxu0 0.0
    %3327 = vmatpush2.msra.mxu0 0.0
    %3328 = vmatprep.subr.mxu0 0.0
    %3329 = vmatpush2.msra.mxu0 0.0
    %3330 = vmatprep.subr.mxu0 0.0
    %3331 = vmatpush2.msra.mxu0 0.0
    %3332 = vmatprep.subr.mxu0 0.0
    %3333 = vmatpush2.msra.mxu0 0.0
    %3334 = vmatprep.mubr.f32.mxu0 0.0
    %3335 = vmatmul.mubr.f32.gmra.mxu0 %v3262
    %v3336 = vpop.f32.mrf.mxu0
    %v3337 = vadd.f32 %v3260, %v3336
    %v3338 = vpop.f32.mrf.mxu0
    %3339 = vmatprep.mubr.f32.mxu0 0.0
    %3340 = vmatmul.mubr.f32.gmra.mxu0 %v3265
    %v3341 = vpop.f32.mrf.mxu0
    %v3342 = vadd.f32 %v3260, %v3341
    %v3343 = vpop.f32.mrf.mxu0
    %3344 = vmatprep.mubr.f32.mxu0 0.0
    %3345 = vmatmul.mubr.f32.gmra.mxu0 %v3268
    %v3346 = vpop.f32.mrf.mxu0
    %v3347 = vadd.f32 %v3260, %v3346
    %v3348 = vpop.f32.mrf.mxu0
    %3349 = vdwg.mxu0
    %v3350 = vmul.f32 %v3337, %v3337
    %v3351 = vmul.f32 %v3342, %v3342
    %v3352 = vmul.f32 %v3347, %v3347
    %v3353 = vmul.f32 %v3337, %v3350
    %v3354 = vmul.f32 %v3342, %v3351
    %v3355 = vmul.f32 %v3347, %v3352
    %v3356 = vmul.f32 %v3353, 0.044715
    %v3357 = vmul.f32 %v3354, 0.044715
    %v3358 = vmul.f32 %v3355, 0.044715
    %v3359 = vadd.f32 %v3337, %v3356
    %v3360 = vadd.f32 %v3342, %v3357
    %v3361 = vadd.f32 %v3347, %v3358
    %v3362 = vmul.f32 %v3359, 0.7978846
    %v3363 = vmul.f32 %v3360, 0.7978846
    %v3364 = vmul.f32 %v3361, 0.7978846
    %v3365 = vtanh.pop %v3362
    %v3366 = vtanh.pop %v3363
    %v3367 = vtanh.pop %v3364
    %v3368 = vadd.f32 %v3365, 1.0
    %v3369 = vadd.f32 %v3366, 1.0
    %v3370 = vadd.f32 %v3367, 1.0
    %v3371 = vmul.f32 %v3368, 0.5
    %v3372 = vmul.f32 %v3369, 0.5
    %v3373 = vmul.f32 %v3370, 0.5
    %v3374 = vmul.f32 %v3337, %v3371
    %v3375 = vmul.f32 %v3342, %v3372
    %v3376 = vmul.f32 %v3347, %v3373
    %v3377 = vld [vmem:[%s2 + $0x110] sm:$0xff]
    %v3378 = vld [vmem:[%s2 + $0x118] sm:$0xff]
    %v3379 = vld [vmem:[%s2 + $0x120] sm:$0xff]
    %v3380 = vld [vmem:[%s2 + $0x128] sm:$0xff]
    %v3381 = vld [vmem:[%s2 + $0x130] sm:$0xff]
    %v3382 = vld [vmem:[%s2 + $0x138] sm:$0xff]
    %v3383 = vld [vmem:[%s2 + $0x140] sm:$0xff]
    %v3384 = vld [vmem:[%s2 + $0x148] sm:$0xff]
    %v3385 = vld [vmem:[%s2 + $0x150] sm:$0x1]
    %v3386 = vlaneseq
    %v3387 = vshrl.u32 %v3386, 7
    %v3388 = vsub.s32 0, %v3387
    %v3389 = vrot.slane %v3385, %v3388
    %v3391 = vsel %vm1864, %v3374, 0
    %v3394 = vsel %vm1864, %v3375, 0
    %v3397 = vsel %vm1864, %v3376, 0
    %3399 = vmatprep.subr.mxu0 0.0
    %3400 = vmatpush1.msra.mxu0 0.0
    %3401 = vmatprep.subr.mxu0 0.0
    %3402 = vmatpush1.msra.mxu0 0.0
    %3403 = vmatprep.subr.mxu0 0.0
    %3404 = vmatpush1.msra.mxu0 0.0
    %3405 = vmatprep.subr.mxu0 0.0
    %3406 = vmatpush1.msra.mxu0 0.0
    %3407 = vmatprep.subr.mxu0 0.0
    %3408 = vmatpush1.msra.mxu0 0.0
    %3409 = vmatprep.subr.mxu0 0.0
    %3410 = vmatpush1.msra.mxu0 0.0
    %3411 = vmatprep.subr.mxu0 0.0
    %3412 = vmatpush1.msra.mxu0 0.0
    %3413 = vmatprep.subr.mxu0 0.0
    %3414 = vmatpush1.msra.mxu0 0.0
    %3415 = vmatprep.subr.mxu0 0.0
    %3416 = vmatpush1.msra.mxu0 %v3384
    %3417 = vmatprep.subr.mxu0 0.0
    %3418 = vmatpush1.msra.mxu0 %v3383
    %3419 = vmatprep.subr.mxu0 0.0
    %3420 = vmatpush1.msra.mxu0 %v3382
    %3421 = vmatprep.subr.mxu0 0.0
    %3422 = vmatpush1.msra.mxu0 %v3381
    %3423 = vmatprep.subr.mxu0 0.0
    %3424 = vmatpush1.msra.mxu0 %v3380
    %3425 = vmatprep.subr.mxu0 0.0
    %3426 = vmatpush1.msra.mxu0 %v3379
    %3427 = vmatprep.subr.mxu0 0.0
    %3428 = vmatpush1.msra.mxu0 %v3378
    %3429 = vmatprep.subr.mxu0 0.0
    %3430 = vmatpush1.msra.mxu0 %v3377
    %3431 = vmatprep.subr.mxu0 0.0
    %3432 = vmatpush2.msra.mxu0 0.0
    %3433 = vmatprep.subr.mxu0 0.0
    %3434 = vmatpush2.msra.mxu0 0.0
    %3435 = vmatprep.subr.mxu0 0.0
    %3436 = vmatpush2.msra.mxu0 0.0
    %3437 = vmatprep.subr.mxu0 0.0
    %3438 = vmatpush2.msra.mxu0 0.0
    %3439 = vmatprep.subr.mxu0 0.0
    %3440 = vmatpush2.msra.mxu0 0.0
    %3441 = vmatprep.subr.mxu0 0.0
    %3442 = vmatpush2.msra.mxu0 0.0
    %3443 = vmatprep.subr.mxu0 0.0
    %3444 = vmatpush2.msra.mxu0 0.0
    %3445 = vmatprep.subr.mxu0 0.0
    %3446 = vmatpush2.msra.mxu0 0.0
    %3447 = vmatprep.subr.mxu0 0.0
    %3448 = vmatpush2.msra.mxu0 0.0
    %3449 = vmatprep.subr.mxu0 0.0
    %3450 = vmatpush2.msra.mxu0 0.0
    %3451 = vmatprep.subr.mxu0 0.0
    %3452 = vmatpush2.msra.mxu0 0.0
    %3453 = vmatprep.subr.mxu0 0.0
    %3454 = vmatpush2.msra.mxu0 0.0
    %3455 = vmatprep.subr.mxu0 0.0
    %3456 = vmatpush2.msra.mxu0 0.0
    %3457 = vmatprep.subr.mxu0 0.0
    %3458 = vmatpush2.msra.mxu0 0.0
    %3459 = vmatprep.subr.mxu0 0.0
    %3460 = vmatpush2.msra.mxu0 0.0
    %3461 = vmatprep.subr.mxu0 0.0
    %3462 = vmatpush2.msra.mxu0 0.0
    %3463 = vmatprep.mubr.f32.mxu0 0.0
    %3464 = vmatmul.mubr.f32.gmra.mxu0 %v3391
    %v3465 = vpop.f32.mrf.mxu0
    %v3466 = vadd.f32 %v3389, %v3465
    %v3467 = vpop.f32.mrf.mxu0
    %3468 = vmatprep.mubr.f32.mxu0 0.0
    %3469 = vmatmul.mubr.f32.gmra.mxu0 %v3394
    %v3470 = vpop.f32.mrf.mxu0
    %v3471 = vadd.f32 %v3389, %v3470
    %v3472 = vpop.f32.mrf.mxu0
    %3473 = vmatprep.mubr.f32.mxu0 0.0
    %3474 = vmatmul.mubr.f32.gmra.mxu0 %v3397
    %v3475 = vpop.f32.mrf.mxu0
    %v3476 = vadd.f32 %v3389, %v3475
    %v3477 = vpop.f32.mrf.mxu0
    %3478 = vdwg.mxu0
    %v3479 = vadd.f32 %v3466, %v3249
    %v3480 = vadd.f32 %v3471, %v3250
    %v3481 = vadd.f32 %v3476, %v3251
    %v3482 = vld [vmem:[%s2 + $0x158] sm:$0x1]
    %v3483 = vld [vmem:[%s2 + $0x160] sm:$0x1]
    %v3484 = vsel %vm39, %v3479, 0.0
    %3485 = vadd.xlane.f32.xlu0 %v3484
    %v3486 = vpop.xlane.xlu0 %3485
    %v3487 = vsel %vm39, %v3480, 0.0
    %3488 = vadd.xlane.f32.xlu0 %v3487
    %v3489 = vpop.xlane.xlu0 %3488
    %v3490 = vsel %vm433, %v3481, 0.0
    %3491 = vadd.xlane.f32.xlu0 %v3490
    %v3492 = vpop.xlane.xlu0 %3491
    %v3493 = vmul.f32 %v3486, %v303
    %v3494 = vmul.f32 %v3489, %v303
    %v3495 = vmul.f32 %v3492, %v303
    %v3496 = vsub.f32 %v3479, %v3493
    %v3497 = vsub.f32 %v3480, %v3494
    %v3498 = vsub.f32 %v3481, %v3495
    %v3499 = vmul.f32 %v3496, %v3496
    %v3500 = vmul.f32 %v3497, %v3497
    %v3501 = vmul.f32 %v3498, %v3498
    %v3502 = vsel %vm39, %v3499, 0.0
    %3503 = vadd.xlane.f32.xlu0 %v3502
    %v3504 = vpop.xlane.xlu0 %3503
    %v3505 = vsel %vm39, %v3500, 0.0
    %3506 = vadd.xlane.f32.xlu0 %v3505
    %v3507 = vpop.xlane.xlu0 %3506
    %v3508 = vsel %vm433, %v3501, 0.0
    %3509 = vadd.xlane.f32.xlu0 %v3508
    %v3510 = vpop.xlane.xlu0 %3509
    %v3511 = vmul.f32 %v3504, %v303
    %v3512 = vmul.f32 %v3507, %v303
    %v3513 = vmul.f32 %v3510, %v303
    %v3514 = vadd.f32 %v3511, 1e-12
    %v3515 = vadd.f32 %v3512, 1e-12
    %v3516 = vadd.f32 %v3513, 1e-12
    %v3517 = vrsqrt.pop %v3514
    %v3518 = vrsqrt.pop %v3515
    %v3519 = vrsqrt.pop %v3516
    %v3520 = vmul.f32 %v3496, %v3517
    %v3521 = vmul.f32 %v3497, %v3518
    %v3522 = vmul.f32 %v3498, %v3519
    %v3523 = vlaneseq
    %v3524 = vshrl.u32 %v3523, 7
    %v3525 = vsub.s32 0, %v3524
    %v3526 = vrot.slane %v3482, %v3525
    %v3527 = vmul.f32 %v3520, %v3526
    %v3528 = vmul.f32 %v3521, %v3526
    %v3529 = vmul.f32 %v3522, %v3526
    %v3530 = vlaneseq
    %v3531 = vshrl.u32 %v3530, 7
    %v3532 = vsub.s32 0, %v3531
    %v3533 = vrot.slane %v3483, %v3532
    %v3534 = vadd.f32 %v3527, %v3533
    %v3535 = vadd.f32 %v3528, %v3533
    %v3536 = vadd.f32 %v3529, %v3533
    %v3538 = vsel %vm681, %v35, 0
    %v3541 = vsel %vm733, %v3536, 0
    %3543 = vmatprep.subr.mxu0 0.0
    %3544 = vmatpush1.msra.mxu0 0.0
    %3545 = vmatprep.subr.mxu0 0.0
    %3546 = vmatpush1.msra.mxu0 0.0
    %3547 = vmatprep.subr.mxu0 0.0
    %3548 = vmatpush1.msra.mxu0 0.0
    %3549 = vmatprep.subr.mxu0 0.0
    %3550 = vmatpush1.msra.mxu0 0.0
    %3551 = vmatprep.subr.mxu0 0.0
    %3552 = vmatpush1.msra.mxu0 0.0
    %3553 = vmatprep.subr.mxu0 0.0
    %3554 = vmatpush1.msra.mxu0 0.0
    %3555 = vmatprep.subr.mxu0 0.0
    %3556 = vmatpush1.msra.mxu0 0.0
    %3557 = vmatprep.subr.mxu0 0.0
    %3558 = vmatpush1.msra.mxu0 0.0
    %3559 = vmatprep.subr.mxu0 0.0
    %3560 = vmatpush1.msra.mxu0 0.0
    %3561 = vmatprep.subr.mxu0 0.0
    %3562 = vmatpush1.msra.mxu0 0.0
    %3563 = vmatprep.subr.mxu0 0.0
    %3564 = vmatpush1.msra.mxu0 0.0
    %3565 = vmatprep.subr.mxu0 0.0
    %3566 = vmatpush1.msra.mxu0 0.0
    %3567 = vmatprep.subr.mxu0 0.0
    %3568 = vmatpush1.msra.mxu0 0.0
    %3569 = vmatprep.subr.mxu0 0.0
    %3570 = vmatpush1.msra.mxu0 %v3541
    %3571 = vmatprep.subr.mxu0 0.0
    %3572 = vmatpush1.msra.mxu0 %v3535
    %3573 = vmatprep.subr.mxu0 0.0
    %3574 = vmatpush1.msra.mxu0 %v3534
    %3575 = vmatprep.subr.mxu0 0.0
    %3576 = vmatpush2.msra.mxu0 0.0
    %3577 = vmatprep.subr.mxu0 0.0
    %3578 = vmatpush2.msra.mxu0 0.0
    %3579 = vmatprep.subr.mxu0 0.0
    %3580 = vmatpush2.msra.mxu0 0.0
    %3581 = vmatprep.subr.mxu0 0.0
    %3582 = vmatpush2.msra.mxu0 0.0
    %3583 = vmatprep.subr.mxu0 0.0
    %3584 = vmatpush2.msra.mxu0 0.0
    %3585 = vmatprep.subr.mxu0 0.0
    %3586 = vmatpush2.msra.mxu0 0.0
    %3587 = vmatprep.subr.mxu0 0.0
    %3588 = vmatpush2.msra.mxu0 0.0
    %3589 = vmatprep.subr.mxu0 0.0
    %3590 = vmatpush2.msra.mxu0 0.0
    %3591 = vmatprep.subr.mxu0 0.0
    %3592 = vmatpush2.msra.mxu0 0.0
    %3593 = vmatprep.subr.mxu0 0.0
    %3594 = vmatpush2.msra.mxu0 0.0
    %3595 = vmatprep.subr.mxu0 0.0
    %3596 = vmatpush2.msra.mxu0 0.0
    %3597 = vmatprep.subr.mxu0 0.0
    %3598 = vmatpush2.msra.mxu0 0.0
    %3599 = vmatprep.subr.mxu0 0.0
    %3600 = vmatpush2.msra.mxu0 0.0
    %3601 = vmatprep.subr.mxu0 0.0
    %3602 = vmatpush2.msra.mxu0 0.0
    %3603 = vmatprep.subr.mxu0 0.0
    %3604 = vmatpush2.msra.mxu0 0.0
    %3605 = vmatprep.subr.mxu0 0.0
    %3606 = vmatpush2.msra.mxu0 0.0
    %3607 = vmatprep.mubr.f32.mxu0 0.0
    %3608 = vmatmul.mubr.f32.gmra.mxu0 %v3538
    %v3609 = vpop.f32.mrf.mxu0
    %v3610 = vadd.f32 0.0, %v3609
    %v3611 = vpop.f32.mrf.mxu0
    %3612 = vdwg.mxu0
    %v3613 = vlaneseq
    %v3614 = vshrl.u32 %v3613, 7
    %v3615 = vsub.s32 0, %v3614
    %v3616 = vrot.slane %v193, %v3615
    %v3617 = vmul.f32 %v36, %v3616
    %vm3618 = vcmask 156672
    %v3619 = vsel %vm3618, %v3617, 0.0
    %3620 = vadd.xlane.f32.xlu0 %v3619
    %v3621 = vpop.xlane.xlu0 %3620
    %v3623 = vsel %vm681, %v3617, 0
    %3625 = vmatprep.subr.mxu0 0.0
    %3626 = vmatpush1.msra.mxu0 0.0
    %3627 = vmatprep.subr.mxu0 0.0
    %3628 = vmatpush1.msra.mxu0 0.0
    %3629 = vmatprep.subr.mxu0 0.0
    %3630 = vmatpush1.msra.mxu0 0.0
    %3631 = vmatprep.subr.mxu0 0.0
    %3632 = vmatpush1.msra.mxu0 0.0
    %3633 = vmatprep.subr.mxu0 0.0
    %3634 = vmatpush1.msra.mxu0 0.0
    %3635 = vmatprep.subr.mxu0 0.0
    %3636 = vmatpush1.msra.mxu0 0.0
    %3637 = vmatprep.subr.mxu0 0.0
    %3638 = vmatpush1.msra.mxu0 0.0
    %3639 = vmatprep.subr.mxu0 0.0
    %3640 = vmatpush1.msra.mxu0 0.0
    %3641 = vmatprep.subr.mxu0 0.0
    %3642 = vmatpush1.msra.mxu0 0.0
    %3643 = vmatprep.subr.mxu0 0.0
    %3644 = vmatpush1.msra.mxu0 0.0
    %3645 = vmatprep.subr.mxu0 0.0
    %3646 = vmatpush1.msra.mxu0 0.0
    %3647 = vmatprep.subr.mxu0 0.0
    %3648 = vmatpush1.msra.mxu0 0.0
    %3649 = vmatprep.subr.mxu0 0.0
    %3650 = vmatpush1.msra.mxu0 0.0
    %3651 = vmatprep.subr.mxu0 0.0
    %3652 = vmatpush1.msra.mxu0 %v3541
    %3653 = vmatprep.subr.mxu0 0.0
    %3654 = vmatpush1.msra.mxu0 %v3535
    %3655 = vmatprep.subr.mxu0 0.0
    %3656 = vmatpush1.msra.mxu0 %v3534
    %3657 = vmatprep.subr.mxu0 0.0
    %3658 = vmatpush2.msra.mxu0 0.0
    %3659 = vmatprep.subr.mxu0 0.0
    %3660 = vmatpush2.msra.mxu0 0.0
    %3661 = vmatprep.subr.mxu0 0.0
    %3662 = vmatpush2.msra.mxu0 0.0
    %3663 = vmatprep.subr.mxu0 0.0
    %3664 = vmatpush2.msra.mxu0 0.0
    %3665 = vmatprep.subr.mxu0 0.0
    %3666 = vmatpush2.msra.mxu0 0.0
    %3667 = vmatprep.subr.mxu0 0.0
    %3668 = vmatpush2.msra.mxu0 0.0
    %3669 = vmatprep.subr.mxu0 0.0
    %3670 = vmatpush2.msra.mxu0 0.0
    %3671 = vmatprep.subr.mxu0 0.0
    %3672 = vmatpush2.msra.mxu0 0.0
    %3673 = vmatprep.subr.mxu0 0.0
    %3674 = vmatpush2.msra.mxu0 0.0
    %3675 = vmatprep.subr.mxu0 0.0
    %3676 = vmatpush2.msra.mxu0 0.0
    %3677 = vmatprep.subr.mxu0 0.0
    %3678 = vmatpush2.msra.mxu0 0.0
    %3679 = vmatprep.subr.mxu0 0.0
    %3680 = vmatpush2.msra.mxu0 0.0
    %3681 = vmatprep.subr.mxu0 0.0
    %3682 = vmatpush2.msra.mxu0 0.0
    %3683 = vmatprep.subr.mxu0 0.0
    %3684 = vmatpush2.msra.mxu0 0.0
    %3685 = vmatprep.subr.mxu0 0.0
    %3686 = vmatpush2.msra.mxu0 0.0
    %3687 = vmatprep.subr.mxu0 0.0
    %3688 = vmatpush2.msra.mxu0 0.0
    %3689 = vmatprep.mubr.f32.mxu0 0.0
    %3690 = vmatmul.mubr.f32.gmra.mxu0 %v3623
    %v3691 = vpop.f32.mrf.mxu0
    %v3692 = vadd.f32 0.0, %v3691
    %v3693 = vpop.f32.mrf.mxu0
    %3694 = vdwg.mxu0
    %v3695 = vadd.f32 %v3621, 1e-05
    %v3696 = vrcp.pop %v3695
    %v3697 = vmul.f32 %v3692, %v3696
    %v3698 = vld [vmem:[%s2 + $0x168] sm:$0xff]
    %v3699 = vld [vmem:[%s2 + $0x170] sm:$0xff]
    %v3700 = vld [vmem:[%s2 + $0x178] sm:$0xff]
    %v3701 = vld [vmem:[%s2 + $0x180] sm:$0xff]
    %v3702 = vld [vmem:[%s2 + $0x188] sm:$0xff]
    %v3703 = vld [vmem:[%s2 + $0x190] sm:$0xff]
    %v3704 = vld [vmem:[%s2 + $0x198] sm:$0xff]
    %v3705 = vld [vmem:[%s2 + $0x1a0] sm:$0xff]
    %v3707 = vsel %vm39, %v3697, 0
    %3709 = vmatprep.subr.mxu0 0.0
    %3710 = vmatpush1.msra.mxu0 0.0
    %3711 = vmatprep.subr.mxu0 0.0
    %3712 = vmatpush1.msra.mxu0 0.0
    %3713 = vmatprep.subr.mxu0 0.0
    %3714 = vmatpush1.msra.mxu0 0.0
    %3715 = vmatprep.subr.mxu0 0.0
    %3716 = vmatpush1.msra.mxu0 0.0
    %3717 = vmatprep.subr.mxu0 0.0
    %3718 = vmatpush1.msra.mxu0 0.0
    %3719 = vmatprep.subr.mxu0 0.0
    %3720 = vmatpush1.msra.mxu0 0.0
    %3721 = vmatprep.subr.mxu0 0.0
    %3722 = vmatpush1.msra.mxu0 0.0
    %3723 = vmatprep.subr.mxu0 0.0
    %3724 = vmatpush1.msra.mxu0 0.0
    %3725 = vmatprep.subr.mxu0 0.0
    %3726 = vmatpush1.msra.mxu0 0.0
    %3727 = vmatprep.subr.mxu0 0.0
    %3728 = vmatpush1.msra.mxu0 0.0
    %3729 = vmatprep.subr.mxu0 0.0
    %3730 = vmatpush1.msra.mxu0 0.0
    %3731 = vmatprep.subr.mxu0 0.0
    %3732 = vmatpush1.msra.mxu0 0.0
    %3733 = vmatprep.subr.mxu0 0.0
    %3734 = vmatpush1.msra.mxu0 %v3705
    %3735 = vmatprep.subr.mxu0 0.0
    %3736 = vmatpush1.msra.mxu0 %v3704
    %3737 = vmatprep.subr.mxu0 0.0
    %3738 = vmatpush1.msra.mxu0 %v3703
    %3739 = vmatprep.subr.mxu0 0.0
    %3740 = vmatpush1.msra.mxu0 %v3702
    %3741 = vmatprep.subr.mxu0 0.0
    %3742 = vmatpush2.msra.mxu0 0.0
    %3743 = vmatprep.subr.mxu0 0.0
    %3744 = vmatpush2.msra.mxu0 0.0
    %3745 = vmatprep.subr.mxu0 0.0
    %3746 = vmatpush2.msra.mxu0 0.0
    %3747 = vmatprep.subr.mxu0 0.0
    %3748 = vmatpush2.msra.mxu0 0.0
    %3749 = vmatprep.subr.mxu0 0.0
    %3750 = vmatpush2.msra.mxu0 0.0
    %3751 = vmatprep.subr.mxu0 0.0
    %3752 = vmatpush2.msra.mxu0 0.0
    %3753 = vmatprep.subr.mxu0 0.0
    %3754 = vmatpush2.msra.mxu0 0.0
    %3755 = vmatprep.subr.mxu0 0.0
    %3756 = vmatpush2.msra.mxu0 0.0
    %3757 = vmatprep.subr.mxu0 0.0
    %3758 = vmatpush2.msra.mxu0 0.0
    %3759 = vmatprep.subr.mxu0 0.0
    %3760 = vmatpush2.msra.mxu0 0.0
    %3761 = vmatprep.subr.mxu0 0.0
    %3762 = vmatpush2.msra.mxu0 0.0
    %3763 = vmatprep.subr.mxu0 0.0
    %3764 = vmatpush2.msra.mxu0 0.0
    %3765 = vmatprep.subr.mxu0 0.0
    %3766 = vmatpush2.msra.mxu0 0.0
    %3767 = vmatprep.subr.mxu0 0.0
    %3768 = vmatpush2.msra.mxu0 0.0
    %3769 = vmatprep.subr.mxu0 0.0
    %3770 = vmatpush2.msra.mxu0 0.0
    %3771 = vmatprep.subr.mxu0 0.0
    %3772 = vmatpush2.msra.mxu0 0.0
    %3773 = vmatprep.mubr.f32.mxu0 0.0
    %3774 = vmatmul.mubr.f32.gmra.mxu0 %v3707
    %v3775 = vpop.f32.mrf.mxu0
    %v3776 = vadd.f32 0.0, %v3775
    %v3777 = vpop.f32.mrf.mxu0
    %3778 = vdwg.mxu0
    %v3780 = vsel %vm39, %v3610, 0
    %3782 = vmatprep.subr.mxu0 0.0
    %3783 = vmatpush1.msra.mxu0 0.0
    %3784 = vmatprep.subr.mxu0 0.0
    %3785 = vmatpush1.msra.mxu0 0.0
    %3786 = vmatprep.subr.mxu0 0.0
    %3787 = vmatpush1.msra.mxu0 0.0
    %3788 = vmatprep.subr.mxu0 0.0
    %3789 = vmatpush1.msra.mxu0 0.0
    %3790 = vmatprep.subr.mxu0 0.0
    %3791 = vmatpush1.msra.mxu0 0.0
    %3792 = vmatprep.subr.mxu0 0.0
    %3793 = vmatpush1.msra.mxu0 0.0
    %3794 = vmatprep.subr.mxu0 0.0
    %3795 = vmatpush1.msra.mxu0 0.0
    %3796 = vmatprep.subr.mxu0 0.0
    %3797 = vmatpush1.msra.mxu0 0.0
    %3798 = vmatprep.subr.mxu0 0.0
    %3799 = vmatpush1.msra.mxu0 0.0
    %3800 = vmatprep.subr.mxu0 0.0
    %3801 = vmatpush1.msra.mxu0 0.0
    %3802 = vmatprep.subr.mxu0 0.0
    %3803 = vmatpush1.msra.mxu0 0.0
    %3804 = vmatprep.subr.mxu0 0.0
    %3805 = vmatpush1.msra.mxu0 0.0
    %3806 = vmatprep.subr.mxu0 0.0
    %3807 = vmatpush1.msra.mxu0 %v3701
    %3808 = vmatprep.subr.mxu0 0.0
    %3809 = vmatpush1.msra.mxu0 %v3700
    %3810 = vmatprep.subr.mxu0 0.0
    %3811 = vmatpush1.msra.mxu0 %v3699
    %3812 = vmatprep.subr.mxu0 0.0
    %3813 = vmatpush1.msra.mxu0 %v3698
    %3814 = vmatprep.subr.mxu0 0.0
    %3815 = vmatpush2.msra.mxu0 0.0
    %3816 = vmatprep.subr.mxu0 0.0
    %3817 = vmatpush2.msra.mxu0 0.0
    %3818 = vmatprep.subr.mxu0 0.0
    %3819 = vmatpush2.msra.mxu0 0.0
    %3820 = vmatprep.subr.mxu0 0.0
    %3821 = vmatpush2.msra.mxu0 0.0
    %3822 = vmatprep.subr.mxu0 0.0
    %3823 = vmatpush2.msra.mxu0 0.0
    %3824 = vmatprep.subr.mxu0 0.0
    %3825 = vmatpush2.msra.mxu0 0.0
    %3826 = vmatprep.subr.mxu0 0.0
    %3827 = vmatpush2.msra.mxu0 0.0
    %3828 = vmatprep.subr.mxu0 0.0
    %3829 = vmatpush2.msra.mxu0 0.0
    %3830 = vmatprep.subr.mxu0 0.0
    %3831 = vmatpush2.msra.mxu0 0.0
    %3832 = vmatprep.subr.mxu0 0.0
    %3833 = vmatpush2.msra.mxu0 0.0
    %3834 = vmatprep.subr.mxu0 0.0
    %3835 = vmatpush2.msra.mxu0 0.0
    %3836 = vmatprep.subr.mxu0 0.0
    %3837 = vmatpush2.msra.mxu0 0.0
    %3838 = vmatprep.subr.mxu0 0.0
    %3839 = vmatpush2.msra.mxu0 0.0
    %3840 = vmatprep.subr.mxu0 0.0
    %3841 = vmatpush2.msra.mxu0 0.0
    %3842 = vmatprep.subr.mxu0 0.0
    %3843 = vmatpush2.msra.mxu0 0.0
    %3844 = vmatprep.subr.mxu0 0.0
    %3845 = vmatpush2.msra.mxu0 0.0
    %3846 = vmatprep.mubr.f32.mxu0 0.0
    %3847 = vmatmul.mubr.f32.gmra.mxu0 %v3780
    %v3848 = vpop.f32.mrf.mxu0
    %v3849 = vadd.f32 %v3776, %v3848
    %v3850 = vpop.f32.mrf.mxu0
    %3851 = vdwg.mxu0
    %v3852 = vld [vmem:[%s2 + $0x1a8] sm:$0x1]
    %v3853 = vlaneseq
    %v3854 = vshrl.u32 %v3853, 7
    %v3855 = vsub.s32 0, %v3854
    %v3856 = vrot.slane %v3852, %v3855
    %v3857 = vadd.f32 %v3849, %v3856
    %vm3858 = vcmask 123904
    %3859 = vst.msk [vmem:[#allocation2] sm:$0x3] %vm3858, %v3857
    // Predicated region
    $region22: #{md_forward.1} parent=1 // pred_check
      _
    $region23: #{md_forward.1} parent=1 // pred_check_branch
      %3861 = sbr.rel (0) target = $region25
    $region24: #{md_forward.1} parent=1 // pred_region
      %s3863 = ssub.s32 32, 32
      %3864 = vsyncadd [#allocation3], %s3863
      %s3866 = sshll.u32 [#allocation2], 4
      %s3867 = int_to_ptr.vmem [resolvable:$true] %s3866
      %3869 = dma.vmem_to_hbm [thread:$0]  %s3867, 32, %s5, [#allocation3]
    $region25: #{md_forward.1} parent=1 // pred_fallthru
      _
    // Predicated region
    $region26: #{md_forward.1} parent=1 // pred_check
      _
    $region27: #{md_forward.1} parent=1 // pred_check_branch
      %3871 = sbr.rel (0) target = $region29
    $region28: #{md_forward.1} parent=1 // pred_region
      %3872 = dma.done [#allocation3], 32
    $region29: #{md_forward.1} parent=1 // pred_fallthru
      _
    %3873 = vsyncpa [#allocation3], 1

</llo_original>
